<compile_context>
chip_gen: v7x
topology: tpu7x:2x2x1
jax: 0.10.0
libtpu: 0.0.40
codegen_flags: <defaults>
</compile_context>

<pallas_src>
import functools
import math

import numpy as np
import jax
import jax.numpy as jnp
from jax import lax
from jax.experimental import pallas as pl
from jax.experimental.pallas import tpu as pltpu

_COMPUTE_DTYPE = jnp.bfloat16   # MXU operand dtype (accumulation stays f32)
_PRE_DTYPE = jnp.bfloat16       # dtype of the hoisted gate pre-activation scratch
_STATIC_UNROLL_MAX_T = 16       # static Python time loop at/below this chunk length
_LOOP_UNROLL = 4                # fori_loop unroll factor for longer chunks
_LANE = 128                     # TPU lane width
_HEAD_W = 128                   # lane-padded width of every MLP-head layer


# ----------------------------------------------------------------------------
# Kernel
# ----------------------------------------------------------------------------
def _make_kernel(num_layers: int, seq_len: int, hidden_pad: int,
                 batch_block: int, time_chunk: int):
    Hp = hidden_pad
    T = seq_len
    TB = batch_block
    Tc = time_chunk
    n_chunks = T // Tc

    def kernel(*refs):
        # ref layout:
        #   refs[0]                      : x (T, TB, I)  bf16
        #   refs[1 : 1+3L]               : per LSTM layer  w_ih_T, w_hh_T, bias
        #   refs[1+3L : 1+3L+8]          : fc1..fc4 (W_T, b) pairs (128-wide)
        #   refs[1+3L+8]                 : output (TB, 128) f32
        #   scratch                      : pre (Tc, TB, 4Hp) bf16 [, seq (T, TB, Hp) bf16]
        x_ref = refs[0]
        lw = refs[1:1 + 3 * num_layers]
        fc = refs[1 + 3 * num_layers:1 + 3 * num_layers + 8]
        o_ref = refs[1 + 3 * num_layers + 8]
        if num_layers > 1:
            pre_ref, seq_ref = refs[-2], refs[-1]
        else:
            pre_ref, seq_ref = refs[-1], None

        cdt = x_ref.dtype   # MXU operand dtype (bf16)

        h = None
        for l in range(num_layers):
            wih = lw[3 * l][...]        # (I_l, 4Hp) bf16 (g columns pre-scaled x2)
            whh = lw[3 * l + 1][...]    # (Hp, 4Hp)  bf16 (g columns pre-scaled x2)
            bias = lw[3 * l + 2][...]   # (1, 4Hp)   f32  (g columns pre-scaled x2)
            last_layer = (l == num_layers - 1)

            h = jnp.zeros((TB, Hp), jnp.float32)
            c = jnp.zeros((TB, Hp), jnp.float32)

            # Time-chunked hoisted input-to-hidden projection: keeps the
            # pre-activation scratch at (Tc, TB, 4Hp) bf16 regardless of T.
            for kc in range(n_chunks):
                base = kc * Tc
                if l == 0:
                    seq_in = x_ref[base:base + Tc]          # (Tc, TB, I)
                else:
                    seq_in = seq_ref[base:base + Tc]        # (Tc, TB, Hp)
                i_dim = seq_in.shape[-1]
                pre = jnp.dot(seq_in.reshape(Tc * TB, i_dim), wih,
                              preferred_element_type=jnp.float32) + bias
                pre_ref[...] = pre.astype(pre_ref.dtype).reshape(Tc, TB, 4 * Hp)

                def step(t, carry, whh=whh, base=base, last_layer=last_layer):
                    h, c = carry
                    # one recurrent matmul per step on the serial critical path
                    gates = pre_ref[t].astype(jnp.float32) + jnp.dot(
                        h.astype(cdt), whh, preferred_element_type=jnp.float32)
                    # single full-width sigmoid; tanh recovered as 2*sigmoid(2z)-1
                    s = jax.nn.sigmoid(gates)               # (TB, 4Hp)
                    i_g = s[:, 0 * Hp:1 * Hp]               # lane-aligned slices
                    f_g = s[:, 1 * Hp:2 * Hp]
                    g_g = 2.0 * s[:, 2 * Hp:3 * Hp] - 1.0
                    o_g = s[:, 3 * Hp:4 * Hp]
                    c = f_g * c + i_g * g_g
                    h = o_g * jnp.tanh(c)
                    if not last_layer:
                        seq_ref[base + t] = h.astype(seq_ref.dtype)
                    return h, c

                if Tc <= _STATIC_UNROLL_MAX_T:
                    carry = (h, c)
                    for t in range(Tc):
                        carry = step(t, carry)
                    h, c = carry
                else:
                    h, c = lax.fori_loop(0, Tc, step, (h, c), unroll=_LOOP_UNROLL)

        # `h` now == out[:, -1, :] of the top LSTM layer (f32, lane-padded).

        # ------------------------------ MLP head ------------------------------
        a = h
        for k in range(4):
            w = fc[2 * k][...]                              # (in_pad, 128) bf16
            b = fc[2 * k + 1][...]                          # (1, 128)      f32
            a = jnp.dot(a.astype(cdt), w, preferred_element_type=jnp.float32) + b
            if k < 3:
                a = jnp.maximum(a, 0.0)                     # ReLU (dropout = identity)

        o_ref[...] = a.astype(o_ref.dtype)                  # lane-dense (TB, 128) store

    return kernel


# ----------------------------------------------------------------------------
# Wrapper helpers
# ----------------------------------------------------------------------------
def _round_up(n, m):
    return ((n + m - 1) // m) * m


def _pad_gate_cols(w, H, Hp):
    """(rows, 4H) -> (rows, 4Hp): zero-pad each of the 4 gate column blocks."""
    if H == Hp:
        return w
    parts = [jnp.pad(w[:, k * H:(k + 1) * H], ((0, 0), (0, Hp - H))) for k in range(4)]
    return jnp.concatenate(parts, axis=1)


def _pad_rows(w, rows_pad):
    return w if w.shape[0] == rows_pad else jnp.pad(w, ((0, rows_pad - w.shape[0]), (0, 0)))


def _pad_cols(w, cols_pad):
    return w if w.shape[1] == cols_pad else jnp.pad(w, ((0, 0), (0, cols_pad - w.shape[1])))


def _resident_spec(arr):
    """Whole-array-in-VMEM BlockSpec, constant across the batch grid.
    (On newer JAX these grid-invariant operands could additionally be
    single-buffered via pipeline_mode=pl.Buffered(1) to halve their footprint.)"""
    zeros = (0,) * arr.ndim
    return pl.BlockSpec(arr.shape, lambda b, _z=zeros: _z)


# ----------------------------------------------------------------------------
# Wrapper
# ----------------------------------------------------------------------------
@functools.partial(
    jax.jit,
    static_argnames=("num_layers", "hidden_dim", "output_dim", "batch_block",
                     "time_chunk"))
def lstm_classifier_forward(x, lstm_params, fc_params, *, num_layers, hidden_dim,
                            output_dim, batch_block=None, time_chunk=None):
    B, T, I = x.shape
    H = hidden_dim
    Hp = _round_up(H, _LANE)        # lane-aligned hidden dim (exact zero padding)
    cdt = _COMPUTE_DTYPE
    assert output_dim <= _HEAD_W

    # ---- batch tiling: big blocks, >=2 of them when possible (v7x megacore) ----
    if batch_block is None:
        batch_block = B
        if B % 16 == 0 and B >= 32:
            for cand in (128, 64, 32, 16):
                if B % cand == 0 and B // cand >= 2:
                    batch_block = cand
                    break
    TB = batch_block
    assert B % TB == 0, "batch_block must divide batch size"
    assert TB == B or TB % 8 == 0, \
        "batch_block must be a multiple of 8 (16 preferred for bf16) when tiling the batch"
    nb = B // TB

    # ---- time chunking of the hoisted i2h projection ----
    if time_chunk is None:
        time_chunk = T if T <= 64 else max(d for d in range(1, 65) if T % d == 0)
    Tc = time_chunk
    assert T % Tc == 0, "time_chunk must divide seq_len"

    # Pre-scale the g-gate (cell-candidate) columns by 2 so the kernel can use a
    # single full-width sigmoid and recover tanh via 2*sigmoid(2z) - 1 (exact:
    # power-of-two scaling commutes with bf16/f32 rounding).
    gate_scale = jnp.concatenate([
        jnp.ones((2 * H,), jnp.float32),
        jnp.full((H,), 2.0, jnp.float32),
        jnp.ones((H,), jnp.float32),
    ])

    inputs = [jnp.transpose(x, (1, 0, 2)).astype(cdt)]                    # (T, B, I)
    for l, (w_ih, w_hh, b_ih, b_hh) in enumerate(lstm_params):
        wih_T = jnp.asarray(w_ih, jnp.float32).T * gate_scale[None, :]    # (I_l, 4H)
        whh_T = jnp.asarray(w_hh, jnp.float32).T * gate_scale[None, :]    # (H, 4H)
        bias = ((jnp.asarray(b_ih, jnp.float32) + jnp.asarray(b_hh, jnp.float32))
                * gate_scale)[None, :]                                    # (1, 4H)
        wih_T = _pad_gate_cols(wih_T, H, Hp)
        if l > 0:
            wih_T = _pad_rows(wih_T, Hp)
        whh_T = _pad_rows(_pad_gate_cols(whh_T, H, Hp), Hp)
        bias = _pad_gate_cols(bias, H, Hp)                                # (1, 4Hp) f32
        inputs += [wih_T.astype(cdt), whh_T.astype(cdt), bias]
    for k, (w, b) in enumerate(fc_params):
        rows_pad = Hp if k == 0 else _HEAD_W
        w_T = _pad_cols(_pad_rows(jnp.asarray(w, jnp.float32).T, rows_pad), _HEAD_W)
        b_p = _pad_cols(jnp.asarray(b, jnp.float32)[None, :], _HEAD_W)
        inputs += [w_T.astype(cdt), b_p]

    kernel = _make_kernel(num_layers, T, Hp, TB, Tc)

    in_specs = [pl.BlockSpec((T, TB, I), lambda b: (0, b, 0))]
    in_specs += [_resident_spec(a) for a in inputs[1:]]

    scratch_shapes = [pltpu.VMEM((Tc, TB, 4 * Hp), _PRE_DTYPE)]   # chunked pre-activations
    if num_layers > 1:
        scratch_shapes.append(pltpu.VMEM((T, TB, Hp), cdt))       # layer-output sequence

    # ---- VMEM budget: size the scoped limit from the actual footprint ----
    def _nbytes(shape, dt):
        return math.prod(shape) * np.dtype(dt).itemsize
    est = 2 * _nbytes((T, TB, I), cdt)                             # x block (dbl-buffered)
    est += 2 * _nbytes((TB, _HEAD_W), jnp.float32)                 # output block
    est += 2 * sum(_nbytes(a.shape, a.dtype) for a in inputs[1:])  # weights/biases
    est += _nbytes((Tc, TB, 4 * Hp), _PRE_DTYPE)
    if num_layers > 1:
        est += _nbytes((T, TB, Hp), cdt)
    try:
        vmem_cap = int(pltpu.get_tpu_info().vmem_capacity_bytes)
    except Exception:
        vmem_cap = 64 << 20                                        # conservative (v7x)
    vmem_limit = int(min(max(2 * est, 32 << 20), int(0.9 * vmem_cap)))

    out = pl.pallas_call(
        kernel,
        out_shape=jax.ShapeDtypeStruct((B, _HEAD_W), jnp.float32),
        grid=(nb,),
        in_specs=in_specs,
        out_specs=pl.BlockSpec((TB, _HEAD_W), lambda b: (b, 0)),
        scratch_shapes=scratch_shapes,
        compiler_params=pltpu.CompilerParams(
            dimension_semantics=("parallel",),
            vmem_limit_bytes=vmem_limit),
    )(*inputs)
    return out[:, :output_dim]


# ----------------------------------------------------------------------------
# Pure-JAX reference (mirrors the kernel's bf16 quantization points)
# ----------------------------------------------------------------------------
def reference_forward(x, lstm_params, fc_params, hidden_dim):
    cdt = _COMPUTE_DTYPE
    B, T, _ = x.shape
    H = hidden_dim
    seq = x
    last_h = None
    for (w_ih, w_hh, b_ih, b_hh) in lstm_params:
        layer_in = seq.astype(cdt)
        wih_T = jnp.asarray(w_ih, jnp.float32).T.astype(cdt)
        whh_T = jnp.asarray(w_hh, jnp.float32).T.astype(cdt)
        bias = (jnp.asarray(b_ih, jnp.float32) + jnp.asarray(b_hh, jnp.float32))[None, :]
        # Hoisted i2h projection, rounded to bf16 like the kernel's pre scratch.
        pre_seq = jnp.dot(layer_in, wih_T, preferred_element_type=jnp.float32) + bias
        pre_seq = pre_seq.astype(_PRE_DTYPE).astype(jnp.float32)   # (B, T, 4H)
        h = jnp.zeros((B, H), jnp.float32)
        c = jnp.zeros((B, H), jnp.float32)
        outs = []
        for t in range(T):
            gates = pre_seq[:, t] + jnp.dot(h.astype(cdt), whh_T,
                                            preferred_element_type=jnp.float32)
            i_g = jax.nn.sigmoid(gates[:, 0 * H:1 * H])
            f_g = jax.nn.sigmoid(gates[:, 1 * H:2 * H])
            g_g = jnp.tanh(gates[:, 2 * H:3 * H])
            o_g = jax.nn.sigmoid(gates[:, 3 * H:4 * H])
            c = f_g * c + i_g * g_g
            h = o_g * jnp.tanh(c)
            outs.append(h)
        seq = jnp.stack(outs, axis=1)
        last_h = h
    a = last_h
    for k, (w, b) in enumerate(fc_params):
        a = jnp.dot(a.astype(cdt), jnp.asarray(w, jnp.float32).T.astype(cdt),
                    preferred_element_type=jnp.float32) + jnp.asarray(b, jnp.float32)[None, :]
        if k < 3:
            a = jnp.maximum(a, 0.0)
    return a


# ----------------------------------------------------------------------------
# Deterministic parameter construction (PyTorch-style uniform init)
# ----------------------------------------------------------------------------
def init_params(key, input_dim, hidden_dim, num_layers, output_dim):
    lstm_params = []
    k = 1.0 / jnp.sqrt(hidden_dim)
    for l in range(num_layers):
        in_l = input_dim if l == 0 else hidden_dim
        key, k1, k2, k3, k4 = jax.random.split(key, 5)
        lstm_params.append((
            jax.random.uniform(k1, (4 * hidden_dim, in_l), jnp.float32, -k, k),
            jax.random.uniform(k2, (4 * hidden_dim, hidden_dim), jnp.float32, -k, k),
            jax.random.uniform(k3, (4 * hidden_dim,), jnp.float32, -k, k),
            jax.random.uniform(k4, (4 * hidden_dim,), jnp.float32, -k, k),
        ))
    fc_dims = [(hidden_dim, 64), (64, 32), (32, 16), (16, output_dim)]
    fc_params = []
    for (fin, fout) in fc_dims:
        key, k1, k2 = jax.random.split(key, 3)
        kk = 1.0 / jnp.sqrt(fin)
        fc_params.append((
            jax.random.uniform(k1, (fout, fin), jnp.float32, -kk, kk),
            jax.random.uniform(k2, (fout,), jnp.float32, -kk, kk),
        ))
    return lstm_params, fc_params


if __name__ == "__main__":
    # Small shapes implied by the forward: x is (batch, seq, input_dim).
    # B=32 exercises batch tiling (TB=16, nb=2 -> two "parallel" grid blocks).
    B, T = 32, 8
    input_dim, hidden_dim, num_layers, output_dim = 16, 32, 2, 4

    key = jax.random.PRNGKey(0)
    key, xk = jax.random.split(key)
    x = jax.random.normal(xk, (B, T, input_dim), jnp.float32)

    lstm_params, fc_params = init_params(key, input_dim, hidden_dim, num_layers, output_dim)

    out = lstm_classifier_forward(
        x, lstm_params, fc_params,
        num_layers=num_layers, hidden_dim=hidden_dim, output_dim=output_dim,
    )
    out = jax.block_until_ready(out)

    ref = reference_forward(x, lstm_params, fc_params, hidden_dim)
    assert out.shape == (B, output_dim), out.shape
    assert jnp.allclose(out, ref, atol=2e-3, rtol=2e-3), (out, ref)

    print("KERNEL_OK")
</pallas_src>

<mosaic_0001>
module attributes {stable_mosaic.version = 11 : i64} {
  func.func @kernel(%arg0: i32, %arg1: memref<8x16x16xbf16, #tpu.memory_space<vmem>>, %arg2: memref<16x512xbf16, #tpu.memory_space<vmem>>, %arg3: memref<128x512xbf16, #tpu.memory_space<vmem>>, %arg4: memref<1x512xf32, #tpu.memory_space<vmem>>, %arg5: memref<128x512xbf16, #tpu.memory_space<vmem>>, %arg6: memref<128x512xbf16, #tpu.memory_space<vmem>>, %arg7: memref<1x512xf32, #tpu.memory_space<vmem>>, %arg8: memref<128x128xbf16, #tpu.memory_space<vmem>>, %arg9: memref<1x128xf32, #tpu.memory_space<vmem>>, %arg10: memref<128x128xbf16, #tpu.memory_space<vmem>>, %arg11: memref<1x128xf32, #tpu.memory_space<vmem>>, %arg12: memref<128x128xbf16, #tpu.memory_space<vmem>>, %arg13: memref<1x128xf32, #tpu.memory_space<vmem>>, %arg14: memref<128x128xbf16, #tpu.memory_space<vmem>>, %arg15: memref<1x128xf32, #tpu.memory_space<vmem>>, %arg16: memref<16x128xf32, #tpu.memory_space<vmem>>, %arg17: memref<8x16x512xbf16, #tpu.memory_space<vmem>>, %arg18: memref<8x16x128xbf16, #tpu.memory_space<vmem>>) attributes {dimension_semantics = [#tpu.dimension_semantics<parallel>], iteration_bounds = array<i64: 2>, scalar_prefetch = 0 : i64, scratch_operands = 2 : i64, tpu.core_type = #tpu.core_type<tc>, window_params = [{transform_indices = @transform_0, window_bounds = array<i64: 8, 16, 16>}, {pipeline_mode = #tpu.pipeline_mode<synchronous>, transform_indices = @transform_1, window_bounds = array<i64: 16, 512>}, {pipeline_mode = #tpu.pipeline_mode<synchronous>, transform_indices = @transform_2, window_bounds = array<i64: 128, 512>}, {pipeline_mode = #tpu.pipeline_mode<synchronous>, transform_indices = @transform_3, window_bounds = array<i64: 1, 512>}, {pipeline_mode = #tpu.pipeline_mode<synchronous>, transform_indices = @transform_4, window_bounds = array<i64: 128, 512>}, {pipeline_mode = #tpu.pipeline_mode<synchronous>, transform_indices = @transform_5, window_bounds = array<i64: 128, 512>}, {pipeline_mode = #tpu.pipeline_mode<synchronous>, transform_indices = @transform_6, window_bounds = array<i64: 1, 512>}, {pipeline_mode = #tpu.pipeline_mode<synchronous>, transform_indices = @transform_7, window_bounds = array<i64: 128, 128>}, {pipeline_mode = #tpu.pipeline_mode<synchronous>, transform_indices = @transform_8, window_bounds = array<i64: 1, 128>}, {pipeline_mode = #tpu.pipeline_mode<synchronous>, transform_indices = @transform_9, window_bounds = array<i64: 128, 128>}, {pipeline_mode = #tpu.pipeline_mode<synchronous>, transform_indices = @transform_10, window_bounds = array<i64: 1, 128>}, {pipeline_mode = #tpu.pipeline_mode<synchronous>, transform_indices = @transform_11, window_bounds = array<i64: 128, 128>}, {pipeline_mode = #tpu.pipeline_mode<synchronous>, transform_indices = @transform_12, window_bounds = array<i64: 1, 128>}, {pipeline_mode = #tpu.pipeline_mode<synchronous>, transform_indices = @transform_13, window_bounds = array<i64: 128, 128>}, {pipeline_mode = #tpu.pipeline_mode<synchronous>, transform_indices = @transform_14, window_bounds = array<i64: 1, 128>}, {transform_indices = @transform_15, window_bounds = array<i64: 16, 128>}]} {
    %c0 = arith.constant 0 : index
    %c0_0 = arith.constant 0 : index
    %0 = vector.load %arg2[%c0, %c0_0] : memref<16x512xbf16, #tpu.memory_space<vmem>>, vector<16x512xbf16>
    %c0_1 = arith.constant 0 : index
    %c0_2 = arith.constant 0 : index
    %1 = vector.load %arg3[%c0_1, %c0_2] : memref<128x512xbf16, #tpu.memory_space<vmem>>, vector<128x512xbf16>
    %c0_3 = arith.constant 0 : index
    %c0_4 = arith.constant 0 : index
    %2 = vector.load %arg4[%c0_3, %c0_4] : memref<1x512xf32, #tpu.memory_space<vmem>>, vector<1x512xf32>
    %cst = arith.constant 0.000000e+00 : f32
    %3 = vector.broadcast %cst : f32 to vector<16x128xf32>
    %cst_5 = arith.constant 0.000000e+00 : f32
    %4 = vector.broadcast %cst_5 : f32 to vector<16x128xf32>
    %c0_6 = arith.constant 0 : index
    %c0_7 = arith.constant 0 : index
    %c0_8 = arith.constant 0 : index
    %5 = vector.load %arg1[%c0_6, %c0_7, %c0_8] : memref<8x16x16xbf16, #tpu.memory_space<vmem>>, vector<8x16x16xbf16>
    %6 = vector.shape_cast %5 : vector<8x16x16xbf16> to vector<128x16xbf16>
    %cst_9 = arith.constant dense<0.000000e+00> : vector<128x512xf32>
    %7 = tpu.matmul %6, %0, %cst_9 {dimension_numbers = #tpu.dot_dimension_numbers<[1], [0], [0], [1], [0, 0, 1, 1], [], []>} : vector<128x16xbf16>, vector<16x512xbf16>, vector<128x512xf32> -> vector<128x512xf32>
    %8 = vector.broadcast %2 : vector<1x512xf32> to vector<128x512xf32>
    %9 = arith.addf %7, %8 : vector<128x512xf32>
    %10 = arith.truncf %9 : vector<128x512xf32> to vector<128x512xbf16>
    %11 = vector.shape_cast %10 : vector<128x512xbf16> to vector<8x16x512xbf16>
    %c0_10 = arith.constant 0 : index
    %c0_11 = arith.constant 0 : index
    %c0_12 = arith.constant 0 : index
    %12 = vector.load %arg17[%c0_10, %c0_11, %c0_12] : memref<8x16x512xbf16, #tpu.memory_space<vmem>>, vector<8x16x512xbf16>
    tpu.vector_store %arg17[%c0_10, %c0_11, %c0_12], %11 {strides = array<i32>} : memref<8x16x512xbf16, #tpu.memory_space<vmem>>, vector<8x16x512xbf16>,
    %c0_13 = arith.constant 0 : index
    %c0_14 = arith.constant 0 : index
    %c0_15 = arith.constant 0 : index
    %13 = vector.load %arg17[%c0_13, %c0_14, %c0_15] : memref<8x16x512xbf16, #tpu.memory_space<vmem>>, vector<1x16x512xbf16>
    %14 = vector.shape_cast %13 : vector<1x16x512xbf16> to vector<16x512xbf16>
    %15 = arith.extf %14 : vector<16x512xbf16> to vector<16x512xf32>
    %16 = arith.truncf %3 : vector<16x128xf32> to vector<16x128xbf16>
    %cst_16 = arith.constant dense<0.000000e+00> : vector<16x512xf32>
    %17 = tpu.matmul %16, %1, %cst_16 {dimension_numbers = #tpu.dot_dimension_numbers<[1], [0], [0], [1], [0, 0, 1, 1], [], []>} : vector<16x128xbf16>, vector<128x512xbf16>, vector<16x512xf32> -> vector<16x512xf32>
    %18 = arith.addf %15, %17 : vector<16x512xf32>
    %19 = arith.negf %18 : vector<16x512xf32>
    %20 = math.exp %19 : vector<16x512xf32>
    %cst_17 = arith.constant 1.000000e+00 : f32
    %21 = vector.broadcast %cst_17 : f32 to vector<16x512xf32>
    %22 = arith.addf %21, %20 : vector<16x512xf32>
    %23 = arith.divf %21, %22 : vector<16x512xf32>
    %24 = vector.extract_strided_slice %23 {offsets = [0, 0], sizes = [16, 128], strides = [1, 1]} : vector<16x512xf32> to vector<16x128xf32>
    %25 = vector.extract_strided_slice %23 {offsets = [0, 128], sizes = [16, 128], strides = [1, 1]} : vector<16x512xf32> to vector<16x128xf32>
    %26 = vector.extract_strided_slice %23 {offsets = [0, 256], sizes = [16, 128], strides = [1, 1]} : vector<16x512xf32> to vector<16x128xf32>
    %cst_18 = arith.constant 2.000000e+00 : f32
    %27 = vector.broadcast %cst_18 : f32 to vector<16x128xf32>
    %28 = arith.mulf %27, %26 : vector<16x128xf32>
    %cst_19 = arith.constant 1.000000e+00 : f32
    %29 = vector.broadcast %cst_19 : f32 to vector<16x128xf32>
    %30 = arith.subf %28, %29 : vector<16x128xf32>
    %31 = vector.extract_strided_slice %23 {offsets = [0, 384], sizes = [16, 128], strides = [1, 1]} : vector<16x512xf32> to vector<16x128xf32>
    %32 = arith.mulf %25, %4 : vector<16x128xf32>
    %33 = arith.mulf %24, %30 : vector<16x128xf32>
    %34 = arith.addf %32, %33 : vector<16x128xf32>
    %35 = math.tanh %34 : vector<16x128xf32>
    %36 = arith.mulf %31, %35 : vector<16x128xf32>
    %37 = arith.truncf %36 : vector<16x128xf32> to vector<16x128xbf16>
    %c0_20 = arith.constant 0 : index
    %c0_21 = arith.constant 0 : index
    %c0_22 = arith.constant 0 : index
    %38 = vector.load %arg18[%c0_20, %c0_21, %c0_22] : memref<8x16x128xbf16, #tpu.memory_space<vmem>>, vector<1x16x128xbf16>
    %39 = vector.shape_cast %38 : vector<1x16x128xbf16> to vector<16x128xbf16>
    %40 = vector.shape_cast %37 : vector<16x128xbf16> to vector<1x16x128xbf16>
    tpu.vector_store %arg18[%c0_20, %c0_21, %c0_22], %40 {strides = array<i32>} : memref<8x16x128xbf16, #tpu.memory_space<vmem>>, vector<1x16x128xbf16>,
    %c1 = arith.constant 1 : index
    %c0_23 = arith.constant 0 : index
    %c0_24 = arith.constant 0 : index
    %41 = vector.load %arg17[%c1, %c0_23, %c0_24] : memref<8x16x512xbf16, #tpu.memory_space<vmem>>, vector<1x16x512xbf16>
    %42 = vector.shape_cast %41 : vector<1x16x512xbf16> to vector<16x512xbf16>
    %43 = arith.extf %42 : vector<16x512xbf16> to vector<16x512xf32>
    %44 = arith.truncf %36 : vector<16x128xf32> to vector<16x128xbf16>
    %cst_25 = arith.constant dense<0.000000e+00> : vector<16x512xf32>
    %45 = tpu.matmul %44, %1, %cst_25 {dimension_numbers = #tpu.dot_dimension_numbers<[1], [0], [0], [1], [0, 0, 1, 1], [], []>} : vector<16x128xbf16>, vector<128x512xbf16>, vector<16x512xf32> -> vector<16x512xf32>
    %46 = arith.addf %43, %45 : vector<16x512xf32>
    %47 = arith.negf %46 : vector<16x512xf32>
    %48 = math.exp %47 : vector<16x512xf32>
    %cst_26 = arith.constant 1.000000e+00 : f32
    %49 = vector.broadcast %cst_26 : f32 to vector<16x512xf32>
    %50 = arith.addf %49, %48 : vector<16x512xf32>
    %51 = arith.divf %49, %50 : vector<16x512xf32>
    %52 = vector.extract_strided_slice %51 {offsets = [0, 0], sizes = [16, 128], strides = [1, 1]} : vector<16x512xf32> to vector<16x128xf32>
    %53 = vector.extract_strided_slice %51 {offsets = [0, 128], sizes = [16, 128], strides = [1, 1]} : vector<16x512xf32> to vector<16x128xf32>
    %54 = vector.extract_strided_slice %51 {offsets = [0, 256], sizes = [16, 128], strides = [1, 1]} : vector<16x512xf32> to vector<16x128xf32>
    %cst_27 = arith.constant 2.000000e+00 : f32
    %55 = vector.broadcast %cst_27 : f32 to vector<16x128xf32>
    %56 = arith.mulf %55, %54 : vector<16x128xf32>
    %cst_28 = arith.constant 1.000000e+00 : f32
    %57 = vector.broadcast %cst_28 : f32 to vector<16x128xf32>
    %58 = arith.subf %56, %57 : vector<16x128xf32>
    %59 = vector.extract_strided_slice %51 {offsets = [0, 384], sizes = [16, 128], strides = [1, 1]} : vector<16x512xf32> to vector<16x128xf32>
    %60 = arith.mulf %53, %34 : vector<16x128xf32>
    %61 = arith.mulf %52, %58 : vector<16x128xf32>
    %62 = arith.addf %60, %61 : vector<16x128xf32>
    %63 = math.tanh %62 : vector<16x128xf32>
    %64 = arith.mulf %59, %63 : vector<16x128xf32>
    %65 = arith.truncf %64 : vector<16x128xf32> to vector<16x128xbf16>
    %c1_29 = arith.constant 1 : index
    %c0_30 = arith.constant 0 : index
    %c0_31 = arith.constant 0 : index
    %66 = vector.load %arg18[%c1_29, %c0_30, %c0_31] : memref<8x16x128xbf16, #tpu.memory_space<vmem>>, vector<1x16x128xbf16>
    %67 = vector.shape_cast %66 : vector<1x16x128xbf16> to vector<16x128xbf16>
    %68 = vector.shape_cast %65 : vector<16x128xbf16> to vector<1x16x128xbf16>
    tpu.vector_store %arg18[%c1_29, %c0_30, %c0_31], %68 {strides = array<i32>} : memref<8x16x128xbf16, #tpu.memory_space<vmem>>, vector<1x16x128xbf16>,
    %c2 = arith.constant 2 : index
    %c0_32 = arith.constant 0 : index
    %c0_33 = arith.constant 0 : index
    %69 = vector.load %arg17[%c2, %c0_32, %c0_33] : memref<8x16x512xbf16, #tpu.memory_space<vmem>>, vector<1x16x512xbf16>
    %70 = vector.shape_cast %69 : vector<1x16x512xbf16> to vector<16x512xbf16>
    %71 = arith.extf %70 : vector<16x512xbf16> to vector<16x512xf32>
    %72 = arith.truncf %64 : vector<16x128xf32> to vector<16x128xbf16>
    %cst_34 = arith.constant dense<0.000000e+00> : vector<16x512xf32>
    %73 = tpu.matmul %72, %1, %cst_34 {dimension_numbers = #tpu.dot_dimension_numbers<[1], [0], [0], [1], [0, 0, 1, 1], [], []>} : vector<16x128xbf16>, vector<128x512xbf16>, vector<16x512xf32> -> vector<16x512xf32>
    %74 = arith.addf %71, %73 : vector<16x512xf32>
    %75 = arith.negf %74 : vector<16x512xf32>
    %76 = math.exp %75 : vector<16x512xf32>
    %cst_35 = arith.constant 1.000000e+00 : f32
    %77 = vector.broadcast %cst_35 : f32 to vector<16x512xf32>
    %78 = arith.addf %77, %76 : vector<16x512xf32>
    %79 = arith.divf %77, %78 : vector<16x512xf32>
    %80 = vector.extract_strided_slice %79 {offsets = [0, 0], sizes = [16, 128], strides = [1, 1]} : vector<16x512xf32> to vector<16x128xf32>
    %81 = vector.extract_strided_slice %79 {offsets = [0, 128], sizes = [16, 128], strides = [1, 1]} : vector<16x512xf32> to vector<16x128xf32>
    %82 = vector.extract_strided_slice %79 {offsets = [0, 256], sizes = [16, 128], strides = [1, 1]} : vector<16x512xf32> to vector<16x128xf32>
    %cst_36 = arith.constant 2.000000e+00 : f32
    %83 = vector.broadcast %cst_36 : f32 to vector<16x128xf32>
    %84 = arith.mulf %83, %82 : vector<16x128xf32>
    %cst_37 = arith.constant 1.000000e+00 : f32
    %85 = vector.broadcast %cst_37 : f32 to vector<16x128xf32>
    %86 = arith.subf %84, %85 : vector<16x128xf32>
    %87 = vector.extract_strided_slice %79 {offsets = [0, 384], sizes = [16, 128], strides = [1, 1]} : vector<16x512xf32> to vector<16x128xf32>
    %88 = arith.mulf %81, %62 : vector<16x128xf32>
    %89 = arith.mulf %80, %86 : vector<16x128xf32>
    %90 = arith.addf %88, %89 : vector<16x128xf32>
    %91 = math.tanh %90 : vector<16x128xf32>
    %92 = arith.mulf %87, %91 : vector<16x128xf32>
    %93 = arith.truncf %92 : vector<16x128xf32> to vector<16x128xbf16>
    %c2_38 = arith.constant 2 : index
    %c0_39 = arith.constant 0 : index
    %c0_40 = arith.constant 0 : index
    %94 = vector.load %arg18[%c2_38, %c0_39, %c0_40] : memref<8x16x128xbf16, #tpu.memory_space<vmem>>, vector<1x16x128xbf16>
    %95 = vector.shape_cast %94 : vector<1x16x128xbf16> to vector<16x128xbf16>
    %96 = vector.shape_cast %93 : vector<16x128xbf16> to vector<1x16x128xbf16>
    tpu.vector_store %arg18[%c2_38, %c0_39, %c0_40], %96 {strides = array<i32>} : memref<8x16x128xbf16, #tpu.memory_space<vmem>>, vector<1x16x128xbf16>,
    %c3 = arith.constant 3 : index
    %c0_41 = arith.constant 0 : index
    %c0_42 = arith.constant 0 : index
    %97 = vector.load %arg17[%c3, %c0_41, %c0_42] : memref<8x16x512xbf16, #tpu.memory_space<vmem>>, vector<1x16x512xbf16>
    %98 = vector.shape_cast %97 : vector<1x16x512xbf16> to vector<16x512xbf16>
    %99 = arith.extf %98 : vector<16x512xbf16> to vector<16x512xf32>
    %100 = arith.truncf %92 : vector<16x128xf32> to vector<16x128xbf16>
    %cst_43 = arith.constant dense<0.000000e+00> : vector<16x512xf32>
    %101 = tpu.matmul %100, %1, %cst_43 {dimension_numbers = #tpu.dot_dimension_numbers<[1], [0], [0], [1], [0, 0, 1, 1], [], []>} : vector<16x128xbf16>, vector<128x512xbf16>, vector<16x512xf32> -> vector<16x512xf32>
    %102 = arith.addf %99, %101 : vector<16x512xf32>
    %103 = arith.negf %102 : vector<16x512xf32>
    %104 = math.exp %103 : vector<16x512xf32>
    %cst_44 = arith.constant 1.000000e+00 : f32
    %105 = vector.broadcast %cst_44 : f32 to vector<16x512xf32>
    %106 = arith.addf %105, %104 : vector<16x512xf32>
    %107 = arith.divf %105, %106 : vector<16x512xf32>
    %108 = vector.extract_strided_slice %107 {offsets = [0, 0], sizes = [16, 128], strides = [1, 1]} : vector<16x512xf32> to vector<16x128xf32>
    %109 = vector.extract_strided_slice %107 {offsets = [0, 128], sizes = [16, 128], strides = [1, 1]} : vector<16x512xf32> to vector<16x128xf32>
    %110 = vector.extract_strided_slice %107 {offsets = [0, 256], sizes = [16, 128], strides = [1, 1]} : vector<16x512xf32> to vector<16x128xf32>
    %cst_45 = arith.constant 2.000000e+00 : f32
    %111 = vector.broadcast %cst_45 : f32 to vector<16x128xf32>
    %112 = arith.mulf %111, %110 : vector<16x128xf32>
    %cst_46 = arith.constant 1.000000e+00 : f32
    %113 = vector.broadcast %cst_46 : f32 to vector<16x128xf32>
    %114 = arith.subf %112, %113 : vector<16x128xf32>
    %115 = vector.extract_strided_slice %107 {offsets = [0, 384], sizes = [16, 128], strides = [1, 1]} : vector<16x512xf32> to vector<16x128xf32>
    %116 = arith.mulf %109, %90 : vector<16x128xf32>
    %117 = arith.mulf %108, %114 : vector<16x128xf32>
    %118 = arith.addf %116, %117 : vector<16x128xf32>
    %119 = math.tanh %118 : vector<16x128xf32>
    %120 = arith.mulf %115, %119 : vector<16x128xf32>
    %121 = arith.truncf %120 : vector<16x128xf32> to vector<16x128xbf16>
    %c3_47 = arith.constant 3 : index
    %c0_48 = arith.constant 0 : index
    %c0_49 = arith.constant 0 : index
    %122 = vector.load %arg18[%c3_47, %c0_48, %c0_49] : memref<8x16x128xbf16, #tpu.memory_space<vmem>>, vector<1x16x128xbf16>
    %123 = vector.shape_cast %122 : vector<1x16x128xbf16> to vector<16x128xbf16>
    %124 = vector.shape_cast %121 : vector<16x128xbf16> to vector<1x16x128xbf16>
    tpu.vector_store %arg18[%c3_47, %c0_48, %c0_49], %124 {strides = array<i32>} : memref<8x16x128xbf16, #tpu.memory_space<vmem>>, vector<1x16x128xbf16>,
    %c4 = arith.constant 4 : index
    %c0_50 = arith.constant 0 : index
    %c0_51 = arith.constant 0 : index
    %125 = vector.load %arg17[%c4, %c0_50, %c0_51] : memref<8x16x512xbf16, #tpu.memory_space<vmem>>, vector<1x16x512xbf16>
    %126 = vector.shape_cast %125 : vector<1x16x512xbf16> to vector<16x512xbf16>
    %127 = arith.extf %126 : vector<16x512xbf16> to vector<16x512xf32>
    %128 = arith.truncf %120 : vector<16x128xf32> to vector<16x128xbf16>
    %cst_52 = arith.constant dense<0.000000e+00> : vector<16x512xf32>
    %129 = tpu.matmul %128, %1, %cst_52 {dimension_numbers = #tpu.dot_dimension_numbers<[1], [0], [0], [1], [0, 0, 1, 1], [], []>} : vector<16x128xbf16>, vector<128x512xbf16>, vector<16x512xf32> -> vector<16x512xf32>
    %130 = arith.addf %127, %129 : vector<16x512xf32>
    %131 = arith.negf %130 : vector<16x512xf32>
    %132 = math.exp %131 : vector<16x512xf32>
    %cst_53 = arith.constant 1.000000e+00 : f32
    %133 = vector.broadcast %cst_53 : f32 to vector<16x512xf32>
    %134 = arith.addf %133, %132 : vector<16x512xf32>
    %135 = arith.divf %133, %134 : vector<16x512xf32>
    %136 = vector.extract_strided_slice %135 {offsets = [0, 0], sizes = [16, 128], strides = [1, 1]} : vector<16x512xf32> to vector<16x128xf32>
    %137 = vector.extract_strided_slice %135 {offsets = [0, 128], sizes = [16, 128], strides = [1, 1]} : vector<16x512xf32> to vector<16x128xf32>
    %138 = vector.extract_strided_slice %135 {offsets = [0, 256], sizes = [16, 128], strides = [1, 1]} : vector<16x512xf32> to vector<16x128xf32>
    %cst_54 = arith.constant 2.000000e+00 : f32
    %139 = vector.broadcast %cst_54 : f32 to vector<16x128xf32>
    %140 = arith.mulf %139, %138 : vector<16x128xf32>
    %cst_55 = arith.constant 1.000000e+00 : f32
    %141 = vector.broadcast %cst_55 : f32 to vector<16x128xf32>
    %142 = arith.subf %140, %141 : vector<16x128xf32>
    %143 = vector.extract_strided_slice %135 {offsets = [0, 384], sizes = [16, 128], strides = [1, 1]} : vector<16x512xf32> to vector<16x128xf32>
    %144 = arith.mulf %137, %118 : vector<16x128xf32>
    %145 = arith.mulf %136, %142 : vector<16x128xf32>
    %146 = arith.addf %144, %145 : vector<16x128xf32>
    %147 = math.tanh %146 : vector<16x128xf32>
    %148 = arith.mulf %143, %147 : vector<16x128xf32>
    %149 = arith.truncf %148 : vector<16x128xf32> to vector<16x128xbf16>
    %c4_56 = arith.constant 4 : index
    %c0_57 = arith.constant 0 : index
    %c0_58 = arith.constant 0 : index
    %150 = vector.load %arg18[%c4_56, %c0_57, %c0_58] : memref<8x16x128xbf16, #tpu.memory_space<vmem>>, vector<1x16x128xbf16>
    %151 = vector.shape_cast %150 : vector<1x16x128xbf16> to vector<16x128xbf16>
    %152 = vector.shape_cast %149 : vector<16x128xbf16> to vector<1x16x128xbf16>
    tpu.vector_store %arg18[%c4_56, %c0_57, %c0_58], %152 {strides = array<i32>} : memref<8x16x128xbf16, #tpu.memory_space<vmem>>, vector<1x16x128xbf16>,
    %c5 = arith.constant 5 : index
    %c0_59 = arith.constant 0 : index
    %c0_60 = arith.constant 0 : index
    %153 = vector.load %arg17[%c5, %c0_59, %c0_60] : memref<8x16x512xbf16, #tpu.memory_space<vmem>>, vector<1x16x512xbf16>
    %154 = vector.shape_cast %153 : vector<1x16x512xbf16> to vector<16x512xbf16>
    %155 = arith.extf %154 : vector<16x512xbf16> to vector<16x512xf32>
    %156 = arith.truncf %148 : vector<16x128xf32> to vector<16x128xbf16>
    %cst_61 = arith.constant dense<0.000000e+00> : vector<16x512xf32>
    %157 = tpu.matmul %156, %1, %cst_61 {dimension_numbers = #tpu.dot_dimension_numbers<[1], [0], [0], [1], [0, 0, 1, 1], [], []>} : vector<16x128xbf16>, vector<128x512xbf16>, vector<16x512xf32> -> vector<16x512xf32>
    %158 = arith.addf %155, %157 : vector<16x512xf32>
    %159 = arith.negf %158 : vector<16x512xf32>
    %160 = math.exp %159 : vector<16x512xf32>
    %cst_62 = arith.constant 1.000000e+00 : f32
    %161 = vector.broadcast %cst_62 : f32 to vector<16x512xf32>
    %162 = arith.addf %161, %160 : vector<16x512xf32>
    %163 = arith.divf %161, %162 : vector<16x512xf32>
    %164 = vector.extract_strided_slice %163 {offsets = [0, 0], sizes = [16, 128], strides = [1, 1]} : vector<16x512xf32> to vector<16x128xf32>
    %165 = vector.extract_strided_slice %163 {offsets = [0, 128], sizes = [16, 128], strides = [1, 1]} : vector<16x512xf32> to vector<16x128xf32>
    %166 = vector.extract_strided_slice %163 {offsets = [0, 256], sizes = [16, 128], strides = [1, 1]} : vector<16x512xf32> to vector<16x128xf32>
    %cst_63 = arith.constant 2.000000e+00 : f32
    %167 = vector.broadcast %cst_63 : f32 to vector<16x128xf32>
    %168 = arith.mulf %167, %166 : vector<16x128xf32>
    %cst_64 = arith.constant 1.000000e+00 : f32
    %169 = vector.broadcast %cst_64 : f32 to vector<16x128xf32>
    %170 = arith.subf %168, %169 : vector<16x128xf32>
    %171 = vector.extract_strided_slice %163 {offsets = [0, 384], sizes = [16, 128], strides = [1, 1]} : vector<16x512xf32> to vector<16x128xf32>
    %172 = arith.mulf %165, %146 : vector<16x128xf32>
    %173 = arith.mulf %164, %170 : vector<16x128xf32>
    %174 = arith.addf %172, %173 : vector<16x128xf32>
    %175 = math.tanh %174 : vector<16x128xf32>
    %176 = arith.mulf %171, %175 : vector<16x128xf32>
    %177 = arith.truncf %176 : vector<16x128xf32> to vector<16x128xbf16>
    %c5_65 = arith.constant 5 : index
    %c0_66 = arith.constant 0 : index
    %c0_67 = arith.constant 0 : index
    %178 = vector.load %arg18[%c5_65, %c0_66, %c0_67] : memref<8x16x128xbf16, #tpu.memory_space<vmem>>, vector<1x16x128xbf16>
    %179 = vector.shape_cast %178 : vector<1x16x128xbf16> to vector<16x128xbf16>
    %180 = vector.shape_cast %177 : vector<16x128xbf16> to vector<1x16x128xbf16>
    tpu.vector_store %arg18[%c5_65, %c0_66, %c0_67], %180 {strides = array<i32>} : memref<8x16x128xbf16, #tpu.memory_space<vmem>>, vector<1x16x128xbf16>,
    %c6 = arith.constant 6 : index
    %c0_68 = arith.constant 0 : index
    %c0_69 = arith.constant 0 : index
    %181 = vector.load %arg17[%c6, %c0_68, %c0_69] : memref<8x16x512xbf16, #tpu.memory_space<vmem>>, vector<1x16x512xbf16>
    %182 = vector.shape_cast %181 : vector<1x16x512xbf16> to vector<16x512xbf16>
    %183 = arith.extf %182 : vector<16x512xbf16> to vector<16x512xf32>
    %184 = arith.truncf %176 : vector<16x128xf32> to vector<16x128xbf16>
    %cst_70 = arith.constant dense<0.000000e+00> : vector<16x512xf32>
    %185 = tpu.matmul %184, %1, %cst_70 {dimension_numbers = #tpu.dot_dimension_numbers<[1], [0], [0], [1], [0, 0, 1, 1], [], []>} : vector<16x128xbf16>, vector<128x512xbf16>, vector<16x512xf32> -> vector<16x512xf32>
    %186 = arith.addf %183, %185 : vector<16x512xf32>
    %187 = arith.negf %186 : vector<16x512xf32>
    %188 = math.exp %187 : vector<16x512xf32>
    %cst_71 = arith.constant 1.000000e+00 : f32
    %189 = vector.broadcast %cst_71 : f32 to vector<16x512xf32>
    %190 = arith.addf %189, %188 : vector<16x512xf32>
    %191 = arith.divf %189, %190 : vector<16x512xf32>
    %192 = vector.extract_strided_slice %191 {offsets = [0, 0], sizes = [16, 128], strides = [1, 1]} : vector<16x512xf32> to vector<16x128xf32>
    %193 = vector.extract_strided_slice %191 {offsets = [0, 128], sizes = [16, 128], strides = [1, 1]} : vector<16x512xf32> to vector<16x128xf32>
    %194 = vector.extract_strided_slice %191 {offsets = [0, 256], sizes = [16, 128], strides = [1, 1]} : vector<16x512xf32> to vector<16x128xf32>
    %cst_72 = arith.constant 2.000000e+00 : f32
    %195 = vector.broadcast %cst_72 : f32 to vector<16x128xf32>
    %196 = arith.mulf %195, %194 : vector<16x128xf32>
    %cst_73 = arith.constant 1.000000e+00 : f32
    %197 = vector.broadcast %cst_73 : f32 to vector<16x128xf32>
    %198 = arith.subf %196, %197 : vector<16x128xf32>
    %199 = vector.extract_strided_slice %191 {offsets = [0, 384], sizes = [16, 128], strides = [1, 1]} : vector<16x512xf32> to vector<16x128xf32>
    %200 = arith.mulf %193, %174 : vector<16x128xf32>
    %201 = arith.mulf %192, %198 : vector<16x128xf32>
    %202 = arith.addf %200, %201 : vector<16x128xf32>
    %203 = math.tanh %202 : vector<16x128xf32>
    %204 = arith.mulf %199, %203 : vector<16x128xf32>
    %205 = arith.truncf %204 : vector<16x128xf32> to vector<16x128xbf16>
    %c6_74 = arith.constant 6 : index
    %c0_75 = arith.constant 0 : index
    %c0_76 = arith.constant 0 : index
    %206 = vector.load %arg18[%c6_74, %c0_75, %c0_76] : memref<8x16x128xbf16, #tpu.memory_space<vmem>>, vector<1x16x128xbf16>
    %207 = vector.shape_cast %206 : vector<1x16x128xbf16> to vector<16x128xbf16>
    %208 = vector.shape_cast %205 : vector<16x128xbf16> to vector<1x16x128xbf16>
    tpu.vector_store %arg18[%c6_74, %c0_75, %c0_76], %208 {strides = array<i32>} : memref<8x16x128xbf16, #tpu.memory_space<vmem>>, vector<1x16x128xbf16>,
    %c7 = arith.constant 7 : index
    %c0_77 = arith.constant 0 : index
    %c0_78 = arith.constant 0 : index
    %209 = vector.load %arg17[%c7, %c0_77, %c0_78] : memref<8x16x512xbf16, #tpu.memory_space<vmem>>, vector<1x16x512xbf16>
    %210 = vector.shape_cast %209 : vector<1x16x512xbf16> to vector<16x512xbf16>
    %211 = arith.extf %210 : vector<16x512xbf16> to vector<16x512xf32>
    %212 = arith.truncf %204 : vector<16x128xf32> to vector<16x128xbf16>
    %cst_79 = arith.constant dense<0.000000e+00> : vector<16x512xf32>
    %213 = tpu.matmul %212, %1, %cst_79 {dimension_numbers = #tpu.dot_dimension_numbers<[1], [0], [0], [1], [0, 0, 1, 1], [], []>} : vector<16x128xbf16>, vector<128x512xbf16>, vector<16x512xf32> -> vector<16x512xf32>
    %214 = arith.addf %211, %213 : vector<16x512xf32>
    %215 = arith.negf %214 : vector<16x512xf32>
    %216 = math.exp %215 : vector<16x512xf32>
    %cst_80 = arith.constant 1.000000e+00 : f32
    %217 = vector.broadcast %cst_80 : f32 to vector<16x512xf32>
    %218 = arith.addf %217, %216 : vector<16x512xf32>
    %219 = arith.divf %217, %218 : vector<16x512xf32>
    %220 = vector.extract_strided_slice %219 {offsets = [0, 0], sizes = [16, 128], strides = [1, 1]} : vector<16x512xf32> to vector<16x128xf32>
    %221 = vector.extract_strided_slice %219 {offsets = [0, 128], sizes = [16, 128], strides = [1, 1]} : vector<16x512xf32> to vector<16x128xf32>
    %222 = vector.extract_strided_slice %219 {offsets = [0, 256], sizes = [16, 128], strides = [1, 1]} : vector<16x512xf32> to vector<16x128xf32>
    %cst_81 = arith.constant 2.000000e+00 : f32
    %223 = vector.broadcast %cst_81 : f32 to vector<16x128xf32>
    %224 = arith.mulf %223, %222 : vector<16x128xf32>
    %cst_82 = arith.constant 1.000000e+00 : f32
    %225 = vector.broadcast %cst_82 : f32 to vector<16x128xf32>
    %226 = arith.subf %224, %225 : vector<16x128xf32>
    %227 = vector.extract_strided_slice %219 {offsets = [0, 384], sizes = [16, 128], strides = [1, 1]} : vector<16x512xf32> to vector<16x128xf32>
    %228 = arith.mulf %221, %202 : vector<16x128xf32>
    %229 = arith.mulf %220, %226 : vector<16x128xf32>
    %230 = arith.addf %228, %229 : vector<16x128xf32>
    %231 = math.tanh %230 : vector<16x128xf32>
    %232 = arith.mulf %227, %231 : vector<16x128xf32>
    %233 = arith.truncf %232 : vector<16x128xf32> to vector<16x128xbf16>
    %c7_83 = arith.constant 7 : index
    %c0_84 = arith.constant 0 : index
    %c0_85 = arith.constant 0 : index
    %234 = vector.load %arg18[%c7_83, %c0_84, %c0_85] : memref<8x16x128xbf16, #tpu.memory_space<vmem>>, vector<1x16x128xbf16>
    %235 = vector.shape_cast %234 : vector<1x16x128xbf16> to vector<16x128xbf16>
    %236 = vector.shape_cast %233 : vector<16x128xbf16> to vector<1x16x128xbf16>
    tpu.vector_store %arg18[%c7_83, %c0_84, %c0_85], %236 {strides = array<i32>} : memref<8x16x128xbf16, #tpu.memory_space<vmem>>, vector<1x16x128xbf16>,
    %c0_86 = arith.constant 0 : index
    %c0_87 = arith.constant 0 : index
    %237 = vector.load %arg5[%c0_86, %c0_87] : memref<128x512xbf16, #tpu.memory_space<vmem>>, vector<128x512xbf16>
    %c0_88 = arith.constant 0 : index
    %c0_89 = arith.constant 0 : index
    %238 = vector.load %arg6[%c0_88, %c0_89] : memref<128x512xbf16, #tpu.memory_space<vmem>>, vector<128x512xbf16>
    %c0_90 = arith.constant 0 : index
    %c0_91 = arith.constant 0 : index
    %239 = vector.load %arg7[%c0_90, %c0_91] : memref<1x512xf32, #tpu.memory_space<vmem>>, vector<1x512xf32>
    %cst_92 = arith.constant 0.000000e+00 : f32
    %240 = vector.broadcast %cst_92 : f32 to vector<16x128xf32>
    %cst_93 = arith.constant 0.000000e+00 : f32
    %241 = vector.broadcast %cst_93 : f32 to vector<16x128xf32>
    %c0_94 = arith.constant 0 : index
    %c0_95 = arith.constant 0 : index
    %c0_96 = arith.constant 0 : index
    %242 = vector.load %arg18[%c0_94, %c0_95, %c0_96] : memref<8x16x128xbf16, #tpu.memory_space<vmem>>, vector<8x16x128xbf16>
    %243 = vector.shape_cast %242 : vector<8x16x128xbf16> to vector<128x128xbf16>
    %cst_97 = arith.constant dense<0.000000e+00> : vector<128x512xf32>
    %244 = tpu.matmul %243, %237, %cst_97 {dimension_numbers = #tpu.dot_dimension_numbers<[1], [0], [0], [1], [0, 0, 1, 1], [], []>} : vector<128x128xbf16>, vector<128x512xbf16>, vector<128x512xf32> -> vector<128x512xf32>
    %245 = vector.broadcast %239 : vector<1x512xf32> to vector<128x512xf32>
    %246 = arith.addf %244, %245 : vector<128x512xf32>
    %247 = arith.truncf %246 : vector<128x512xf32> to vector<128x512xbf16>
    %248 = vector.shape_cast %247 : vector<128x512xbf16> to vector<8x16x512xbf16>
    %c0_98 = arith.constant 0 : index
    %c0_99 = arith.constant 0 : index
    %c0_100 = arith.constant 0 : index
    %249 = vector.load %arg17[%c0_98, %c0_99, %c0_100] : memref<8x16x512xbf16, #tpu.memory_space<vmem>>, vector<8x16x512xbf16>
    tpu.vector_store %arg17[%c0_98, %c0_99, %c0_100], %248 {strides = array<i32>} : memref<8x16x512xbf16, #tpu.memory_space<vmem>>, vector<8x16x512xbf16>,
    %c0_101 = arith.constant 0 : index
    %c0_102 = arith.constant 0 : index
    %c0_103 = arith.constant 0 : index
    %250 = vector.load %arg17[%c0_101, %c0_102, %c0_103] : memref<8x16x512xbf16, #tpu.memory_space<vmem>>, vector<1x16x512xbf16>
    %251 = vector.shape_cast %250 : vector<1x16x512xbf16> to vector<16x512xbf16>
    %252 = arith.extf %251 : vector<16x512xbf16> to vector<16x512xf32>
    %253 = arith.truncf %240 : vector<16x128xf32> to vector<16x128xbf16>
    %cst_104 = arith.constant dense<0.000000e+00> : vector<16x512xf32>
    %254 = tpu.matmul %253, %238, %cst_104 {dimension_numbers = #tpu.dot_dimension_numbers<[1], [0], [0], [1], [0, 0, 1, 1], [], []>} : vector<16x128xbf16>, vector<128x512xbf16>, vector<16x512xf32> -> vector<16x512xf32>
    %255 = arith.addf %252, %254 : vector<16x512xf32>
    %256 = arith.negf %255 : vector<16x512xf32>
    %257 = math.exp %256 : vector<16x512xf32>
    %cst_105 = arith.constant 1.000000e+00 : f32
    %258 = vector.broadcast %cst_105 : f32 to vector<16x512xf32>
    %259 = arith.addf %258, %257 : vector<16x512xf32>
    %260 = arith.divf %258, %259 : vector<16x512xf32>
    %261 = vector.extract_strided_slice %260 {offsets = [0, 0], sizes = [16, 128], strides = [1, 1]} : vector<16x512xf32> to vector<16x128xf32>
    %262 = vector.extract_strided_slice %260 {offsets = [0, 128], sizes = [16, 128], strides = [1, 1]} : vector<16x512xf32> to vector<16x128xf32>
    %263 = vector.extract_strided_slice %260 {offsets = [0, 256], sizes = [16, 128], strides = [1, 1]} : vector<16x512xf32> to vector<16x128xf32>
    %cst_106 = arith.constant 2.000000e+00 : f32
    %264 = vector.broadcast %cst_106 : f32 to vector<16x128xf32>
    %265 = arith.mulf %264, %263 : vector<16x128xf32>
    %cst_107 = arith.constant 1.000000e+00 : f32
    %266 = vector.broadcast %cst_107 : f32 to vector<16x128xf32>
    %267 = arith.subf %265, %266 : vector<16x128xf32>
    %268 = vector.extract_strided_slice %260 {offsets = [0, 384], sizes = [16, 128], strides = [1, 1]} : vector<16x512xf32> to vector<16x128xf32>
    %269 = arith.mulf %262, %241 : vector<16x128xf32>
    %270 = arith.mulf %261, %267 : vector<16x128xf32>
    %271 = arith.addf %269, %270 : vector<16x128xf32>
    %272 = math.tanh %271 : vector<16x128xf32>
    %273 = arith.mulf %268, %272 : vector<16x128xf32>
    %c1_108 = arith.constant 1 : index
    %c0_109 = arith.constant 0 : index
    %c0_110 = arith.constant 0 : index
    %274 = vector.load %arg17[%c1_108, %c0_109, %c0_110] : memref<8x16x512xbf16, #tpu.memory_space<vmem>>, vector<1x16x512xbf16>
    %275 = vector.shape_cast %274 : vector<1x16x512xbf16> to vector<16x512xbf16>
    %276 = arith.extf %275 : vector<16x512xbf16> to vector<16x512xf32>
    %277 = arith.truncf %273 : vector<16x128xf32> to vector<16x128xbf16>
    %cst_111 = arith.constant dense<0.000000e+00> : vector<16x512xf32>
    %278 = tpu.matmul %277, %238, %cst_111 {dimension_numbers = #tpu.dot_dimension_numbers<[1], [0], [0], [1], [0, 0, 1, 1], [], []>} : vector<16x128xbf16>, vector<128x512xbf16>, vector<16x512xf32> -> vector<16x512xf32>
    %279 = arith.addf %276, %278 : vector<16x512xf32>
    %280 = arith.negf %279 : vector<16x512xf32>
    %281 = math.exp %280 : vector<16x512xf32>
    %cst_112 = arith.constant 1.000000e+00 : f32
    %282 = vector.broadcast %cst_112 : f32 to vector<16x512xf32>
    %283 = arith.addf %282, %281 : vector<16x512xf32>
    %284 = arith.divf %282, %283 : vector<16x512xf32>
    %285 = vector.extract_strided_slice %284 {offsets = [0, 0], sizes = [16, 128], strides = [1, 1]} : vector<16x512xf32> to vector<16x128xf32>
    %286 = vector.extract_strided_slice %284 {offsets = [0, 128], sizes = [16, 128], strides = [1, 1]} : vector<16x512xf32> to vector<16x128xf32>
    %287 = vector.extract_strided_slice %284 {offsets = [0, 256], sizes = [16, 128], strides = [1, 1]} : vector<16x512xf32> to vector<16x128xf32>
    %cst_113 = arith.constant 2.000000e+00 : f32
    %288 = vector.broadcast %cst_113 : f32 to vector<16x128xf32>
    %289 = arith.mulf %288, %287 : vector<16x128xf32>
    %cst_114 = arith.constant 1.000000e+00 : f32
    %290 = vector.broadcast %cst_114 : f32 to vector<16x128xf32>
    %291 = arith.subf %289, %290 : vector<16x128xf32>
    %292 = vector.extract_strided_slice %284 {offsets = [0, 384], sizes = [16, 128], strides = [1, 1]} : vector<16x512xf32> to vector<16x128xf32>
    %293 = arith.mulf %286, %271 : vector<16x128xf32>
    %294 = arith.mulf %285, %291 : vector<16x128xf32>
    %295 = arith.addf %293, %294 : vector<16x128xf32>
    %296 = math.tanh %295 : vector<16x128xf32>
    %297 = arith.mulf %292, %296 : vector<16x128xf32>
    %c2_115 = arith.constant 2 : index
    %c0_116 = arith.constant 0 : index
    %c0_117 = arith.constant 0 : index
    %298 = vector.load %arg17[%c2_115, %c0_116, %c0_117] : memref<8x16x512xbf16, #tpu.memory_space<vmem>>, vector<1x16x512xbf16>
    %299 = vector.shape_cast %298 : vector<1x16x512xbf16> to vector<16x512xbf16>
    %300 = arith.extf %299 : vector<16x512xbf16> to vector<16x512xf32>
    %301 = arith.truncf %297 : vector<16x128xf32> to vector<16x128xbf16>
    %cst_118 = arith.constant dense<0.000000e+00> : vector<16x512xf32>
    %302 = tpu.matmul %301, %238, %cst_118 {dimension_numbers = #tpu.dot_dimension_numbers<[1], [0], [0], [1], [0, 0, 1, 1], [], []>} : vector<16x128xbf16>, vector<128x512xbf16>, vector<16x512xf32> -> vector<16x512xf32>
    %303 = arith.addf %300, %302 : vector<16x512xf32>
    %304 = arith.negf %303 : vector<16x512xf32>
    %305 = math.exp %304 : vector<16x512xf32>
    %cst_119 = arith.constant 1.000000e+00 : f32
    %306 = vector.broadcast %cst_119 : f32 to vector<16x512xf32>
    %307 = arith.addf %306, %305 : vector<16x512xf32>
    %308 = arith.divf %306, %307 : vector<16x512xf32>
    %309 = vector.extract_strided_slice %308 {offsets = [0, 0], sizes = [16, 128], strides = [1, 1]} : vector<16x512xf32> to vector<16x128xf32>
    %310 = vector.extract_strided_slice %308 {offsets = [0, 128], sizes = [16, 128], strides = [1, 1]} : vector<16x512xf32> to vector<16x128xf32>
    %311 = vector.extract_strided_slice %308 {offsets = [0, 256], sizes = [16, 128], strides = [1, 1]} : vector<16x512xf32> to vector<16x128xf32>
    %cst_120 = arith.constant 2.000000e+00 : f32
    %312 = vector.broadcast %cst_120 : f32 to vector<16x128xf32>
    %313 = arith.mulf %312, %311 : vector<16x128xf32>
    %cst_121 = arith.constant 1.000000e+00 : f32
    %314 = vector.broadcast %cst_121 : f32 to vector<16x128xf32>
    %315 = arith.subf %313, %314 : vector<16x128xf32>
    %316 = vector.extract_strided_slice %308 {offsets = [0, 384], sizes = [16, 128], strides = [1, 1]} : vector<16x512xf32> to vector<16x128xf32>
    %317 = arith.mulf %310, %295 : vector<16x128xf32>
    %318 = arith.mulf %309, %315 : vector<16x128xf32>
    %319 = arith.addf %317, %318 : vector<16x128xf32>
    %320 = math.tanh %319 : vector<16x128xf32>
    %321 = arith.mulf %316, %320 : vector<16x128xf32>
    %c3_122 = arith.constant 3 : index
    %c0_123 = arith.constant 0 : index
    %c0_124 = arith.constant 0 : index
    %322 = vector.load %arg17[%c3_122, %c0_123, %c0_124] : memref<8x16x512xbf16, #tpu.memory_space<vmem>>, vector<1x16x512xbf16>
    %323 = vector.shape_cast %322 : vector<1x16x512xbf16> to vector<16x512xbf16>
    %324 = arith.extf %323 : vector<16x512xbf16> to vector<16x512xf32>
    %325 = arith.truncf %321 : vector<16x128xf32> to vector<16x128xbf16>
    %cst_125 = arith.constant dense<0.000000e+00> : vector<16x512xf32>
    %326 = tpu.matmul %325, %238, %cst_125 {dimension_numbers = #tpu.dot_dimension_numbers<[1], [0], [0], [1], [0, 0, 1, 1], [], []>} : vector<16x128xbf16>, vector<128x512xbf16>, vector<16x512xf32> -> vector<16x512xf32>
    %327 = arith.addf %324, %326 : vector<16x512xf32>
    %328 = arith.negf %327 : vector<16x512xf32>
    %329 = math.exp %328 : vector<16x512xf32>
    %cst_126 = arith.constant 1.000000e+00 : f32
    %330 = vector.broadcast %cst_126 : f32 to vector<16x512xf32>
    %331 = arith.addf %330, %329 : vector<16x512xf32>
    %332 = arith.divf %330, %331 : vector<16x512xf32>
    %333 = vector.extract_strided_slice %332 {offsets = [0, 0], sizes = [16, 128], strides = [1, 1]} : vector<16x512xf32> to vector<16x128xf32>
    %334 = vector.extract_strided_slice %332 {offsets = [0, 128], sizes = [16, 128], strides = [1, 1]} : vector<16x512xf32> to vector<16x128xf32>
    %335 = vector.extract_strided_slice %332 {offsets = [0, 256], sizes = [16, 128], strides = [1, 1]} : vector<16x512xf32> to vector<16x128xf32>
    %cst_127 = arith.constant 2.000000e+00 : f32
    %336 = vector.broadcast %cst_127 : f32 to vector<16x128xf32>
    %337 = arith.mulf %336, %335 : vector<16x128xf32>
    %cst_128 = arith.constant 1.000000e+00 : f32
    %338 = vector.broadcast %cst_128 : f32 to vector<16x128xf32>
    %339 = arith.subf %337, %338 : vector<16x128xf32>
    %340 = vector.extract_strided_slice %332 {offsets = [0, 384], sizes = [16, 128], strides = [1, 1]} : vector<16x512xf32> to vector<16x128xf32>
    %341 = arith.mulf %334, %319 : vector<16x128xf32>
    %342 = arith.mulf %333, %339 : vector<16x128xf32>
    %343 = arith.addf %341, %342 : vector<16x128xf32>
    %344 = math.tanh %343 : vector<16x128xf32>
    %345 = arith.mulf %340, %344 : vector<16x128xf32>
    %c4_129 = arith.constant 4 : index
    %c0_130 = arith.constant 0 : index
    %c0_131 = arith.constant 0 : index
    %346 = vector.load %arg17[%c4_129, %c0_130, %c0_131] : memref<8x16x512xbf16, #tpu.memory_space<vmem>>, vector<1x16x512xbf16>
    %347 = vector.shape_cast %346 : vector<1x16x512xbf16> to vector<16x512xbf16>
    %348 = arith.extf %347 : vector<16x512xbf16> to vector<16x512xf32>
    %349 = arith.truncf %345 : vector<16x128xf32> to vector<16x128xbf16>
    %cst_132 = arith.constant dense<0.000000e+00> : vector<16x512xf32>
    %350 = tpu.matmul %349, %238, %cst_132 {dimension_numbers = #tpu.dot_dimension_numbers<[1], [0], [0], [1], [0, 0, 1, 1], [], []>} : vector<16x128xbf16>, vector<128x512xbf16>, vector<16x512xf32> -> vector<16x512xf32>
    %351 = arith.addf %348, %350 : vector<16x512xf32>
    %352 = arith.negf %351 : vector<16x512xf32>
    %353 = math.exp %352 : vector<16x512xf32>
    %cst_133 = arith.constant 1.000000e+00 : f32
    %354 = vector.broadcast %cst_133 : f32 to vector<16x512xf32>
    %355 = arith.addf %354, %353 : vector<16x512xf32>
    %356 = arith.divf %354, %355 : vector<16x512xf32>
    %357 = vector.extract_strided_slice %356 {offsets = [0, 0], sizes = [16, 128], strides = [1, 1]} : vector<16x512xf32> to vector<16x128xf32>
    %358 = vector.extract_strided_slice %356 {offsets = [0, 128], sizes = [16, 128], strides = [1, 1]} : vector<16x512xf32> to vector<16x128xf32>
    %359 = vector.extract_strided_slice %356 {offsets = [0, 256], sizes = [16, 128], strides = [1, 1]} : vector<16x512xf32> to vector<16x128xf32>
    %cst_134 = arith.constant 2.000000e+00 : f32
    %360 = vector.broadcast %cst_134 : f32 to vector<16x128xf32>
    %361 = arith.mulf %360, %359 : vector<16x128xf32>
    %cst_135 = arith.constant 1.000000e+00 : f32
    %362 = vector.broadcast %cst_135 : f32 to vector<16x128xf32>
    %363 = arith.subf %361, %362 : vector<16x128xf32>
    %364 = vector.extract_strided_slice %356 {offsets = [0, 384], sizes = [16, 128], strides = [1, 1]} : vector<16x512xf32> to vector<16x128xf32>
    %365 = arith.mulf %358, %343 : vector<16x128xf32>
    %366 = arith.mulf %357, %363 : vector<16x128xf32>
    %367 = arith.addf %365, %366 : vector<16x128xf32>
    %368 = math.tanh %367 : vector<16x128xf32>
    %369 = arith.mulf %364, %368 : vector<16x128xf32>
    %c5_136 = arith.constant 5 : index
    %c0_137 = arith.constant 0 : index
    %c0_138 = arith.constant 0 : index
    %370 = vector.load %arg17[%c5_136, %c0_137, %c0_138] : memref<8x16x512xbf16, #tpu.memory_space<vmem>>, vector<1x16x512xbf16>
    %371 = vector.shape_cast %370 : vector<1x16x512xbf16> to vector<16x512xbf16>
    %372 = arith.extf %371 : vector<16x512xbf16> to vector<16x512xf32>
    %373 = arith.truncf %369 : vector<16x128xf32> to vector<16x128xbf16>
    %cst_139 = arith.constant dense<0.000000e+00> : vector<16x512xf32>
    %374 = tpu.matmul %373, %238, %cst_139 {dimension_numbers = #tpu.dot_dimension_numbers<[1], [0], [0], [1], [0, 0, 1, 1], [], []>} : vector<16x128xbf16>, vector<128x512xbf16>, vector<16x512xf32> -> vector<16x512xf32>
    %375 = arith.addf %372, %374 : vector<16x512xf32>
    %376 = arith.negf %375 : vector<16x512xf32>
    %377 = math.exp %376 : vector<16x512xf32>
    %cst_140 = arith.constant 1.000000e+00 : f32
    %378 = vector.broadcast %cst_140 : f32 to vector<16x512xf32>
    %379 = arith.addf %378, %377 : vector<16x512xf32>
    %380 = arith.divf %378, %379 : vector<16x512xf32>
    %381 = vector.extract_strided_slice %380 {offsets = [0, 0], sizes = [16, 128], strides = [1, 1]} : vector<16x512xf32> to vector<16x128xf32>
    %382 = vector.extract_strided_slice %380 {offsets = [0, 128], sizes = [16, 128], strides = [1, 1]} : vector<16x512xf32> to vector<16x128xf32>
    %383 = vector.extract_strided_slice %380 {offsets = [0, 256], sizes = [16, 128], strides = [1, 1]} : vector<16x512xf32> to vector<16x128xf32>
    %cst_141 = arith.constant 2.000000e+00 : f32
    %384 = vector.broadcast %cst_141 : f32 to vector<16x128xf32>
    %385 = arith.mulf %384, %383 : vector<16x128xf32>
    %cst_142 = arith.constant 1.000000e+00 : f32
    %386 = vector.broadcast %cst_142 : f32 to vector<16x128xf32>
    %387 = arith.subf %385, %386 : vector<16x128xf32>
    %388 = vector.extract_strided_slice %380 {offsets = [0, 384], sizes = [16, 128], strides = [1, 1]} : vector<16x512xf32> to vector<16x128xf32>
    %389 = arith.mulf %382, %367 : vector<16x128xf32>
    %390 = arith.mulf %381, %387 : vector<16x128xf32>
    %391 = arith.addf %389, %390 : vector<16x128xf32>
    %392 = math.tanh %391 : vector<16x128xf32>
    %393 = arith.mulf %388, %392 : vector<16x128xf32>
    %c6_143 = arith.constant 6 : index
    %c0_144 = arith.constant 0 : index
    %c0_145 = arith.constant 0 : index
    %394 = vector.load %arg17[%c6_143, %c0_144, %c0_145] : memref<8x16x512xbf16, #tpu.memory_space<vmem>>, vector<1x16x512xbf16>
    %395 = vector.shape_cast %394 : vector<1x16x512xbf16> to vector<16x512xbf16>
    %396 = arith.extf %395 : vector<16x512xbf16> to vector<16x512xf32>
    %397 = arith.truncf %393 : vector<16x128xf32> to vector<16x128xbf16>
    %cst_146 = arith.constant dense<0.000000e+00> : vector<16x512xf32>
    %398 = tpu.matmul %397, %238, %cst_146 {dimension_numbers = #tpu.dot_dimension_numbers<[1], [0], [0], [1], [0, 0, 1, 1], [], []>} : vector<16x128xbf16>, vector<128x512xbf16>, vector<16x512xf32> -> vector<16x512xf32>
    %399 = arith.addf %396, %398 : vector<16x512xf32>
    %400 = arith.negf %399 : vector<16x512xf32>
    %401 = math.exp %400 : vector<16x512xf32>
    %cst_147 = arith.constant 1.000000e+00 : f32
    %402 = vector.broadcast %cst_147 : f32 to vector<16x512xf32>
    %403 = arith.addf %402, %401 : vector<16x512xf32>
    %404 = arith.divf %402, %403 : vector<16x512xf32>
    %405 = vector.extract_strided_slice %404 {offsets = [0, 0], sizes = [16, 128], strides = [1, 1]} : vector<16x512xf32> to vector<16x128xf32>
    %406 = vector.extract_strided_slice %404 {offsets = [0, 128], sizes = [16, 128], strides = [1, 1]} : vector<16x512xf32> to vector<16x128xf32>
    %407 = vector.extract_strided_slice %404 {offsets = [0, 256], sizes = [16, 128], strides = [1, 1]} : vector<16x512xf32> to vector<16x128xf32>
    %cst_148 = arith.constant 2.000000e+00 : f32
    %408 = vector.broadcast %cst_148 : f32 to vector<16x128xf32>
    %409 = arith.mulf %408, %407 : vector<16x128xf32>
    %cst_149 = arith.constant 1.000000e+00 : f32
    %410 = vector.broadcast %cst_149 : f32 to vector<16x128xf32>
    %411 = arith.subf %409, %410 : vector<16x128xf32>
    %412 = vector.extract_strided_slice %404 {offsets = [0, 384], sizes = [16, 128], strides = [1, 1]} : vector<16x512xf32> to vector<16x128xf32>
    %413 = arith.mulf %406, %391 : vector<16x128xf32>
    %414 = arith.mulf %405, %411 : vector<16x128xf32>
    %415 = arith.addf %413, %414 : vector<16x128xf32>
    %416 = math.tanh %415 : vector<16x128xf32>
    %417 = arith.mulf %412, %416 : vector<16x128xf32>
    %c7_150 = arith.constant 7 : index
    %c0_151 = arith.constant 0 : index
    %c0_152 = arith.constant 0 : index
    %418 = vector.load %arg17[%c7_150, %c0_151, %c0_152] : memref<8x16x512xbf16, #tpu.memory_space<vmem>>, vector<1x16x512xbf16>
    %419 = vector.shape_cast %418 : vector<1x16x512xbf16> to vector<16x512xbf16>
    %420 = arith.extf %419 : vector<16x512xbf16> to vector<16x512xf32>
    %421 = arith.truncf %417 : vector<16x128xf32> to vector<16x128xbf16>
    %cst_153 = arith.constant dense<0.000000e+00> : vector<16x512xf32>
    %422 = tpu.matmul %421, %238, %cst_153 {dimension_numbers = #tpu.dot_dimension_numbers<[1], [0], [0], [1], [0, 0, 1, 1], [], []>} : vector<16x128xbf16>, vector<128x512xbf16>, vector<16x512xf32> -> vector<16x512xf32>
    %423 = arith.addf %420, %422 : vector<16x512xf32>
    %424 = arith.negf %423 : vector<16x512xf32>
    %425 = math.exp %424 : vector<16x512xf32>
    %cst_154 = arith.constant 1.000000e+00 : f32
    %426 = vector.broadcast %cst_154 : f32 to vector<16x512xf32>
    %427 = arith.addf %426, %425 : vector<16x512xf32>
    %428 = arith.divf %426, %427 : vector<16x512xf32>
    %429 = vector.extract_strided_slice %428 {offsets = [0, 0], sizes = [16, 128], strides = [1, 1]} : vector<16x512xf32> to vector<16x128xf32>
    %430 = vector.extract_strided_slice %428 {offsets = [0, 128], sizes = [16, 128], strides = [1, 1]} : vector<16x512xf32> to vector<16x128xf32>
    %431 = vector.extract_strided_slice %428 {offsets = [0, 256], sizes = [16, 128], strides = [1, 1]} : vector<16x512xf32> to vector<16x128xf32>
    %cst_155 = arith.constant 2.000000e+00 : f32
    %432 = vector.broadcast %cst_155 : f32 to vector<16x128xf32>
    %433 = arith.mulf %432, %431 : vector<16x128xf32>
    %cst_156 = arith.constant 1.000000e+00 : f32
    %434 = vector.broadcast %cst_156 : f32 to vector<16x128xf32>
    %435 = arith.subf %433, %434 : vector<16x128xf32>
    %436 = vector.extract_strided_slice %428 {offsets = [0, 384], sizes = [16, 128], strides = [1, 1]} : vector<16x512xf32> to vector<16x128xf32>
    %437 = arith.mulf %430, %415 : vector<16x128xf32>
    %438 = arith.mulf %429, %435 : vector<16x128xf32>
    %439 = arith.addf %437, %438 : vector<16x128xf32>
    %440 = math.tanh %439 : vector<16x128xf32>
    %441 = arith.mulf %436, %440 : vector<16x128xf32>
    %c0_157 = arith.constant 0 : index
    %c0_158 = arith.constant 0 : index
    %442 = vector.load %arg8[%c0_157, %c0_158] : memref<128x128xbf16, #tpu.memory_space<vmem>>, vector<128x128xbf16>
    %c0_159 = arith.constant 0 : index
    %c0_160 = arith.constant 0 : index
    %443 = vector.load %arg9[%c0_159, %c0_160] : memref<1x128xf32, #tpu.memory_space<vmem>>, vector<1x128xf32>
    %444 = arith.truncf %441 : vector<16x128xf32> to vector<16x128xbf16>
    %cst_161 = arith.constant dense<0.000000e+00> : vector<16x128xf32>
    %445 = tpu.matmul %444, %442, %cst_161 {dimension_numbers = #tpu.dot_dimension_numbers<[1], [0], [0], [1], [0, 0, 1, 1], [], []>} : vector<16x128xbf16>, vector<128x128xbf16>, vector<16x128xf32> -> vector<16x128xf32>
    %446 = vector.broadcast %443 : vector<1x128xf32> to vector<16x128xf32>
    %447 = arith.addf %445, %446 : vector<16x128xf32>
    %cst_162 = arith.constant 0.000000e+00 : f32
    %448 = vector.broadcast %cst_162 : f32 to vector<16x128xf32>
    %449 = arith.maximumf %447, %448 : vector<16x128xf32>
    %c0_163 = arith.constant 0 : index
    %c0_164 = arith.constant 0 : index
    %450 = vector.load %arg10[%c0_163, %c0_164] : memref<128x128xbf16, #tpu.memory_space<vmem>>, vector<128x128xbf16>
    %c0_165 = arith.constant 0 : index
    %c0_166 = arith.constant 0 : index
    %451 = vector.load %arg11[%c0_165, %c0_166] : memref<1x128xf32, #tpu.memory_space<vmem>>, vector<1x128xf32>
    %452 = arith.truncf %449 : vector<16x128xf32> to vector<16x128xbf16>
    %cst_167 = arith.constant dense<0.000000e+00> : vector<16x128xf32>
    %453 = tpu.matmul %452, %450, %cst_167 {dimension_numbers = #tpu.dot_dimension_numbers<[1], [0], [0], [1], [0, 0, 1, 1], [], []>} : vector<16x128xbf16>, vector<128x128xbf16>, vector<16x128xf32> -> vector<16x128xf32>
    %454 = vector.broadcast %451 : vector<1x128xf32> to vector<16x128xf32>
    %455 = arith.addf %453, %454 : vector<16x128xf32>
    %cst_168 = arith.constant 0.000000e+00 : f32
    %456 = vector.broadcast %cst_168 : f32 to vector<16x128xf32>
    %457 = arith.maximumf %455, %456 : vector<16x128xf32>
    %c0_169 = arith.constant 0 : index
    %c0_170 = arith.constant 0 : index
    %458 = vector.load %arg12[%c0_169, %c0_170] : memref<128x128xbf16, #tpu.memory_space<vmem>>, vector<128x128xbf16>
    %c0_171 = arith.constant 0 : index
    %c0_172 = arith.constant 0 : index
    %459 = vector.load %arg13[%c0_171, %c0_172] : memref<1x128xf32, #tpu.memory_space<vmem>>, vector<1x128xf32>
    %460 = arith.truncf %457 : vector<16x128xf32> to vector<16x128xbf16>
    %cst_173 = arith.constant dense<0.000000e+00> : vector<16x128xf32>
    %461 = tpu.matmul %460, %458, %cst_173 {dimension_numbers = #tpu.dot_dimension_numbers<[1], [0], [0], [1], [0, 0, 1, 1], [], []>} : vector<16x128xbf16>, vector<128x128xbf16>, vector<16x128xf32> -> vector<16x128xf32>
    %462 = vector.broadcast %459 : vector<1x128xf32> to vector<16x128xf32>
    %463 = arith.addf %461, %462 : vector<16x128xf32>
    %cst_174 = arith.constant 0.000000e+00 : f32
    %464 = vector.broadcast %cst_174 : f32 to vector<16x128xf32>
    %465 = arith.maximumf %463, %464 : vector<16x128xf32>
    %c0_175 = arith.constant 0 : index
    %c0_176 = arith.constant 0 : index
    %466 = vector.load %arg14[%c0_175, %c0_176] : memref<128x128xbf16, #tpu.memory_space<vmem>>, vector<128x128xbf16>
    %c0_177 = arith.constant 0 : index
    %c0_178 = arith.constant 0 : index
    %467 = vector.load %arg15[%c0_177, %c0_178] : memref<1x128xf32, #tpu.memory_space<vmem>>, vector<1x128xf32>
    %468 = arith.truncf %465 : vector<16x128xf32> to vector<16x128xbf16>
    %cst_179 = arith.constant dense<0.000000e+00> : vector<16x128xf32>
    %469 = tpu.matmul %468, %466, %cst_179 {dimension_numbers = #tpu.dot_dimension_numbers<[1], [0], [0], [1], [0, 0, 1, 1], [], []>} : vector<16x128xbf16>, vector<128x128xbf16>, vector<16x128xf32> -> vector<16x128xf32>
    %470 = vector.broadcast %467 : vector<1x128xf32> to vector<16x128xf32>
    %471 = arith.addf %469, %470 : vector<16x128xf32>
    %c0_180 = arith.constant 0 : index
    %c0_181 = arith.constant 0 : index
    %472 = vector.load %arg16[%c0_180, %c0_181] : memref<16x128xf32, #tpu.memory_space<vmem>>, vector<16x128xf32>
    tpu.vector_store %arg16[%c0_180, %c0_181], %471 {strides = array<i32>} : memref<16x128xf32, #tpu.memory_space<vmem>>, vector<16x128xf32>,
    return
  }
  func.func @transform_0(%arg0: i32) -> (i32, i32, i32) {
    %c0_i32 = arith.constant 0 : i32
    %c0_i32_0 = arith.constant 0 : i32
    %c0_i32_1 = arith.constant 0 : i32
    return %c0_i32, %arg0, %c0_i32_0 : i32, i32, i32
  }
  func.func @transform_1(%arg0: i32) -> (i32, i32) {
    %c0_i32 = arith.constant 0 : i32
    %c0_i32_0 = arith.constant 0 : i32
    %c0_i32_1 = arith.constant 0 : i32
    return %c0_i32, %c0_i32_0 : i32, i32
  }
  func.func @transform_2(%arg0: i32) -> (i32, i32) {
    %c0_i32 = arith.constant 0 : i32
    %c0_i32_0 = arith.constant 0 : i32
    %c0_i32_1 = arith.constant 0 : i32
    return %c0_i32, %c0_i32_0 : i32, i32
  }
  func.func @transform_3(%arg0: i32) -> (i32, i32) {
    %c0_i32 = arith.constant 0 : i32
    %c0_i32_0 = arith.constant 0 : i32
    %c0_i32_1 = arith.constant 0 : i32
    return %c0_i32, %c0_i32_0 : i32, i32
  }
  func.func @transform_4(%arg0: i32) -> (i32, i32) {
    %c0_i32 = arith.constant 0 : i32
    %c0_i32_0 = arith.constant 0 : i32
    %c0_i32_1 = arith.constant 0 : i32
    return %c0_i32, %c0_i32_0 : i32, i32
  }
  func.func @transform_5(%arg0: i32) -> (i32, i32) {
    %c0_i32 = arith.constant 0 : i32
    %c0_i32_0 = arith.constant 0 : i32
    %c0_i32_1 = arith.constant 0 : i32
    return %c0_i32, %c0_i32_0 : i32, i32
  }
  func.func @transform_6(%arg0: i32) -> (i32, i32) {
    %c0_i32 = arith.constant 0 : i32
    %c0_i32_0 = arith.constant 0 : i32
    %c0_i32_1 = arith.constant 0 : i32
    return %c0_i32, %c0_i32_0 : i32, i32
  }
  func.func @transform_7(%arg0: i32) -> (i32, i32) {
    %c0_i32 = arith.constant 0 : i32
    %c0_i32_0 = arith.constant 0 : i32
    %c0_i32_1 = arith.constant 0 : i32
    return %c0_i32, %c0_i32_0 : i32, i32
  }
  func.func @transform_8(%arg0: i32) -> (i32, i32) {
    %c0_i32 = arith.constant 0 : i32
    %c0_i32_0 = arith.constant 0 : i32
    %c0_i32_1 = arith.constant 0 : i32
    return %c0_i32, %c0_i32_0 : i32, i32
  }
  func.func @transform_9(%arg0: i32) -> (i32, i32) {
    %c0_i32 = arith.constant 0 : i32
    %c0_i32_0 = arith.constant 0 : i32
    %c0_i32_1 = arith.constant 0 : i32
    return %c0_i32, %c0_i32_0 : i32, i32
  }
  func.func @transform_10(%arg0: i32) -> (i32, i32) {
    %c0_i32 = arith.constant 0 : i32
    %c0_i32_0 = arith.constant 0 : i32
    %c0_i32_1 = arith.constant 0 : i32
    return %c0_i32, %c0_i32_0 : i32, i32
  }
  func.func @transform_11(%arg0: i32) -> (i32, i32) {
    %c0_i32 = arith.constant 0 : i32
    %c0_i32_0 = arith.constant 0 : i32
    %c0_i32_1 = arith.constant 0 : i32
    return %c0_i32, %c0_i32_0 : i32, i32
  }
  func.func @transform_12(%arg0: i32) -> (i32, i32) {
    %c0_i32 = arith.constant 0 : i32
    %c0_i32_0 = arith.constant 0 : i32
    %c0_i32_1 = arith.constant 0 : i32
    return %c0_i32, %c0_i32_0 : i32, i32
  }
  func.func @transform_13(%arg0: i32) -> (i32, i32) {
    %c0_i32 = arith.constant 0 : i32
    %c0_i32_0 = arith.constant 0 : i32
    %c0_i32_1 = arith.constant 0 : i32
    return %c0_i32, %c0_i32_0 : i32, i32
  }
  func.func @transform_14(%arg0: i32) -> (i32, i32) {
    %c0_i32 = arith.constant 0 : i32
    %c0_i32_0 = arith.constant 0 : i32
    %c0_i32_1 = arith.constant 0 : i32
    return %c0_i32, %c0_i32_0 : i32, i32
  }
  func.func @transform_15(%arg0: i32) -> (i32, i32) {
    %c0_i32 = arith.constant 0 : i32
    %c0_i32_0 = arith.constant 0 : i32
    return %arg0, %c0_i32 : i32, i32
  }
}

</mosaic_0001>

<llo_original>
// kernel: lstm_classifier_forward.1
$region0: #{lstm_classifier_forward.1}
  #allocation0 [shape = 'u32[]', space=smem, size = 0x4, offset = 0x4, fixed_abs, tag = 'smem constant byte address 0x4 - core index']
  #allocation1 [shape = 'u32[144,128]{1,0:T(1,128)}', space=vmem, size = 0x12000, scoped, tag = 'internal scratch']
  #allocation2 [shape = 'bf16[8,16,512]{2,1,0:T(16,128)(2,1)}', space=vmem, size = 0x20000, scoped, tag = 'scratch operand']
  #allocation3 [shape = 'bf16[8,16,128]{2,1,0:T(16,128)(2,1)}', space=vmem, size = 0x8000, scoped, tag = 'scratch operand']
  %s0 = inlined_call_operand.vmem [shape: bf16[8,32,16], index: 0, kind: input, shape index: {}]
  %s1 = inlined_call_operand.vmem [shape: bf16[16,512], index: 1, kind: input, shape index: {}]
  %s2 = inlined_call_operand.vmem [shape: bf16[128,512], index: 2, kind: input, shape index: {}]
  %s3 = inlined_call_operand.vmem [shape: f32[1,512], index: 3, kind: input, shape index: {}]
  %s4 = inlined_call_operand.vmem [shape: bf16[128,512], index: 4, kind: input, shape index: {}]
  %s5 = inlined_call_operand.vmem [shape: bf16[128,512], index: 5, kind: input, shape index: {}]
  %s6 = inlined_call_operand.vmem [shape: f32[1,512], index: 6, kind: input, shape index: {}]
  %s7 = inlined_call_operand.vmem [shape: bf16[128,128], index: 7, kind: input, shape index: {}]
  %s8 = inlined_call_operand.vmem [shape: f32[1,128], index: 8, kind: input, shape index: {}]
  %s9 = inlined_call_operand.vmem [shape: bf16[128,128], index: 9, kind: input, shape index: {}]
  %s10 = inlined_call_operand.vmem [shape: f32[1,128], index: 10, kind: input, shape index: {}]
  %s11 = inlined_call_operand.vmem [shape: bf16[128,128], index: 11, kind: input, shape index: {}]
  %s12 = inlined_call_operand.vmem [shape: f32[1,128], index: 12, kind: input, shape index: {}]
  %s13 = inlined_call_operand.vmem [shape: bf16[128,128], index: 13, kind: input, shape index: {}]
  %s14 = inlined_call_operand.vmem [shape: f32[1,128], index: 14, kind: input, shape index: {}]
  %s15 = inlined_call_operand.vmem [shape: f32[32,128], index: 15, kind: output, shape index: {}]
  %s16 = sld [smem:[#allocation0]]
  $region134: #{lstm_classifier_forward.1} parent=0
    _
  %s18 = ssub.s32 1, %s16
  %s19 = scalar_select 0, %s18, %s16
  $region1: #{lstm_classifier_forward.1} parent=0
    #allocation4 [shape = 'u8[65536]{0}', space=vmem, size = 0x10000, scoped, tag = 'input window, operand 0']
    loop: start=0, step=1, limit=4
    $region2: #{lstm_classifier_forward.1} parent=1 // loop_pre_header
      _
    $region3: #{lstm_classifier_forward.1} parent=1 // loop_header
      %s21 = sphi 0, %s25
      %p22 = scmp.ge.s32.totalorder %s21, 4
      %s31 = sphi 0, %s33
      %s34 = sphi 0, %s31
      %s35 = sphi 0, %s34
      %s51 = sphi 0, %s35
      %s55 = sphi 0, %s55
      %s57 = sphi 0, %s55
      %s58 = sphi 0, %s57
      %s72 = sphi 0, %s58
      %s76 = sphi 0, %s76
      %s78 = sphi 0, %s76
      %s79 = sphi 0, %s78
      %s93 = sphi 0, %s79
      %s97 = sphi 0, %s97
      %s99 = sphi 0, %s97
      %s100 = sphi 0, %s99
      %s114 = sphi 0, %s100
      %s118 = sphi 0, %s118
      %s120 = sphi 0, %s118
      %s121 = sphi 0, %s120
      %s135 = sphi 0, %s121
      %s139 = sphi 0, %s139
      %s141 = sphi 0, %s139
      %s142 = sphi 0, %s141
      %s156 = sphi 0, %s142
      %s160 = sphi 0, %s160
      %s162 = sphi 0, %s160
      %s163 = sphi 0, %s162
      %s177 = sphi 0, %s163
      %s181 = sphi 0, %s181
      %s183 = sphi 0, %s181
      %s184 = sphi 0, %s183
      %s198 = sphi 0, %s184
      %s202 = sphi 0, %s202
      %s204 = sphi 0, %s202
      %s205 = sphi 0, %s204
      %s219 = sphi 0, %s205
      %s223 = sphi 0, %s223
      %s225 = sphi 0, %s223
      %s226 = sphi 0, %s225
      %s240 = sphi 0, %s226
      %s244 = sphi 0, %s244
      %s246 = sphi 0, %s244
      %s247 = sphi 0, %s246
      %s261 = sphi 0, %s247
      %s265 = sphi 0, %s265
      %s267 = sphi 0, %s265
      %s268 = sphi 0, %s267
      %s282 = sphi 0, %s268
      %s286 = sphi 0, %s286
      %s288 = sphi 0, %s286
      %s289 = sphi 0, %s288
      %s303 = sphi 0, %s289
      %s307 = sphi 0, %s307
      %s309 = sphi 0, %s307
      %s310 = sphi 0, %s309
      %s324 = sphi 0, %s310
      %s328 = sphi 0, %s328
      %s330 = sphi 0, %s328
      %s331 = sphi 0, %s330
      %s345 = sphi 0, %s331
      %s351 = sphi 0, %s353
      %s354 = sphi 0, %s351
      %s355 = sphi 0, %s354
      %s371 = sphi 0, %s355
    $region4: #{lstm_classifier_forward.1} parent=1 // loop_header_branch
      %24 = sbr.rel (%p22) target = $region8
    $region5: #{lstm_classifier_forward.1} parent=1 // loop_body
      %s26 = ssub.s32 %s21, 1
      %s27 = ssub.s32 %s21, 2
      %s28 = sadd.s32 %s21, 1
      %s29 = ssub.s32 %s21, %s28
      %p30 = scmp.eq.s32.totalorder %s29, 0
      %s32 = sadd.s32 %s31, 1
      %s33 = scalar_select %p30, %s31, %s32
      %p36 = pneg %p30
      %p37 = scmp.eq.s32.totalorder %s21, 1
      %p38 = por %p36, %p37
      %p39 = scmp.ne.s32.totalorder %s31, %s34
      %p40 = scmp.eq.s32.totalorder %s21, 0
      %p41 = por %p39, %p40
      %p42 = scmp.ne.s32.totalorder %s31, %s34
      %p43 = scmp.eq.s32.totalorder %s26, 1
      %p44 = por %p42, %p43
      %p45 = scmp.ne.s32.totalorder %s34, %s35
      %p46 = scmp.eq.s32.totalorder %s26, 0
      %p47 = por %p45, %p46
      %p48 = scmp.ne.s32.totalorder %s34, %s35
      %p49 = scmp.eq.s32.totalorder %s27, 1
      %p50 = por %p48, %p49
      %p52 = scmp.ne.s32.totalorder %s35, %s51
      %p53 = scmp.eq.s32.totalorder %s27, 0
      %p54 = por %p52, %p53
      %s56 = sadd.s32 %s55, 1
      %p59 = scmp.eq.s32.totalorder %s21, 1
      %p60 = scmp.ne.s32.totalorder %s55, %s57
      %p61 = scmp.eq.s32.totalorder %s21, 0
      %p62 = por %p60, %p61
      %p63 = scmp.ne.s32.totalorder %s55, %s57
      %p64 = scmp.eq.s32.totalorder %s26, 1
      %p65 = por %p63, %p64
      %p66 = scmp.ne.s32.totalorder %s57, %s58
      %p67 = scmp.eq.s32.totalorder %s26, 0
      %p68 = por %p66, %p67
      %p69 = scmp.ne.s32.totalorder %s57, %s58
      %p70 = scmp.eq.s32.totalorder %s27, 1
      %p71 = por %p69, %p70
      %p73 = scmp.ne.s32.totalorder %s58, %s72
      %p74 = scmp.eq.s32.totalorder %s27, 0
      %p75 = por %p73, %p74
      %s77 = sadd.s32 %s76, 1
      %p80 = scmp.eq.s32.totalorder %s21, 1
      %p81 = scmp.ne.s32.totalorder %s76, %s78
      %p82 = scmp.eq.s32.totalorder %s21, 0
      %p83 = por %p81, %p82
      %p84 = scmp.ne.s32.totalorder %s76, %s78
      %p85 = scmp.eq.s32.totalorder %s26, 1
      %p86 = por %p84, %p85
      %p87 = scmp.ne.s32.totalorder %s78, %s79
      %p88 = scmp.eq.s32.totalorder %s26, 0
      %p89 = por %p87, %p88
      %p90 = scmp.ne.s32.totalorder %s78, %s79
      %p91 = scmp.eq.s32.totalorder %s27, 1
      %p92 = por %p90, %p91
      %p94 = scmp.ne.s32.totalorder %s79, %s93
      %p95 = scmp.eq.s32.totalorder %s27, 0
      %p96 = por %p94, %p95
      %s98 = sadd.s32 %s97, 1
      %p101 = scmp.eq.s32.totalorder %s21, 1
      %p102 = scmp.ne.s32.totalorder %s97, %s99
      %p103 = scmp.eq.s32.totalorder %s21, 0
      %p104 = por %p102, %p103
      %p105 = scmp.ne.s32.totalorder %s97, %s99
      %p106 = scmp.eq.s32.totalorder %s26, 1
      %p107 = por %p105, %p106
      %p108 = scmp.ne.s32.totalorder %s99, %s100
      %p109 = scmp.eq.s32.totalorder %s26, 0
      %p110 = por %p108, %p109
      %p111 = scmp.ne.s32.totalorder %s99, %s100
      %p112 = scmp.eq.s32.totalorder %s27, 1
      %p113 = por %p111, %p112
      %p115 = scmp.ne.s32.totalorder %s100, %s114
      %p116 = scmp.eq.s32.totalorder %s27, 0
      %p117 = por %p115, %p116
      %s119 = sadd.s32 %s118, 1
      %p122 = scmp.eq.s32.totalorder %s21, 1
      %p123 = scmp.ne.s32.totalorder %s118, %s120
      %p124 = scmp.eq.s32.totalorder %s21, 0
      %p125 = por %p123, %p124
      %p126 = scmp.ne.s32.totalorder %s118, %s120
      %p127 = scmp.eq.s32.totalorder %s26, 1
      %p128 = por %p126, %p127
      %p129 = scmp.ne.s32.totalorder %s120, %s121
      %p130 = scmp.eq.s32.totalorder %s26, 0
      %p131 = por %p129, %p130
      %p132 = scmp.ne.s32.totalorder %s120, %s121
      %p133 = scmp.eq.s32.totalorder %s27, 1
      %p134 = por %p132, %p133
      %p136 = scmp.ne.s32.totalorder %s121, %s135
      %p137 = scmp.eq.s32.totalorder %s27, 0
      %p138 = por %p136, %p137
      %s140 = sadd.s32 %s139, 1
      %p143 = scmp.eq.s32.totalorder %s21, 1
      %p144 = scmp.ne.s32.totalorder %s139, %s141
      %p145 = scmp.eq.s32.totalorder %s21, 0
      %p146 = por %p144, %p145
      %p147 = scmp.ne.s32.totalorder %s139, %s141
      %p148 = scmp.eq.s32.totalorder %s26, 1
      %p149 = por %p147, %p148
      %p150 = scmp.ne.s32.totalorder %s141, %s142
      %p151 = scmp.eq.s32.totalorder %s26, 0
      %p152 = por %p150, %p151
      %p153 = scmp.ne.s32.totalorder %s141, %s142
      %p154 = scmp.eq.s32.totalorder %s27, 1
      %p155 = por %p153, %p154
      %p157 = scmp.ne.s32.totalorder %s142, %s156
      %p158 = scmp.eq.s32.totalorder %s27, 0
      %p159 = por %p157, %p158
      %s161 = sadd.s32 %s160, 1
      %p164 = scmp.eq.s32.totalorder %s21, 1
      %p165 = scmp.ne.s32.totalorder %s160, %s162
      %p166 = scmp.eq.s32.totalorder %s21, 0
      %p167 = por %p165, %p166
      %p168 = scmp.ne.s32.totalorder %s160, %s162
      %p169 = scmp.eq.s32.totalorder %s26, 1
      %p170 = por %p168, %p169
      %p171 = scmp.ne.s32.totalorder %s162, %s163
      %p172 = scmp.eq.s32.totalorder %s26, 0
      %p173 = por %p171, %p172
      %p174 = scmp.ne.s32.totalorder %s162, %s163
      %p175 = scmp.eq.s32.totalorder %s27, 1
      %p176 = por %p174, %p175
      %p178 = scmp.ne.s32.totalorder %s163, %s177
      %p179 = scmp.eq.s32.totalorder %s27, 0
      %p180 = por %p178, %p179
      %s182 = sadd.s32 %s181, 1
      %p185 = scmp.eq.s32.totalorder %s21, 1
      %p186 = scmp.ne.s32.totalorder %s181, %s183
      %p187 = scmp.eq.s32.totalorder %s21, 0
      %p188 = por %p186, %p187
      %p189 = scmp.ne.s32.totalorder %s181, %s183
      %p190 = scmp.eq.s32.totalorder %s26, 1
      %p191 = por %p189, %p190
      %p192 = scmp.ne.s32.totalorder %s183, %s184
      %p193 = scmp.eq.s32.totalorder %s26, 0
      %p194 = por %p192, %p193
      %p195 = scmp.ne.s32.totalorder %s183, %s184
      %p196 = scmp.eq.s32.totalorder %s27, 1
      %p197 = por %p195, %p196
      %p199 = scmp.ne.s32.totalorder %s184, %s198
      %p200 = scmp.eq.s32.totalorder %s27, 0
      %p201 = por %p199, %p200
      %s203 = sadd.s32 %s202, 1
      %p206 = scmp.eq.s32.totalorder %s21, 1
      %p207 = scmp.ne.s32.totalorder %s202, %s204
      %p208 = scmp.eq.s32.totalorder %s21, 0
      %p209 = por %p207, %p208
      %p210 = scmp.ne.s32.totalorder %s202, %s204
      %p211 = scmp.eq.s32.totalorder %s26, 1
      %p212 = por %p210, %p211
      %p213 = scmp.ne.s32.totalorder %s204, %s205
      %p214 = scmp.eq.s32.totalorder %s26, 0
      %p215 = por %p213, %p214
      %p216 = scmp.ne.s32.totalorder %s204, %s205
      %p217 = scmp.eq.s32.totalorder %s27, 1
      %p218 = por %p216, %p217
      %p220 = scmp.ne.s32.totalorder %s205, %s219
      %p221 = scmp.eq.s32.totalorder %s27, 0
      %p222 = por %p220, %p221
      %s224 = sadd.s32 %s223, 1
      %p227 = scmp.eq.s32.totalorder %s21, 1
      %p228 = scmp.ne.s32.totalorder %s223, %s225
      %p229 = scmp.eq.s32.totalorder %s21, 0
      %p230 = por %p228, %p229
      %p231 = scmp.ne.s32.totalorder %s223, %s225
      %p232 = scmp.eq.s32.totalorder %s26, 1
      %p233 = por %p231, %p232
      %p234 = scmp.ne.s32.totalorder %s225, %s226
      %p235 = scmp.eq.s32.totalorder %s26, 0
      %p236 = por %p234, %p235
      %p237 = scmp.ne.s32.totalorder %s225, %s226
      %p238 = scmp.eq.s32.totalorder %s27, 1
      %p239 = por %p237, %p238
      %p241 = scmp.ne.s32.totalorder %s226, %s240
      %p242 = scmp.eq.s32.totalorder %s27, 0
      %p243 = por %p241, %p242
      %s245 = sadd.s32 %s244, 1
      %p248 = scmp.eq.s32.totalorder %s21, 1
      %p249 = scmp.ne.s32.totalorder %s244, %s246
      %p250 = scmp.eq.s32.totalorder %s21, 0
      %p251 = por %p249, %p250
      %p252 = scmp.ne.s32.totalorder %s244, %s246
      %p253 = scmp.eq.s32.totalorder %s26, 1
      %p254 = por %p252, %p253
      %p255 = scmp.ne.s32.totalorder %s246, %s247
      %p256 = scmp.eq.s32.totalorder %s26, 0
      %p257 = por %p255, %p256
      %p258 = scmp.ne.s32.totalorder %s246, %s247
      %p259 = scmp.eq.s32.totalorder %s27, 1
      %p260 = por %p258, %p259
      %p262 = scmp.ne.s32.totalorder %s247, %s261
      %p263 = scmp.eq.s32.totalorder %s27, 0
      %p264 = por %p262, %p263
      %s266 = sadd.s32 %s265, 1
      %p269 = scmp.eq.s32.totalorder %s21, 1
      %p270 = scmp.ne.s32.totalorder %s265, %s267
      %p271 = scmp.eq.s32.totalorder %s21, 0
      %p272 = por %p270, %p271
      %p273 = scmp.ne.s32.totalorder %s265, %s267
      %p274 = scmp.eq.s32.totalorder %s26, 1
      %p275 = por %p273, %p274
      %p276 = scmp.ne.s32.totalorder %s267, %s268
      %p277 = scmp.eq.s32.totalorder %s26, 0
      %p278 = por %p276, %p277
      %p279 = scmp.ne.s32.totalorder %s267, %s268
      %p280 = scmp.eq.s32.totalorder %s27, 1
      %p281 = por %p279, %p280
      %p283 = scmp.ne.s32.totalorder %s268, %s282
      %p284 = scmp.eq.s32.totalorder %s27, 0
      %p285 = por %p283, %p284
      %s287 = sadd.s32 %s286, 1
      %p290 = scmp.eq.s32.totalorder %s21, 1
      %p291 = scmp.ne.s32.totalorder %s286, %s288
      %p292 = scmp.eq.s32.totalorder %s21, 0
      %p293 = por %p291, %p292
      %p294 = scmp.ne.s32.totalorder %s286, %s288
      %p295 = scmp.eq.s32.totalorder %s26, 1
      %p296 = por %p294, %p295
      %p297 = scmp.ne.s32.totalorder %s288, %s289
      %p298 = scmp.eq.s32.totalorder %s26, 0
      %p299 = por %p297, %p298
      %p300 = scmp.ne.s32.totalorder %s288, %s289
      %p301 = scmp.eq.s32.totalorder %s27, 1
      %p302 = por %p300, %p301
      %p304 = scmp.ne.s32.totalorder %s289, %s303
      %p305 = scmp.eq.s32.totalorder %s27, 0
      %p306 = por %p304, %p305
      %s308 = sadd.s32 %s307, 1
      %p311 = scmp.eq.s32.totalorder %s21, 1
      %p312 = scmp.ne.s32.totalorder %s307, %s309
      %p313 = scmp.eq.s32.totalorder %s21, 0
      %p314 = por %p312, %p313
      %p315 = scmp.ne.s32.totalorder %s307, %s309
      %p316 = scmp.eq.s32.totalorder %s26, 1
      %p317 = por %p315, %p316
      %p318 = scmp.ne.s32.totalorder %s309, %s310
      %p319 = scmp.eq.s32.totalorder %s26, 0
      %p320 = por %p318, %p319
      %p321 = scmp.ne.s32.totalorder %s309, %s310
      %p322 = scmp.eq.s32.totalorder %s27, 1
      %p323 = por %p321, %p322
      %p325 = scmp.ne.s32.totalorder %s310, %s324
      %p326 = scmp.eq.s32.totalorder %s27, 0
      %p327 = por %p325, %p326
      %s329 = sadd.s32 %s328, 1
      %p332 = scmp.eq.s32.totalorder %s21, 1
      %p333 = scmp.ne.s32.totalorder %s328, %s330
      %p334 = scmp.eq.s32.totalorder %s21, 0
      %p335 = por %p333, %p334
      %p336 = scmp.ne.s32.totalorder %s328, %s330
      %p337 = scmp.eq.s32.totalorder %s26, 1
      %p338 = por %p336, %p337
      %p339 = scmp.ne.s32.totalorder %s330, %s331
      %p340 = scmp.eq.s32.totalorder %s26, 0
      %p341 = por %p339, %p340
      %p342 = scmp.ne.s32.totalorder %s330, %s331
      %p343 = scmp.eq.s32.totalorder %s27, 1
      %p344 = por %p342, %p343
      %p346 = scmp.ne.s32.totalorder %s331, %s345
      %p347 = scmp.eq.s32.totalorder %s27, 0
      %p348 = por %p346, %p347
      %s349 = ssub.s32 %s21, %s28
      %p350 = scmp.eq.s32.totalorder %s349, 0
      %s352 = sadd.s32 %s351, 1
      %s353 = scalar_select %p350, %s351, %s352
      %p356 = pneg %p350
      %p357 = scmp.eq.s32.totalorder %s21, 1
      %p358 = por %p356, %p357
      %p359 = scmp.ne.s32.totalorder %s351, %s354
      %p360 = scmp.eq.s32.totalorder %s21, 0
      %p361 = por %p359, %p360
      %p362 = scmp.ne.s32.totalorder %s351, %s354
      %p363 = scmp.eq.s32.totalorder %s26, 1
      %p364 = por %p362, %p363
      %p365 = scmp.ne.s32.totalorder %s354, %s355
      %p366 = scmp.eq.s32.totalorder %s26, 0
      %p367 = por %p365, %p366
      %p368 = scmp.ne.s32.totalorder %s354, %s355
      %p369 = scmp.eq.s32.totalorder %s27, 1
      %p370 = por %p368, %p369
      %p372 = scmp.ne.s32.totalorder %s355, %s371
      %p373 = scmp.eq.s32.totalorder %s27, 0
      %p374 = por %p372, %p373
      %p375 = scmp.le.s32.totalorder 1, %s21
      %p376 = scmp.lt.s32.totalorder %s21, 3
      %p377 = pnand %p375, %p376
      %p378 = pneg %p377
      // Predicated region
      $region9: #{lstm_classifier_forward.1} parent=5 // pred_check
        _
      $region10: #{lstm_classifier_forward.1} parent=5 // pred_check_branch
        %380 = sbr.rel (%p377) target = $region12
      $region11: #{lstm_classifier_forward.1} parent=5 // pred_region
        %s381 = ssub.s32 %s21, 1
        // Predicated region
        $region13: #{lstm_classifier_forward.1} parent=11 // pred_check
          %p382 = pneg %p68
        $region14: #{lstm_classifier_forward.1} parent=11 // pred_check_branch
          %384 = sbr.rel (%p382) target = $region16
        $region15: #{lstm_classifier_forward.1} parent=11 // pred_region
          _
        $region16: #{lstm_classifier_forward.1} parent=11 // pred_fallthru
          _
        // Predicated region
        $region17: #{lstm_classifier_forward.1} parent=11 // pred_check
          %p385 = pneg %p89
        $region18: #{lstm_classifier_forward.1} parent=11 // pred_check_branch
          %387 = sbr.rel (%p385) target = $region20
        $region19: #{lstm_classifier_forward.1} parent=11 // pred_region
          _
        $region20: #{lstm_classifier_forward.1} parent=11 // pred_fallthru
          _
        // Predicated region
        $region21: #{lstm_classifier_forward.1} parent=11 // pred_check
          %p388 = pneg %p110
        $region22: #{lstm_classifier_forward.1} parent=11 // pred_check_branch
          %390 = sbr.rel (%p388) target = $region24
        $region23: #{lstm_classifier_forward.1} parent=11 // pred_region
          _
        $region24: #{lstm_classifier_forward.1} parent=11 // pred_fallthru
          _
        // Predicated region
        $region25: #{lstm_classifier_forward.1} parent=11 // pred_check
          %p391 = pneg %p131
        $region26: #{lstm_classifier_forward.1} parent=11 // pred_check_branch
          %393 = sbr.rel (%p391) target = $region28
        $region27: #{lstm_classifier_forward.1} parent=11 // pred_region
          _
        $region28: #{lstm_classifier_forward.1} parent=11 // pred_fallthru
          _
        // Predicated region
        $region29: #{lstm_classifier_forward.1} parent=11 // pred_check
          %p394 = pneg %p152
        $region30: #{lstm_classifier_forward.1} parent=11 // pred_check_branch
          %396 = sbr.rel (%p394) target = $region32
        $region31: #{lstm_classifier_forward.1} parent=11 // pred_region
          _
        $region32: #{lstm_classifier_forward.1} parent=11 // pred_fallthru
          _
        // Predicated region
        $region33: #{lstm_classifier_forward.1} parent=11 // pred_check
          %p397 = pneg %p173
        $region34: #{lstm_classifier_forward.1} parent=11 // pred_check_branch
          %399 = sbr.rel (%p397) target = $region36
        $region35: #{lstm_classifier_forward.1} parent=11 // pred_region
          _
        $region36: #{lstm_classifier_forward.1} parent=11 // pred_fallthru
          _
        // Predicated region
        $region37: #{lstm_classifier_forward.1} parent=11 // pred_check
          %p400 = pneg %p194
        $region38: #{lstm_classifier_forward.1} parent=11 // pred_check_branch
          %402 = sbr.rel (%p400) target = $region40
        $region39: #{lstm_classifier_forward.1} parent=11 // pred_region
          _
        $region40: #{lstm_classifier_forward.1} parent=11 // pred_fallthru
          _
        // Predicated region
        $region41: #{lstm_classifier_forward.1} parent=11 // pred_check
          %p403 = pneg %p215
        $region42: #{lstm_classifier_forward.1} parent=11 // pred_check_branch
          %405 = sbr.rel (%p403) target = $region44
        $region43: #{lstm_classifier_forward.1} parent=11 // pred_region
          _
        $region44: #{lstm_classifier_forward.1} parent=11 // pred_fallthru
          _
        // Predicated region
        $region45: #{lstm_classifier_forward.1} parent=11 // pred_check
          %p406 = pneg %p236
        $region46: #{lstm_classifier_forward.1} parent=11 // pred_check_branch
          %408 = sbr.rel (%p406) target = $region48
        $region47: #{lstm_classifier_forward.1} parent=11 // pred_region
          _
        $region48: #{lstm_classifier_forward.1} parent=11 // pred_fallthru
          _
        // Predicated region
        $region49: #{lstm_classifier_forward.1} parent=11 // pred_check
          %p409 = pneg %p257
        $region50: #{lstm_classifier_forward.1} parent=11 // pred_check_branch
          %411 = sbr.rel (%p409) target = $region52
        $region51: #{lstm_classifier_forward.1} parent=11 // pred_region
          _
        $region52: #{lstm_classifier_forward.1} parent=11 // pred_fallthru
          _
        // Predicated region
        $region53: #{lstm_classifier_forward.1} parent=11 // pred_check
          %p412 = pneg %p278
        $region54: #{lstm_classifier_forward.1} parent=11 // pred_check_branch
          %414 = sbr.rel (%p412) target = $region56
        $region55: #{lstm_classifier_forward.1} parent=11 // pred_region
          _
        $region56: #{lstm_classifier_forward.1} parent=11 // pred_fallthru
          _
        // Predicated region
        $region57: #{lstm_classifier_forward.1} parent=11 // pred_check
          %p415 = pneg %p299
        $region58: #{lstm_classifier_forward.1} parent=11 // pred_check_branch
          %417 = sbr.rel (%p415) target = $region60
        $region59: #{lstm_classifier_forward.1} parent=11 // pred_region
          _
        $region60: #{lstm_classifier_forward.1} parent=11 // pred_fallthru
          _
        // Predicated region
        $region61: #{lstm_classifier_forward.1} parent=11 // pred_check
          %p418 = pneg %p320
        $region62: #{lstm_classifier_forward.1} parent=11 // pred_check_branch
          %420 = sbr.rel (%p418) target = $region64
        $region63: #{lstm_classifier_forward.1} parent=11 // pred_region
          _
        $region64: #{lstm_classifier_forward.1} parent=11 // pred_fallthru
          _
        // Predicated region
        $region65: #{lstm_classifier_forward.1} parent=11 // pred_check
          %p421 = pneg %p341
        $region66: #{lstm_classifier_forward.1} parent=11 // pred_check_branch
          %423 = sbr.rel (%p421) target = $region68
        $region67: #{lstm_classifier_forward.1} parent=11 // pred_region
          _
        $region68: #{lstm_classifier_forward.1} parent=11 // pred_fallthru
          _
      $region12: #{lstm_classifier_forward.1} parent=5 // pred_fallthru
        _
      %p424 = scmp.lt.s32.totalorder %s21, 2
      // Predicated region
      $region69: #{lstm_classifier_forward.1} parent=5 // pred_check
        %p425 = pneg %p424
      $region70: #{lstm_classifier_forward.1} parent=5 // pred_check_branch
        %427 = sbr.rel (%p425) target = $region72
      $region71: #{lstm_classifier_forward.1} parent=5 // pred_region
        // Predicated region
        $region73: #{lstm_classifier_forward.1} parent=71 // pred_check
          %p428 = pneg %p41
        $region74: #{lstm_classifier_forward.1} parent=71 // pred_check_branch
          %430 = sbr.rel (%p428) target = $region76
        $region75: #{lstm_classifier_forward.1} parent=71 // pred_region
          %s431 = sand.u32 %s31, 1
          %s432 = sand.u32 %s31, 1
          %s433 = smul.addr %s432, 64
          %s434 = scalar_lea.vmem [#allocation4], %s433
          %s435 = smul.u32 2, %s21
          %s436 = smul.addr %s435, 4
          %s437 = scalar_lea.vmem %s0, %s436
          // Predicated region
          $region77: #{lstm_classifier_forward.1} parent=75 // pred_check
            _
          $region78: #{lstm_classifier_forward.1} parent=75 // pred_check_branch
            %439 = sbr.rel (0) target = $region80
          $region79: #{lstm_classifier_forward.1} parent=75 // pred_region
            // Predicated region
            $region81: #{lstm_classifier_forward.1} parent=79 // pred_check
              _
            $region82: #{lstm_classifier_forward.1} parent=79 // pred_check_branch
              %441 = sbr.rel target = $region84
            $region83: #{lstm_classifier_forward.1} parent=79 // pred_region
              // Predicated region
              $region96: #{lstm_classifier_forward.1} parent=83 // pred_check
                _
              $region97: #{lstm_classifier_forward.1} parent=83 // pred_check_branch
                %486 = sbr.rel (0) target = $region99
              $region98: #{lstm_classifier_forward.1} parent=83 // pred_region
                loop: start=0, step=1, limit=1
                $region100: #{lstm_classifier_forward.1} parent=98 // loop_pre_header
                  _
                $region101: #{lstm_classifier_forward.1} parent=98 // loop_header
                  %s488 = sphi 0, %s492
                  %p489 = scmp.ge.s32.totalorder %s488, 1
                  %s493 = sphi %s437, %s437
                  %s494 = sphi %s434, %s434
                $region102: #{lstm_classifier_forward.1} parent=98 // loop_header_branch
                  %491 = sbr.rel (%p489) target = $region106
                $region103: #{lstm_classifier_forward.1} parent=98 // loop_body
                  _
                $region104: #{lstm_classifier_forward.1} parent=98 // loop_footer
                  %s492 = sadd.s32 1, %s488
                $region105: #{lstm_classifier_forward.1} parent=98 // loop_footer_branch
                  %487 = sbr.rel target = $region101
                $region106: #{lstm_classifier_forward.1} parent=98 // loop_exit
                  _
                loop: start=0, step=1, limit=1
                $region107: #{lstm_classifier_forward.1} parent=98 // loop_pre_header
                  _
                $region108: #{lstm_classifier_forward.1} parent=98 // loop_header
                  %s497 = sphi 0, %s501
                  %p498 = scmp.ge.s32.totalorder %s497, 1
                  %s502 = sphi %s437, %s437
                  %s503 = sphi %s434, %s434
                $region109: #{lstm_classifier_forward.1} parent=98 // loop_header_branch
                  %500 = sbr.rel (%p498) target = $region113
                $region110: #{lstm_classifier_forward.1} parent=98 // loop_body
                  %v504 = vld [vmem:[%s502] sm:$0xf]
                  %505 = vst [vmem:[%s503] sm:$0xf] %v504
                  %v506 = vld [vmem:[%s502 + $0x4] sm:$0xf]
                  %507 = vst [vmem:[%s503 + $0x4] sm:$0xf] %v506
                  %v508 = vld [vmem:[%s502 + $0x10] sm:$0xf]
                  %509 = vst [vmem:[%s503 + $0x8] sm:$0xf] %v508
                  %v510 = vld [vmem:[%s502 + $0x14] sm:$0xf]
                  %511 = vst [vmem:[%s503 + $0xc] sm:$0xf] %v510
                  %v512 = vld [vmem:[%s502 + $0x20] sm:$0xf]
                  %513 = vst [vmem:[%s503 + $0x10] sm:$0xf] %v512
                  %v514 = vld [vmem:[%s502 + $0x24] sm:$0xf]
                  %515 = vst [vmem:[%s503 + $0x14] sm:$0xf] %v514
                  %v516 = vld [vmem:[%s502 + $0x30] sm:$0xf]
                  %517 = vst [vmem:[%s503 + $0x18] sm:$0xf] %v516
                  %v518 = vld [vmem:[%s502 + $0x34] sm:$0xf]
                  %519 = vst [vmem:[%s503 + $0x1c] sm:$0xf] %v518
                  %v520 = vld [vmem:[%s502 + $0x40] sm:$0xf]
                  %521 = vst [vmem:[%s503 + $0x20] sm:$0xf] %v520
                  %v522 = vld [vmem:[%s502 + $0x44] sm:$0xf]
                  %523 = vst [vmem:[%s503 + $0x24] sm:$0xf] %v522
                  %v524 = vld [vmem:[%s502 + $0x50] sm:$0xf]
                  %525 = vst [vmem:[%s503 + $0x28] sm:$0xf] %v524
                  %v526 = vld [vmem:[%s502 + $0x54] sm:$0xf]
                  %527 = vst [vmem:[%s503 + $0x2c] sm:$0xf] %v526
                  %v528 = vld [vmem:[%s502 + $0x60] sm:$0xf]
                  %529 = vst [vmem:[%s503 + $0x30] sm:$0xf] %v528
                  %v530 = vld [vmem:[%s502 + $0x64] sm:$0xf]
                  %531 = vst [vmem:[%s503 + $0x34] sm:$0xf] %v530
                  %v532 = vld [vmem:[%s502 + $0x70] sm:$0xf]
                  %533 = vst [vmem:[%s503 + $0x38] sm:$0xf] %v532
                  %v534 = vld [vmem:[%s502 + $0x74] sm:$0xf]
                  %535 = vst [vmem:[%s503 + $0x3c] sm:$0xf] %v534
                $region111: #{lstm_classifier_forward.1} parent=98 // loop_footer
                  %s501 = sadd.s32 1, %s497
                $region112: #{lstm_classifier_forward.1} parent=98 // loop_footer_branch
                  %496 = sbr.rel target = $region108
                $region113: #{lstm_classifier_forward.1} parent=98 // loop_exit
                  _
              $region99: #{lstm_classifier_forward.1} parent=83 // pred_fallthru
                _
            $region84: #{lstm_classifier_forward.1} parent=79 // pred_fallthru
              _
            // Predicated region
            $region85: #{lstm_classifier_forward.1} parent=79 // pred_check
              _
            $region86: #{lstm_classifier_forward.1} parent=79 // pred_check_branch
              %443 = sbr.rel (0) target = $region88
            $region87: #{lstm_classifier_forward.1} parent=79 // pred_region
              loop: start=0, step=1, limit=1
              $region89: #{lstm_classifier_forward.1} parent=87 // loop_pre_header
                _
              $region90: #{lstm_classifier_forward.1} parent=87 // loop_header
                %s446 = sphi 0, %s450
                %p447 = scmp.ge.s32.totalorder %s446, 1
                %s451 = sphi %s437, %s437
                %s452 = sphi %s434, %s434
              $region91: #{lstm_classifier_forward.1} parent=87 // loop_header_branch
                %449 = sbr.rel (%p447) target = $region95
              $region92: #{lstm_classifier_forward.1} parent=87 // loop_body
                %v453 = vld [vmem:[%s451] sm:$0xf]
                %454 = vst [vmem:[%s452] sm:$0xf] %v453
                %v455 = vld [vmem:[%s451 + $0x4] sm:$0xf]
                %456 = vst [vmem:[%s452 + $0x4] sm:$0xf] %v455
                %v457 = vld [vmem:[%s451 + $0x10] sm:$0xf]
                %458 = vst [vmem:[%s452 + $0x8] sm:$0xf] %v457
                %v459 = vld [vmem:[%s451 + $0x14] sm:$0xf]
                %460 = vst [vmem:[%s452 + $0xc] sm:$0xf] %v459
                %v461 = vld [vmem:[%s451 + $0x20] sm:$0xf]
                %462 = vst [vmem:[%s452 + $0x10] sm:$0xf] %v461
                %v463 = vld [vmem:[%s451 + $0x24] sm:$0xf]
                %464 = vst [vmem:[%s452 + $0x14] sm:$0xf] %v463
                %v465 = vld [vmem:[%s451 + $0x30] sm:$0xf]
                %466 = vst [vmem:[%s452 + $0x18] sm:$0xf] %v465
                %v467 = vld [vmem:[%s451 + $0x34] sm:$0xf]
                %468 = vst [vmem:[%s452 + $0x1c] sm:$0xf] %v467
                %v469 = vld [vmem:[%s451 + $0x40] sm:$0xf]
                %470 = vst [vmem:[%s452 + $0x20] sm:$0xf] %v469
                %v471 = vld [vmem:[%s451 + $0x44] sm:$0xf]
                %472 = vst [vmem:[%s452 + $0x24] sm:$0xf] %v471
                %v473 = vld [vmem:[%s451 + $0x50] sm:$0xf]
                %474 = vst [vmem:[%s452 + $0x28] sm:$0xf] %v473
                %v475 = vld [vmem:[%s451 + $0x54] sm:$0xf]
                %476 = vst [vmem:[%s452 + $0x2c] sm:$0xf] %v475
                %v477 = vld [vmem:[%s451 + $0x60] sm:$0xf]
                %478 = vst [vmem:[%s452 + $0x30] sm:$0xf] %v477
                %v479 = vld [vmem:[%s451 + $0x64] sm:$0xf]
                %480 = vst [vmem:[%s452 + $0x34] sm:$0xf] %v479
                %v481 = vld [vmem:[%s451 + $0x70] sm:$0xf]
                %482 = vst [vmem:[%s452 + $0x38] sm:$0xf] %v481
                %v483 = vld [vmem:[%s451 + $0x74] sm:$0xf]
                %484 = vst [vmem:[%s452 + $0x3c] sm:$0xf] %v483
              $region93: #{lstm_classifier_forward.1} parent=87 // loop_footer
                %s450 = sadd.s32 1, %s446
              $region94: #{lstm_classifier_forward.1} parent=87 // loop_footer_branch
                %445 = sbr.rel target = $region90
              $region95: #{lstm_classifier_forward.1} parent=87 // loop_exit
                _
            $region88: #{lstm_classifier_forward.1} parent=79 // pred_fallthru
              _
          $region80: #{lstm_classifier_forward.1} parent=75 // pred_fallthru
            _
          %536 = vnop
        $region76: #{lstm_classifier_forward.1} parent=71 // pred_fallthru
          _
      $region72: #{lstm_classifier_forward.1} parent=5 // pred_fallthru
        _
      %p537 = scmp.le.s32.totalorder 1, %s21
      %p538 = scmp.lt.s32.totalorder %s21, 3
      %p539 = pnand %p537, %p538
      %p540 = pneg %p539
      // Predicated region
      $region114: #{lstm_classifier_forward.1} parent=5 // pred_check
        _
      $region115: #{lstm_classifier_forward.1} parent=5 // pred_check_branch
        %542 = sbr.rel (%p539) target = $region117
      $region116: #{lstm_classifier_forward.1} parent=5 // pred_region
        %s543 = ssub.s32 %s21, 1
        %s544 = sand.u32 %s34, 1
        %s545 = sand.u32 %s34, 1
        %s546 = smul.addr %s545, 64
        %s547 = scalar_lea.vmem [#allocation4], %s546
        // Predicated region
        $region118: #{lstm_classifier_forward.1} parent=116 // pred_check
          %p548 = pneg %p47
        $region119: #{lstm_classifier_forward.1} parent=116 // pred_check_branch
          %550 = sbr.rel (%p548) target = $region121
        $region120: #{lstm_classifier_forward.1} parent=116 // pred_region
          _
        $region121: #{lstm_classifier_forward.1} parent=116 // pred_fallthru
          _
        %s551 = sand.u32 %s34, 1
        %s552 = sand.u32 %s34, 1
        %s553 = smul.addr %s552, 64
        %s554 = scalar_lea.vmem [#allocation4], %s553
        %p555 = pneg %p47
        %p556 = pneg %p44
        %p557 = pneg %p68
        %p558 = pneg %p65
        %p559 = pneg %p89
        %p560 = pneg %p86
        %p561 = pneg %p110
        %p562 = pneg %p107
        %p563 = pneg %p131
        %p564 = pneg %p128
        %p565 = pneg %p152
        %p566 = pneg %p149
        %p567 = pneg %p173
        %p568 = pneg %p170
        %p569 = pneg %p194
        %p570 = pneg %p191
        %p571 = pneg %p215
        %p572 = pneg %p212
        %p573 = pneg %p236
        %p574 = pneg %p233
        %p575 = pneg %p257
        %p576 = pneg %p254
        %p577 = pneg %p278
        %p578 = pneg %p275
        %p579 = pneg %p299
        %p580 = pneg %p296
        %p581 = pneg %p320
        %p582 = pneg %p317
        %p583 = pneg %p341
        %p584 = pneg %p338
        %p585 = pneg %p367
        %p586 = pneg %p364
        %s587 = smul.u32 2, %s26
        %p588 = scmp.lt.s32.totalorder %s587, 3
        %s589 = scalar_select %p588, %s587, 3
        %s590 = smul.addr %s589, 8
        %s591 = scalar_lea.vmem %s15, %s590
        %s592 = smul.u32 2, %s26
        %s593 = smul.u32 2, %s26
        %p594 = scmp.lt.s32.totalorder %s593, 3
        %s595 = scalar_select %p594, %s593, 3
        %s596 = smul.addr %s595, 8
        %s597 = scalar_lea.vmem %s15, %s596
        %s598 = smul.u32 2, %s26
        %v600 = vld [vmem:[%s1] sm:$0xff]
        %v601 = vld [vmem:[%s1 + $0x8] sm:$0xff]
        %v602 = vld [vmem:[%s1 + $0x10] sm:$0xff]
        %v603 = vld [vmem:[%s1 + $0x18] sm:$0xff]
        %v604 = vld [vmem:[%s2] sm:$0xff]
        %v605 = vld [vmem:[%s2 + $0x8] sm:$0xff]
        %v606 = vld [vmem:[%s2 + $0x10] sm:$0xff]
        %v607 = vld [vmem:[%s2 + $0x18] sm:$0xff]
        %v608 = vld [vmem:[%s2 + $0x20] sm:$0xff]
        %v609 = vld [vmem:[%s2 + $0x28] sm:$0xff]
        %v610 = vld [vmem:[%s2 + $0x30] sm:$0xff]
        %v611 = vld [vmem:[%s2 + $0x38] sm:$0xff]
        %v612 = vld [vmem:[%s2 + $0x40] sm:$0xff]
        %v613 = vld [vmem:[%s2 + $0x48] sm:$0xff]
        %v614 = vld [vmem:[%s2 + $0x50] sm:$0xff]
        %v615 = vld [vmem:[%s2 + $0x58] sm:$0xff]
        %v616 = vld [vmem:[%s2 + $0x60] sm:$0xff]
        %v617 = vld [vmem:[%s2 + $0x68] sm:$0xff]
        %v618 = vld [vmem:[%s2 + $0x70] sm:$0xff]
        %v619 = vld [vmem:[%s2 + $0x78] sm:$0xff]
        %v620 = vld [vmem:[%s2 + $0x80] sm:$0xff]
        %v621 = vld [vmem:[%s2 + $0x88] sm:$0xff]
        %v622 = vld [vmem:[%s2 + $0x90] sm:$0xff]
        %v623 = vld [vmem:[%s2 + $0x98] sm:$0xff]
        %v624 = vld [vmem:[%s2 + $0xa0] sm:$0xff]
        %v625 = vld [vmem:[%s2 + $0xa8] sm:$0xff]
        %v626 = vld [vmem:[%s2 + $0xb0] sm:$0xff]
        %v627 = vld [vmem:[%s2 + $0xb8] sm:$0xff]
        %v628 = vld [vmem:[%s2 + $0xc0] sm:$0xff]
        %v629 = vld [vmem:[%s2 + $0xc8] sm:$0xff]
        %v630 = vld [vmem:[%s2 + $0xd0] sm:$0xff]
        %v631 = vld [vmem:[%s2 + $0xd8] sm:$0xff]
        %v632 = vld [vmem:[%s2 + $0xe0] sm:$0xff]
        %v633 = vld [vmem:[%s2 + $0xe8] sm:$0xff]
        %v634 = vld [vmem:[%s2 + $0xf0] sm:$0xff]
        %v635 = vld [vmem:[%s2 + $0xf8] sm:$0xff]
        %v636 = vld [vmem:[%s3] sm:$0xf]
        %v637 = vld [vmem:[%s547] sm:$0xf]
        %v638 = vld [vmem:[%s547 + $0x4] sm:$0xf]
        %v639 = vld [vmem:[%s547 + $0x8] sm:$0xf]
        %v640 = vld [vmem:[%s547 + $0xc] sm:$0xf]
        %v641 = vld [vmem:[%s547 + $0x10] sm:$0xf]
        %v642 = vld [vmem:[%s547 + $0x14] sm:$0xf]
        %v643 = vld [vmem:[%s547 + $0x18] sm:$0xf]
        %v644 = vld [vmem:[%s547 + $0x1c] sm:$0xf]
        %v645 = vld [vmem:[%s547 + $0x20] sm:$0xf]
        %v646 = vld [vmem:[%s547 + $0x24] sm:$0xf]
        %v647 = vld [vmem:[%s547 + $0x28] sm:$0xf]
        %v648 = vld [vmem:[%s547 + $0x2c] sm:$0xf]
        %v649 = vld [vmem:[%s547 + $0x30] sm:$0xf]
        %v650 = vld [vmem:[%s547 + $0x34] sm:$0xf]
        %v651 = vld [vmem:[%s547 + $0x38] sm:$0xf]
        %v652 = vld [vmem:[%s547 + $0x3c] sm:$0xf]
        %v654 = vlaneseq
        %v655 = vshrl.u32 %v654, 7
        %v656 = vsub.s32 0, %v655
        %v657 = vrot.slane %v636, %v656
        %v658 = vlaneseq
        %v659 = vshrl.u32 %v658, 7
        %v660 = vsub.s32 1, %v659
        %v661 = vrot.slane %v636, %v660
        %v662 = vlaneseq
        %v663 = vshrl.u32 %v662, 7
        %v664 = vsub.s32 2, %v663
        %v665 = vrot.slane %v636, %v664
        %v666 = vlaneseq
        %v667 = vshrl.u32 %v666, 7
        %v668 = vsub.s32 3, %v667
        %v669 = vrot.slane %v636, %v668
        %v690 = vunpack.c.l.b16 %v637
        %v691 = vunpack.c.l.b16 %v638
        %v692 = vunpack.c.l.b16 %v639
        %v693 = vunpack.c.l.b16 %v640
        %v694 = vunpack.c.l.b16 %v641
        %v695 = vunpack.c.l.b16 %v642
        %v696 = vunpack.c.l.b16 %v643
        %v697 = vunpack.c.l.b16 %v644
        %v698 = vunpack.c.l.b16 %v645
        %v699 = vunpack.c.l.b16 %v646
        %v700 = vunpack.c.l.b16 %v647
        %v701 = vunpack.c.l.b16 %v648
        %v702 = vunpack.c.l.b16 %v649
        %v703 = vunpack.c.l.b16 %v650
        %v704 = vunpack.c.l.b16 %v651
        %v705 = vunpack.c.l.b16 %v652
        %v706 = vpack.c.b16 %v691, %v690
        %v707 = vpack.c.b16 %v693, %v692
        %v708 = vpack.c.b16 %v695, %v694
        %v709 = vpack.c.b16 %v697, %v696
        %v710 = vpack.c.b16 %v699, %v698
        %v711 = vpack.c.b16 %v701, %v700
        %v712 = vpack.c.b16 %v703, %v702
        %v713 = vpack.c.b16 %v705, %v704
        %v718 = vunpack.c.l.b16 %v600
        %v719 = vunpack.c.h.b16 %v600
        %v720 = vunpack.c.l.b16 %v601
        %v721 = vunpack.c.h.b16 %v601
        %v722 = vunpack.c.l.b16 %v602
        %v723 = vunpack.c.h.b16 %v602
        %v724 = vunpack.c.l.b16 %v603
        %v725 = vunpack.c.h.b16 %v603
        %v726 = vpack.c.b16 %v722, %v718
        %v727 = vpack.c.b16 %v723, %v719
        %v728 = vpack.c.b16 %v724, %v720
        %v729 = vpack.c.b16 %v725, %v721
        %vm734 = vcmask 130048
        %v736 = vsel %vm734, %v706, 0
        %v739 = vsel %vm734, %v707, 0
        %v742 = vsel %vm734, %v708, 0
        %v745 = vsel %vm734, %v709, 0
        %v748 = vsel %vm734, %v710, 0
        %v751 = vsel %vm734, %v711, 0
        %v754 = vsel %vm734, %v712, 0
        %v757 = vsel %vm734, %v713, 0
        %759 = vmatprep.subr.bf16.mxu0 %v727
        %760 = vmatpush1.bf16.msra.mxu0 %v726
        %761 = vmatprep.subr.bf16.mxu0 0
        %762 = vmatpush1.bf16.msra.mxu0 0
        %763 = vmatprep.subr.bf16.mxu0 0
        %764 = vmatpush1.bf16.msra.mxu0 0
        %765 = vmatprep.subr.bf16.mxu0 0
        %766 = vmatpush1.bf16.msra.mxu0 0
        %767 = vmatprep.subr.bf16.mxu0 0
        %768 = vmatpush1.bf16.msra.mxu0 0
        %769 = vmatprep.subr.bf16.mxu0 0
        %770 = vmatpush1.bf16.msra.mxu0 0
        %771 = vmatprep.subr.bf16.mxu0 0
        %772 = vmatpush1.bf16.msra.mxu0 0
        %773 = vmatprep.subr.bf16.mxu0 0
        %774 = vmatpush1.bf16.msra.mxu0 0
        %775 = vmatprep.subr.bf16.mxu0 0
        %776 = vmatpush1.bf16.msra.mxu0 0
        %777 = vmatprep.subr.bf16.mxu0 0
        %778 = vmatpush1.bf16.msra.mxu0 0
        %779 = vmatprep.subr.bf16.mxu0 0
        %780 = vmatpush1.bf16.msra.mxu0 0
        %781 = vmatprep.subr.bf16.mxu0 0
        %782 = vmatpush1.bf16.msra.mxu0 0
        %783 = vmatprep.subr.bf16.mxu0 0
        %784 = vmatpush1.bf16.msra.mxu0 0
        %785 = vmatprep.subr.bf16.mxu0 0
        %786 = vmatpush1.bf16.msra.mxu0 0
        %787 = vmatprep.subr.bf16.mxu0 0
        %788 = vmatpush1.bf16.msra.mxu0 0
        %789 = vmatprep.subr.bf16.mxu0 0
        %790 = vmatpush1.bf16.msra.mxu0 0
        %791 = vmatprep.mubr.bf16.mxu0 0
        %792 = vmatmul.mubr.bf16.gmra.mrb[0].mxu0 %v736
        %v793 = vpop.f32.mrb[0].mxu0
        %v794 = vadd.f32 %v657, %v793
        %v795 = vpop.f32.mrb[0].mxu0
        %v796 = vadd.f32 %v661, %v795
        %v797 = vpop.f32.mrb[0].mxu0
        %v798 = vadd.f32 %v657, %v797
        %v799 = vpop.f32.mrb[0].mxu0
        %v800 = vadd.f32 %v661, %v799
        %801 = vmatprep.mubr.bf16.mxu0 0
        %802 = vmatmul.mubr.bf16.gmra.mrb[0].mxu0 %v739
        %v803 = vpop.f32.mrb[0].mxu0
        %v804 = vadd.f32 %v657, %v803
        %v805 = vpop.f32.mrb[0].mxu0
        %v806 = vadd.f32 %v661, %v805
        %v807 = vpop.f32.mrb[0].mxu0
        %v808 = vadd.f32 %v657, %v807
        %v809 = vpop.f32.mrb[0].mxu0
        %v810 = vadd.f32 %v661, %v809
        %811 = vmatprep.mubr.bf16.mxu0 0
        %812 = vmatmul.mubr.bf16.gmra.mrb[0].mxu0 %v742
        %v813 = vpop.f32.mrb[0].mxu0
        %v814 = vadd.f32 %v657, %v813
        %v815 = vpop.f32.mrb[0].mxu0
        %v816 = vadd.f32 %v661, %v815
        %v817 = vpop.f32.mrb[0].mxu0
        %v818 = vadd.f32 %v657, %v817
        %v819 = vpop.f32.mrb[0].mxu0
        %v820 = vadd.f32 %v661, %v819
        %821 = vmatprep.mubr.bf16.mxu0 0
        %822 = vmatmul.mubr.bf16.gmra.mrb[0].mxu0 %v745
        %v823 = vpop.f32.mrb[0].mxu0
        %v824 = vadd.f32 %v657, %v823
        %v825 = vpop.f32.mrb[0].mxu0
        %v826 = vadd.f32 %v661, %v825
        %v827 = vpop.f32.mrb[0].mxu0
        %v828 = vadd.f32 %v657, %v827
        %v829 = vpop.f32.mrb[0].mxu0
        %v830 = vadd.f32 %v661, %v829
        %831 = vmatprep.mubr.bf16.mxu0 0
        %832 = vmatmul.mubr.bf16.gmra.mrb[0].mxu0 %v748
        %v833 = vpop.f32.mrb[0].mxu0
        %v834 = vadd.f32 %v657, %v833
        %v835 = vpop.f32.mrb[0].mxu0
        %v836 = vadd.f32 %v661, %v835
        %v837 = vpop.f32.mrb[0].mxu0
        %v838 = vadd.f32 %v657, %v837
        %v839 = vpop.f32.mrb[0].mxu0
        %v840 = vadd.f32 %v661, %v839
        %841 = vmatprep.mubr.bf16.mxu0 0
        %842 = vmatmul.mubr.bf16.gmra.mrb[0].mxu0 %v751
        %v843 = vpop.f32.mrb[0].mxu0
        %v844 = vadd.f32 %v657, %v843
        %v845 = vpop.f32.mrb[0].mxu0
        %v846 = vadd.f32 %v661, %v845
        %v847 = vpop.f32.mrb[0].mxu0
        %v848 = vadd.f32 %v657, %v847
        %v849 = vpop.f32.mrb[0].mxu0
        %v850 = vadd.f32 %v661, %v849
        %851 = vmatprep.mubr.bf16.mxu0 0
        %852 = vmatmul.mubr.bf16.gmra.mrb[0].mxu0 %v754
        %v853 = vpop.f32.mrb[0].mxu0
        %v854 = vadd.f32 %v657, %v853
        %v855 = vpop.f32.mrb[0].mxu0
        %v856 = vadd.f32 %v661, %v855
        %v857 = vpop.f32.mrb[0].mxu0
        %v858 = vadd.f32 %v657, %v857
        %v859 = vpop.f32.mrb[0].mxu0
        %v860 = vadd.f32 %v661, %v859
        %861 = vmatprep.mubr.bf16.mxu0 0
        %862 = vmatmul.mubr.bf16.gmra.mrb[0].mxu0 %v757
        %v863 = vpop.f32.mrb[0].mxu0
        %v864 = vadd.f32 %v657, %v863
        %v865 = vpop.f32.mrb[0].mxu0
        %v866 = vadd.f32 %v661, %v865
        %v867 = vpop.f32.mrb[0].mxu0
        %v868 = vadd.f32 %v657, %v867
        %v869 = vpop.f32.mrb[0].mxu0
        %v870 = vadd.f32 %v661, %v869
        %871 = vdwg.mxu0
        %872 = vmatprep.subr.bf16.mxu0 %v729
        %873 = vmatpush1.bf16.msra.mxu0 %v728
        %874 = vmatprep.subr.bf16.mxu0 0
        %875 = vmatpush1.bf16.msra.mxu0 0
        %876 = vmatprep.subr.bf16.mxu0 0
        %877 = vmatpush1.bf16.msra.mxu0 0
        %878 = vmatprep.subr.bf16.mxu0 0
        %879 = vmatpush1.bf16.msra.mxu0 0
        %880 = vmatprep.subr.bf16.mxu0 0
        %881 = vmatpush1.bf16.msra.mxu0 0
        %882 = vmatprep.subr.bf16.mxu0 0
        %883 = vmatpush1.bf16.msra.mxu0 0
        %884 = vmatprep.subr.bf16.mxu0 0
        %885 = vmatpush1.bf16.msra.mxu0 0
        %886 = vmatprep.subr.bf16.mxu0 0
        %887 = vmatpush1.bf16.msra.mxu0 0
        %888 = vmatprep.subr.bf16.mxu0 0
        %889 = vmatpush1.bf16.msra.mxu0 0
        %890 = vmatprep.subr.bf16.mxu0 0
        %891 = vmatpush1.bf16.msra.mxu0 0
        %892 = vmatprep.subr.bf16.mxu0 0
        %893 = vmatpush1.bf16.msra.mxu0 0
        %894 = vmatprep.subr.bf16.mxu0 0
        %895 = vmatpush1.bf16.msra.mxu0 0
        %896 = vmatprep.subr.bf16.mxu0 0
        %897 = vmatpush1.bf16.msra.mxu0 0
        %898 = vmatprep.subr.bf16.mxu0 0
        %899 = vmatpush1.bf16.msra.mxu0 0
        %900 = vmatprep.subr.bf16.mxu0 0
        %901 = vmatpush1.bf16.msra.mxu0 0
        %902 = vmatprep.subr.bf16.mxu0 0
        %903 = vmatpush1.bf16.msra.mxu0 0
        %904 = vmatprep.mubr.bf16.mxu0 0
        %905 = vmatmul.mubr.bf16.gmra.mrb[0].mxu0 %v736
        %v906 = vpop.f32.mrb[0].mxu0
        %v907 = vadd.f32 %v665, %v906
        %v908 = vpop.f32.mrb[0].mxu0
        %v909 = vadd.f32 %v669, %v908
        %v910 = vpop.f32.mrb[0].mxu0
        %v911 = vadd.f32 %v665, %v910
        %v912 = vpop.f32.mrb[0].mxu0
        %v913 = vadd.f32 %v669, %v912
        %914 = vmatprep.mubr.bf16.mxu0 0
        %915 = vmatmul.mubr.bf16.gmra.mrb[0].mxu0 %v739
        %v916 = vpop.f32.mrb[0].mxu0
        %v917 = vadd.f32 %v665, %v916
        %v918 = vpop.f32.mrb[0].mxu0
        %v919 = vadd.f32 %v669, %v918
        %v920 = vpop.f32.mrb[0].mxu0
        %v921 = vadd.f32 %v665, %v920
        %v922 = vpop.f32.mrb[0].mxu0
        %v923 = vadd.f32 %v669, %v922
        %924 = vmatprep.mubr.bf16.mxu0 0
        %925 = vmatmul.mubr.bf16.gmra.mrb[0].mxu0 %v742
        %v926 = vpop.f32.mrb[0].mxu0
        %v927 = vadd.f32 %v665, %v926
        %v928 = vpop.f32.mrb[0].mxu0
        %v929 = vadd.f32 %v669, %v928
        %v930 = vpop.f32.mrb[0].mxu0
        %v931 = vadd.f32 %v665, %v930
        %v932 = vpop.f32.mrb[0].mxu0
        %v933 = vadd.f32 %v669, %v932
        %934 = vmatprep.mubr.bf16.mxu0 0
        %935 = vmatmul.mubr.bf16.gmra.mrb[0].mxu0 %v745
        %v936 = vpop.f32.mrb[0].mxu0
        %v937 = vadd.f32 %v665, %v936
        %v938 = vpop.f32.mrb[0].mxu0
        %v939 = vadd.f32 %v669, %v938
        %v940 = vpop.f32.mrb[0].mxu0
        %v941 = vadd.f32 %v665, %v940
        %v942 = vpop.f32.mrb[0].mxu0
        %v943 = vadd.f32 %v669, %v942
        %944 = vmatprep.mubr.bf16.mxu0 0
        %945 = vmatmul.mubr.bf16.gmra.mrb[0].mxu0 %v748
        %v946 = vpop.f32.mrb[0].mxu0
        %v947 = vadd.f32 %v665, %v946
        %v948 = vpop.f32.mrb[0].mxu0
        %v949 = vadd.f32 %v669, %v948
        %v950 = vpop.f32.mrb[0].mxu0
        %v951 = vadd.f32 %v665, %v950
        %v952 = vpop.f32.mrb[0].mxu0
        %v953 = vadd.f32 %v669, %v952
        %954 = vmatprep.mubr.bf16.mxu0 0
        %955 = vmatmul.mubr.bf16.gmra.mrb[0].mxu0 %v751
        %v956 = vpop.f32.mrb[0].mxu0
        %v957 = vadd.f32 %v665, %v956
        %v958 = vpop.f32.mrb[0].mxu0
        %v959 = vadd.f32 %v669, %v958
        %v960 = vpop.f32.mrb[0].mxu0
        %v961 = vadd.f32 %v665, %v960
        %v962 = vpop.f32.mrb[0].mxu0
        %v963 = vadd.f32 %v669, %v962
        %964 = vmatprep.mubr.bf16.mxu0 0
        %965 = vmatmul.mubr.bf16.gmra.mrb[0].mxu0 %v754
        %v966 = vpop.f32.mrb[0].mxu0
        %v967 = vadd.f32 %v665, %v966
        %v968 = vpop.f32.mrb[0].mxu0
        %v969 = vadd.f32 %v669, %v968
        %v970 = vpop.f32.mrb[0].mxu0
        %v971 = vadd.f32 %v665, %v970
        %v972 = vpop.f32.mrb[0].mxu0
        %v973 = vadd.f32 %v669, %v972
        %974 = vmatprep.mubr.bf16.mxu0 0
        %975 = vmatmul.mubr.bf16.gmra.mrb[0].mxu0 %v757
        %v976 = vpop.f32.mrb[0].mxu0
        %v977 = vadd.f32 %v665, %v976
        %v978 = vpop.f32.mrb[0].mxu0
        %v979 = vadd.f32 %v669, %v978
        %v980 = vpop.f32.mrb[0].mxu0
        %v981 = vadd.f32 %v665, %v980
        %v982 = vpop.f32.mrb[0].mxu0
        %v983 = vadd.f32 %v669, %v982
        %984 = vdwg.mxu0
        %v985 = vpack.c.bf16 %v798, %v794
        %v986 = vpack.c.bf16 %v800, %v796
        %v987 = vpack.c.bf16 %v911, %v907
        %v988 = vpack.c.bf16 %v913, %v909
        %v989 = vpack.c.bf16 %v808, %v804
        %v990 = vpack.c.bf16 %v810, %v806
        %v991 = vpack.c.bf16 %v921, %v917
        %v992 = vpack.c.bf16 %v923, %v919
        %v993 = vpack.c.bf16 %v818, %v814
        %v994 = vpack.c.bf16 %v820, %v816
        %v995 = vpack.c.bf16 %v931, %v927
        %v996 = vpack.c.bf16 %v933, %v929
        %v997 = vpack.c.bf16 %v828, %v824
        %v998 = vpack.c.bf16 %v830, %v826
        %v999 = vpack.c.bf16 %v941, %v937
        %v1000 = vpack.c.bf16 %v943, %v939
        %v1001 = vpack.c.bf16 %v838, %v834
        %v1002 = vpack.c.bf16 %v840, %v836
        %v1003 = vpack.c.bf16 %v951, %v947
        %v1004 = vpack.c.bf16 %v953, %v949
        %v1005 = vpack.c.bf16 %v848, %v844
        %v1006 = vpack.c.bf16 %v850, %v846
        %v1007 = vpack.c.bf16 %v961, %v957
        %v1008 = vpack.c.bf16 %v963, %v959
        %v1009 = vpack.c.bf16 %v858, %v854
        %v1010 = vpack.c.bf16 %v860, %v856
        %v1011 = vpack.c.bf16 %v971, %v967
        %v1012 = vpack.c.bf16 %v973, %v969
        %v1013 = vpack.c.bf16 %v868, %v864
        %v1014 = vpack.c.bf16 %v870, %v866
        %v1015 = vpack.c.bf16 %v981, %v977
        %v1016 = vpack.c.bf16 %v983, %v979
        %1017 = vst [vmem:[#allocation2] sm:$0xff] %v985
        %1018 = vst [vmem:[#allocation2 + $0x8] sm:$0xff] %v986
        %1019 = vst [vmem:[#allocation2 + $0x10] sm:$0xff] %v987
        %1020 = vst [vmem:[#allocation2 + $0x18] sm:$0xff] %v988
        %1021 = vst [vmem:[#allocation2 + $0x20] sm:$0xff] %v989
        %1022 = vst [vmem:[#allocation2 + $0x28] sm:$0xff] %v990
        %1023 = vst [vmem:[#allocation2 + $0x30] sm:$0xff] %v991
        %1024 = vst [vmem:[#allocation2 + $0x38] sm:$0xff] %v992
        %1025 = vst [vmem:[#allocation2 + $0x40] sm:$0xff] %v993
        %1026 = vst [vmem:[#allocation2 + $0x48] sm:$0xff] %v994
        %1027 = vst [vmem:[#allocation2 + $0x50] sm:$0xff] %v995
        %1028 = vst [vmem:[#allocation2 + $0x58] sm:$0xff] %v996
        %1029 = vst [vmem:[#allocation2 + $0x60] sm:$0xff] %v997
        %1030 = vst [vmem:[#allocation2 + $0x68] sm:$0xff] %v998
        %1031 = vst [vmem:[#allocation2 + $0x70] sm:$0xff] %v999
        %1032 = vst [vmem:[#allocation2 + $0x78] sm:$0xff] %v1000
        %1033 = vst [vmem:[#allocation2 + $0x80] sm:$0xff] %v1001
        %1034 = vst [vmem:[#allocation2 + $0x88] sm:$0xff] %v1002
        %1035 = vst [vmem:[#allocation2 + $0x90] sm:$0xff] %v1003
        %1036 = vst [vmem:[#allocation2 + $0x98] sm:$0xff] %v1004
        %1037 = vst [vmem:[#allocation2 + $0xa0] sm:$0xff] %v1005
        %1038 = vst [vmem:[#allocation2 + $0xa8] sm:$0xff] %v1006
        %1039 = vst [vmem:[#allocation2 + $0xb0] sm:$0xff] %v1007
        %1040 = vst [vmem:[#allocation2 + $0xb8] sm:$0xff] %v1008
        %1041 = vst [vmem:[#allocation2 + $0xc0] sm:$0xff] %v1009
        %1042 = vst [vmem:[#allocation2 + $0xc8] sm:$0xff] %v1010
        %1043 = vst [vmem:[#allocation2 + $0xd0] sm:$0xff] %v1011
        %1044 = vst [vmem:[#allocation2 + $0xd8] sm:$0xff] %v1012
        %1045 = vst [vmem:[#allocation2 + $0xe0] sm:$0xff] %v1013
        %1046 = vst [vmem:[#allocation2 + $0xe8] sm:$0xff] %v1014
        %1047 = vst [vmem:[#allocation2 + $0xf0] sm:$0xff] %v1015
        %1048 = vst [vmem:[#allocation2 + $0xf8] sm:$0xff] %v1016
        %v1049 = vld [vmem:[#allocation2] sm:$0xff]
        %v1050 = vld [vmem:[#allocation2 + $0x8] sm:$0xff]
        %v1051 = vld [vmem:[#allocation2 + $0x10] sm:$0xff]
        %v1052 = vld [vmem:[#allocation2 + $0x18] sm:$0xff]
        %v1053 = vunpack.c.l.bf16 %v1049
        %v1054 = vunpack.c.l.bf16 %v1050
        %v1055 = vunpack.c.l.bf16 %v1051
        %v1056 = vunpack.c.l.bf16 %v1052
        %v1057 = vunpack.c.h.bf16 %v1049
        %v1058 = vunpack.c.h.bf16 %v1050
        %v1059 = vunpack.c.h.bf16 %v1051
        %v1060 = vunpack.c.h.bf16 %v1052
        %v1093 = vunpack.c.l.b16 %v604
        %v1094 = vunpack.c.h.b16 %v604
        %v1095 = vunpack.c.l.b16 %v605
        %v1096 = vunpack.c.h.b16 %v605
        %v1097 = vunpack.c.l.b16 %v606
        %v1098 = vunpack.c.h.b16 %v606
        %v1099 = vunpack.c.l.b16 %v607
        %v1100 = vunpack.c.h.b16 %v607
        %v1101 = vunpack.c.l.b16 %v608
        %v1102 = vunpack.c.h.b16 %v608
        %v1103 = vunpack.c.l.b16 %v609
        %v1104 = vunpack.c.h.b16 %v609
        %v1105 = vunpack.c.l.b16 %v610
        %v1106 = vunpack.c.h.b16 %v610
        %v1107 = vunpack.c.l.b16 %v611
        %v1108 = vunpack.c.h.b16 %v611
        %v1109 = vunpack.c.l.b16 %v612
        %v1110 = vunpack.c.h.b16 %v612
        %v1111 = vunpack.c.l.b16 %v613
        %v1112 = vunpack.c.h.b16 %v613
        %v1113 = vunpack.c.l.b16 %v614
        %v1114 = vunpack.c.h.b16 %v614
        %v1115 = vunpack.c.l.b16 %v615
        %v1116 = vunpack.c.h.b16 %v615
        %v1117 = vunpack.c.l.b16 %v616
        %v1118 = vunpack.c.h.b16 %v616
        %v1119 = vunpack.c.l.b16 %v617
        %v1120 = vunpack.c.h.b16 %v617
        %v1121 = vunpack.c.l.b16 %v618
        %v1122 = vunpack.c.h.b16 %v618
        %v1123 = vunpack.c.l.b16 %v619
        %v1124 = vunpack.c.h.b16 %v619
        %v1125 = vunpack.c.l.b16 %v620
        %v1126 = vunpack.c.h.b16 %v620
        %v1127 = vunpack.c.l.b16 %v621
        %v1128 = vunpack.c.h.b16 %v621
        %v1129 = vunpack.c.l.b16 %v622
        %v1130 = vunpack.c.h.b16 %v622
        %v1131 = vunpack.c.l.b16 %v623
        %v1132 = vunpack.c.h.b16 %v623
        %v1133 = vunpack.c.l.b16 %v624
        %v1134 = vunpack.c.h.b16 %v624
        %v1135 = vunpack.c.l.b16 %v625
        %v1136 = vunpack.c.h.b16 %v625
        %v1137 = vunpack.c.l.b16 %v626
        %v1138 = vunpack.c.h.b16 %v626
        %v1139 = vunpack.c.l.b16 %v627
        %v1140 = vunpack.c.h.b16 %v627
        %v1141 = vunpack.c.l.b16 %v628
        %v1142 = vunpack.c.h.b16 %v628
        %v1143 = vunpack.c.l.b16 %v629
        %v1144 = vunpack.c.h.b16 %v629
        %v1145 = vunpack.c.l.b16 %v630
        %v1146 = vunpack.c.h.b16 %v630
        %v1147 = vunpack.c.l.b16 %v631
        %v1148 = vunpack.c.h.b16 %v631
        %v1149 = vunpack.c.l.b16 %v632
        %v1150 = vunpack.c.h.b16 %v632
        %v1151 = vunpack.c.l.b16 %v633
        %v1152 = vunpack.c.h.b16 %v633
        %v1153 = vunpack.c.l.b16 %v634
        %v1154 = vunpack.c.h.b16 %v634
        %v1155 = vunpack.c.l.b16 %v635
        %v1156 = vunpack.c.h.b16 %v635
        %v1157 = vpack.c.b16 %v1097, %v1093
        %v1158 = vpack.c.b16 %v1098, %v1094
        %v1159 = vpack.c.b16 %v1099, %v1095
        %v1160 = vpack.c.b16 %v1100, %v1096
        %v1161 = vpack.c.b16 %v1105, %v1101
        %v1162 = vpack.c.b16 %v1106, %v1102
        %v1163 = vpack.c.b16 %v1107, %v1103
        %v1164 = vpack.c.b16 %v1108, %v1104
        %v1165 = vpack.c.b16 %v1113, %v1109
        %v1166 = vpack.c.b16 %v1114, %v1110
        %v1167 = vpack.c.b16 %v1115, %v1111
        %v1168 = vpack.c.b16 %v1116, %v1112
        %v1169 = vpack.c.b16 %v1121, %v1117
        %v1170 = vpack.c.b16 %v1122, %v1118
        %v1171 = vpack.c.b16 %v1123, %v1119
        %v1172 = vpack.c.b16 %v1124, %v1120
        %v1173 = vpack.c.b16 %v1129, %v1125
        %v1174 = vpack.c.b16 %v1130, %v1126
        %v1175 = vpack.c.b16 %v1131, %v1127
        %v1176 = vpack.c.b16 %v1132, %v1128
        %v1177 = vpack.c.b16 %v1137, %v1133
        %v1178 = vpack.c.b16 %v1138, %v1134
        %v1179 = vpack.c.b16 %v1139, %v1135
        %v1180 = vpack.c.b16 %v1140, %v1136
        %v1181 = vpack.c.b16 %v1145, %v1141
        %v1182 = vpack.c.b16 %v1146, %v1142
        %v1183 = vpack.c.b16 %v1147, %v1143
        %v1184 = vpack.c.b16 %v1148, %v1144
        %v1185 = vpack.c.b16 %v1153, %v1149
        %v1186 = vpack.c.b16 %v1154, %v1150
        %v1187 = vpack.c.b16 %v1155, %v1151
        %v1188 = vpack.c.b16 %v1156, %v1152
        %1221 = vmatprep.subr.bf16.mxu0 %v1158
        %1222 = vmatpush1.bf16.msra.mxu0 %v1157
        %1223 = vmatprep.subr.bf16.mxu0 %v1162
        %1224 = vmatpush1.bf16.msra.mxu0 %v1161
        %1225 = vmatprep.subr.bf16.mxu0 %v1166
        %1226 = vmatpush1.bf16.msra.mxu0 %v1165
        %1227 = vmatprep.subr.bf16.mxu0 %v1170
        %1228 = vmatpush1.bf16.msra.mxu0 %v1169
        %1229 = vmatprep.subr.bf16.mxu0 %v1174
        %1230 = vmatpush1.bf16.msra.mxu0 %v1173
        %1231 = vmatprep.subr.bf16.mxu0 %v1178
        %1232 = vmatpush1.bf16.msra.mxu0 %v1177
        %1233 = vmatprep.subr.bf16.mxu0 %v1182
        %1234 = vmatpush1.bf16.msra.mxu0 %v1181
        %1235 = vmatprep.subr.bf16.mxu0 %v1186
        %1236 = vmatpush1.bf16.msra.mxu0 %v1185
        %1237 = vmatprep.subr.bf16.mxu0 0
        %1238 = vmatpush1.bf16.msra.mxu0 0
        %1239 = vmatprep.subr.bf16.mxu0 0
        %1240 = vmatpush1.bf16.msra.mxu0 0
        %1241 = vmatprep.subr.bf16.mxu0 0
        %1242 = vmatpush1.bf16.msra.mxu0 0
        %1243 = vmatprep.subr.bf16.mxu0 0
        %1244 = vmatpush1.bf16.msra.mxu0 0
        %1245 = vmatprep.subr.bf16.mxu0 0
        %1246 = vmatpush1.bf16.msra.mxu0 0
        %1247 = vmatprep.subr.bf16.mxu0 0
        %1248 = vmatpush1.bf16.msra.mxu0 0
        %1249 = vmatprep.subr.bf16.mxu0 0
        %1250 = vmatpush1.bf16.msra.mxu0 0
        %1251 = vmatprep.subr.bf16.mxu0 0
        %1252 = vmatpush1.bf16.msra.mxu0 0
        %1253 = vmatprep.mubr.bf16.mxu0 0
        %1254 = vmatmul.mubr.bf16.gmra.mrb[0].mxu0 0
        %v1255 = vpop.f32.mrb[0].mxu0
        %v1256 = vadd.f32 0.0, %v1255
        %v1257 = vpop.f32.mrb[0].mxu0
        %v1258 = vadd.f32 0.0, %v1257
        %v1259 = vpop.f32.mrb[0].mxu0
        %v1260 = vadd.f32 0.0, %v1259
        %v1261 = vpop.f32.mrb[0].mxu0
        %v1262 = vadd.f32 0.0, %v1261
        %1263 = vdwg.mxu0
        %1264 = vmatprep.subr.bf16.mxu0 %v1160
        %1265 = vmatpush1.bf16.msra.mxu0 %v1159
        %1266 = vmatprep.subr.bf16.mxu0 %v1164
        %1267 = vmatpush1.bf16.msra.mxu0 %v1163
        %1268 = vmatprep.subr.bf16.mxu0 %v1168
        %1269 = vmatpush1.bf16.msra.mxu0 %v1167
        %1270 = vmatprep.subr.bf16.mxu0 %v1172
        %1271 = vmatpush1.bf16.msra.mxu0 %v1171
        %1272 = vmatprep.subr.bf16.mxu0 %v1176
        %1273 = vmatpush1.bf16.msra.mxu0 %v1175
        %1274 = vmatprep.subr.bf16.mxu0 %v1180
        %1275 = vmatpush1.bf16.msra.mxu0 %v1179
        %1276 = vmatprep.subr.bf16.mxu0 %v1184
        %1277 = vmatpush1.bf16.msra.mxu0 %v1183
        %1278 = vmatprep.subr.bf16.mxu0 %v1188
        %1279 = vmatpush1.bf16.msra.mxu0 %v1187
        %1280 = vmatprep.subr.bf16.mxu0 0
        %1281 = vmatpush1.bf16.msra.mxu0 0
        %1282 = vmatprep.subr.bf16.mxu0 0
        %1283 = vmatpush1.bf16.msra.mxu0 0
        %1284 = vmatprep.subr.bf16.mxu0 0
        %1285 = vmatpush1.bf16.msra.mxu0 0
        %1286 = vmatprep.subr.bf16.mxu0 0
        %1287 = vmatpush1.bf16.msra.mxu0 0
        %1288 = vmatprep.subr.bf16.mxu0 0
        %1289 = vmatpush1.bf16.msra.mxu0 0
        %1290 = vmatprep.subr.bf16.mxu0 0
        %1291 = vmatpush1.bf16.msra.mxu0 0
        %1292 = vmatprep.subr.bf16.mxu0 0
        %1293 = vmatpush1.bf16.msra.mxu0 0
        %1294 = vmatprep.subr.bf16.mxu0 0
        %1295 = vmatpush1.bf16.msra.mxu0 0
        %1296 = vmatprep.mubr.bf16.mxu0 0
        %1297 = vmatmul.mubr.bf16.gmra.mrb[0].mxu0 0
        %v1298 = vpop.f32.mrb[0].mxu0
        %v1299 = vadd.f32 0.0, %v1298
        %v1300 = vpop.f32.mrb[0].mxu0
        %v1301 = vadd.f32 0.0, %v1300
        %v1302 = vpop.f32.mrb[0].mxu0
        %v1303 = vadd.f32 0.0, %v1302
        %v1304 = vpop.f32.mrb[0].mxu0
        %v1305 = vadd.f32 0.0, %v1304
        %1306 = vdwg.mxu0
        %v1307 = vadd.f32 %v1053, %v1256
        %v1308 = vadd.f32 %v1054, %v1258
        %v1309 = vadd.f32 %v1055, %v1299
        %v1310 = vadd.f32 %v1056, %v1301
        %v1311 = vadd.f32 %v1057, %v1260
        %v1312 = vadd.f32 %v1058, %v1262
        %v1313 = vadd.f32 %v1059, %v1303
        %v1314 = vadd.f32 %v1060, %v1305
        %v1315 = vxor.u32 %v1307, 2147483648
        %v1316 = vxor.u32 %v1308, 2147483648
        %v1317 = vxor.u32 %v1309, 2147483648
        %v1318 = vxor.u32 %v1310, 2147483648
        %v1319 = vxor.u32 %v1311, 2147483648
        %v1320 = vxor.u32 %v1312, 2147483648
        %v1321 = vxor.u32 %v1313, 2147483648
        %v1322 = vxor.u32 %v1314, 2147483648
        %v1323 = vmul.f32 %v1315, 1.442695
        %v1324 = vpow.pop %v1323
        %v1325 = vmul.f32 %v1316, 1.442695
        %v1326 = vpow.pop %v1325
        %v1327 = vmul.f32 %v1317, 1.442695
        %v1328 = vpow.pop %v1327
        %v1329 = vmul.f32 %v1318, 1.442695
        %v1330 = vpow.pop %v1329
        %v1331 = vmul.f32 %v1319, 1.442695
        %v1332 = vpow.pop %v1331
        %v1333 = vmul.f32 %v1320, 1.442695
        %v1334 = vpow.pop %v1333
        %v1335 = vmul.f32 %v1321, 1.442695
        %v1336 = vpow.pop %v1335
        %v1337 = vmul.f32 %v1322, 1.442695
        %v1338 = vpow.pop %v1337
        %v1339 = vadd.f32 %v1324, 1.0
        %v1340 = vadd.f32 %v1326, 1.0
        %v1341 = vadd.f32 %v1328, 1.0
        %v1342 = vadd.f32 %v1330, 1.0
        %v1343 = vadd.f32 %v1332, 1.0
        %v1344 = vadd.f32 %v1334, 1.0
        %v1345 = vadd.f32 %v1336, 1.0
        %v1346 = vadd.f32 %v1338, 1.0
        %v1347 = vrcp.pop %v1339
        %v1348 = vmul.f32 1.0, %v1347
        %v1349 = vrcp.pop %v1340
        %v1350 = vmul.f32 1.0, %v1349
        %v1351 = vrcp.pop %v1341
        %v1352 = vmul.f32 1.0, %v1351
        %v1353 = vrcp.pop %v1342
        %v1354 = vmul.f32 1.0, %v1353
        %v1355 = vrcp.pop %v1343
        %v1356 = vmul.f32 1.0, %v1355
        %v1357 = vrcp.pop %v1344
        %v1358 = vmul.f32 1.0, %v1357
        %v1359 = vrcp.pop %v1345
        %v1360 = vmul.f32 1.0, %v1359
        %v1361 = vrcp.pop %v1346
        %v1362 = vmul.f32 1.0, %v1361
        %v1363 = vmul.f32 %v1352, 2.0
        %v1364 = vmul.f32 %v1360, 2.0
        %v1365 = vsub.f32 %v1363, 1.0
        %v1366 = vsub.f32 %v1364, 1.0
        %v1367 = vmul.f32 %v1350, 0.0
        %v1368 = vmul.f32 %v1358, 0.0
        %v1369 = vmul.f32 %v1348, %v1365
        %v1370 = vmul.f32 %v1356, %v1366
        %v1371 = vadd.f32 %v1367, %v1369
        %v1372 = vadd.f32 %v1368, %v1370
        %v1373 = vtanh.pop %v1371
        %v1374 = vtanh.pop %v1372
        %v1375 = vmul.f32 %v1354, %v1373
        %v1376 = vmul.f32 %v1362, %v1374
        %v1377 = vpack.c.bf16 %v1376, %v1375
        %1378 = vst [vmem:[#allocation3] sm:$0xff] %v1377
        %s1379 = scalar_lea.vmem [#allocation2], 32
        %v1380 = vld [vmem:[%s1379] sm:$0xff]
        %v1381 = vld [vmem:[%s1379 + $0x8] sm:$0xff]
        %v1382 = vld [vmem:[%s1379 + $0x10] sm:$0xff]
        %v1383 = vld [vmem:[%s1379 + $0x18] sm:$0xff]
        %v1384 = vunpack.c.l.bf16 %v1380
        %v1385 = vunpack.c.l.bf16 %v1381
        %v1386 = vunpack.c.l.bf16 %v1382
        %v1387 = vunpack.c.l.bf16 %v1383
        %v1388 = vunpack.c.h.bf16 %v1380
        %v1389 = vunpack.c.h.bf16 %v1381
        %v1390 = vunpack.c.h.bf16 %v1382
        %v1391 = vunpack.c.h.bf16 %v1383
        %1392 = vmatprep.subr.bf16.mxu0 %v1158
        %1393 = vmatpush1.bf16.msra.mxu0 %v1157
        %1394 = vmatprep.subr.bf16.mxu0 %v1162
        %1395 = vmatpush1.bf16.msra.mxu0 %v1161
        %1396 = vmatprep.subr.bf16.mxu0 %v1166
        %1397 = vmatpush1.bf16.msra.mxu0 %v1165
        %1398 = vmatprep.subr.bf16.mxu0 %v1170
        %1399 = vmatpush1.bf16.msra.mxu0 %v1169
        %1400 = vmatprep.subr.bf16.mxu0 %v1174
        %1401 = vmatpush1.bf16.msra.mxu0 %v1173
        %1402 = vmatprep.subr.bf16.mxu0 %v1178
        %1403 = vmatpush1.bf16.msra.mxu0 %v1177
        %1404 = vmatprep.subr.bf16.mxu0 %v1182
        %1405 = vmatpush1.bf16.msra.mxu0 %v1181
        %1406 = vmatprep.subr.bf16.mxu0 %v1186
        %1407 = vmatpush1.bf16.msra.mxu0 %v1185
        %1408 = vmatprep.subr.bf16.mxu0 0
        %1409 = vmatpush1.bf16.msra.mxu0 0
        %1410 = vmatprep.subr.bf16.mxu0 0
        %1411 = vmatpush1.bf16.msra.mxu0 0
        %1412 = vmatprep.subr.bf16.mxu0 0
        %1413 = vmatpush1.bf16.msra.mxu0 0
        %1414 = vmatprep.subr.bf16.mxu0 0
        %1415 = vmatpush1.bf16.msra.mxu0 0
        %1416 = vmatprep.subr.bf16.mxu0 0
        %1417 = vmatpush1.bf16.msra.mxu0 0
        %1418 = vmatprep.subr.bf16.mxu0 0
        %1419 = vmatpush1.bf16.msra.mxu0 0
        %1420 = vmatprep.subr.bf16.mxu0 0
        %1421 = vmatpush1.bf16.msra.mxu0 0
        %1422 = vmatprep.subr.bf16.mxu0 0
        %1423 = vmatpush1.bf16.msra.mxu0 0
        %1424 = vmatprep.mubr.bf16.mxu0 0
        %1425 = vmatmul.mubr.bf16.gmra.mrb[0].mxu0 %v1377
        %v1426 = vpop.f32.mrb[0].mxu0
        %v1427 = vadd.f32 0.0, %v1426
        %v1428 = vpop.f32.mrb[0].mxu0
        %v1429 = vadd.f32 0.0, %v1428
        %v1430 = vpop.f32.mrb[0].mxu0
        %v1431 = vadd.f32 0.0, %v1430
        %v1432 = vpop.f32.mrb[0].mxu0
        %v1433 = vadd.f32 0.0, %v1432
        %1434 = vdwg.mxu0
        %1435 = vmatprep.subr.bf16.mxu0 %v1160
        %1436 = vmatpush1.bf16.msra.mxu0 %v1159
        %1437 = vmatprep.subr.bf16.mxu0 %v1164
        %1438 = vmatpush1.bf16.msra.mxu0 %v1163
        %1439 = vmatprep.subr.bf16.mxu0 %v1168
        %1440 = vmatpush1.bf16.msra.mxu0 %v1167
        %1441 = vmatprep.subr.bf16.mxu0 %v1172
        %1442 = vmatpush1.bf16.msra.mxu0 %v1171
        %1443 = vmatprep.subr.bf16.mxu0 %v1176
        %1444 = vmatpush1.bf16.msra.mxu0 %v1175
        %1445 = vmatprep.subr.bf16.mxu0 %v1180
        %1446 = vmatpush1.bf16.msra.mxu0 %v1179
        %1447 = vmatprep.subr.bf16.mxu0 %v1184
        %1448 = vmatpush1.bf16.msra.mxu0 %v1183
        %1449 = vmatprep.subr.bf16.mxu0 %v1188
        %1450 = vmatpush1.bf16.msra.mxu0 %v1187
        %1451 = vmatprep.subr.bf16.mxu0 0
        %1452 = vmatpush1.bf16.msra.mxu0 0
        %1453 = vmatprep.subr.bf16.mxu0 0
        %1454 = vmatpush1.bf16.msra.mxu0 0
        %1455 = vmatprep.subr.bf16.mxu0 0
        %1456 = vmatpush1.bf16.msra.mxu0 0
        %1457 = vmatprep.subr.bf16.mxu0 0
        %1458 = vmatpush1.bf16.msra.mxu0 0
        %1459 = vmatprep.subr.bf16.mxu0 0
        %1460 = vmatpush1.bf16.msra.mxu0 0
        %1461 = vmatprep.subr.bf16.mxu0 0
        %1462 = vmatpush1.bf16.msra.mxu0 0
        %1463 = vmatprep.subr.bf16.mxu0 0
        %1464 = vmatpush1.bf16.msra.mxu0 0
        %1465 = vmatprep.subr.bf16.mxu0 0
        %1466 = vmatpush1.bf16.msra.mxu0 0
        %1467 = vmatprep.mubr.bf16.mxu0 0
        %1468 = vmatmul.mubr.bf16.gmra.mrb[0].mxu0 %v1377
        %v1469 = vpop.f32.mrb[0].mxu0
        %v1470 = vadd.f32 0.0, %v1469
        %v1471 = vpop.f32.mrb[0].mxu0
        %v1472 = vadd.f32 0.0, %v1471
        %v1473 = vpop.f32.mrb[0].mxu0
        %v1474 = vadd.f32 0.0, %v1473
        %v1475 = vpop.f32.mrb[0].mxu0
        %v1476 = vadd.f32 0.0, %v1475
        %1477 = vdwg.mxu0
        %v1478 = vadd.f32 %v1384, %v1427
        %v1479 = vadd.f32 %v1385, %v1429
        %v1480 = vadd.f32 %v1386, %v1470
        %v1481 = vadd.f32 %v1387, %v1472
        %v1482 = vadd.f32 %v1388, %v1431
        %v1483 = vadd.f32 %v1389, %v1433
        %v1484 = vadd.f32 %v1390, %v1474
        %v1485 = vadd.f32 %v1391, %v1476
        %v1486 = vxor.u32 %v1478, 2147483648
        %v1487 = vxor.u32 %v1479, 2147483648
        %v1488 = vxor.u32 %v1480, 2147483648
        %v1489 = vxor.u32 %v1481, 2147483648
        %v1490 = vxor.u32 %v1482, 2147483648
        %v1491 = vxor.u32 %v1483, 2147483648
        %v1492 = vxor.u32 %v1484, 2147483648
        %v1493 = vxor.u32 %v1485, 2147483648
        %v1494 = vmul.f32 %v1486, 1.442695
        %v1495 = vpow.pop %v1494
        %v1496 = vmul.f32 %v1487, 1.442695
        %v1497 = vpow.pop %v1496
        %v1498 = vmul.f32 %v1488, 1.442695
        %v1499 = vpow.pop %v1498
        %v1500 = vmul.f32 %v1489, 1.442695
        %v1501 = vpow.pop %v1500
        %v1502 = vmul.f32 %v1490, 1.442695
        %v1503 = vpow.pop %v1502
        %v1504 = vmul.f32 %v1491, 1.442695
        %v1505 = vpow.pop %v1504
        %v1506 = vmul.f32 %v1492, 1.442695
        %v1507 = vpow.pop %v1506
        %v1508 = vmul.f32 %v1493, 1.442695
        %v1509 = vpow.pop %v1508
        %v1510 = vadd.f32 %v1495, 1.0
        %v1511 = vadd.f32 %v1497, 1.0
        %v1512 = vadd.f32 %v1499, 1.0
        %v1513 = vadd.f32 %v1501, 1.0
        %v1514 = vadd.f32 %v1503, 1.0
        %v1515 = vadd.f32 %v1505, 1.0
        %v1516 = vadd.f32 %v1507, 1.0
        %v1517 = vadd.f32 %v1509, 1.0
        %v1518 = vrcp.pop %v1510
        %v1519 = vmul.f32 1.0, %v1518
        %v1520 = vrcp.pop %v1511
        %v1521 = vmul.f32 1.0, %v1520
        %v1522 = vrcp.pop %v1512
        %v1523 = vmul.f32 1.0, %v1522
        %v1524 = vrcp.pop %v1513
        %v1525 = vmul.f32 1.0, %v1524
        %v1526 = vrcp.pop %v1514
        %v1527 = vmul.f32 1.0, %v1526
        %v1528 = vrcp.pop %v1515
        %v1529 = vmul.f32 1.0, %v1528
        %v1530 = vrcp.pop %v1516
        %v1531 = vmul.f32 1.0, %v1530
        %v1532 = vrcp.pop %v1517
        %v1533 = vmul.f32 1.0, %v1532
        %v1534 = vmul.f32 %v1523, 2.0
        %v1535 = vmul.f32 %v1531, 2.0
        %v1536 = vsub.f32 %v1534, 1.0
        %v1537 = vsub.f32 %v1535, 1.0
        %v1538 = vmul.f32 %v1521, %v1371
        %v1539 = vmul.f32 %v1529, %v1372
        %v1540 = vmul.f32 %v1519, %v1536
        %v1541 = vmul.f32 %v1527, %v1537
        %v1542 = vadd.f32 %v1538, %v1540
        %v1543 = vadd.f32 %v1539, %v1541
        %v1544 = vtanh.pop %v1542
        %v1545 = vtanh.pop %v1543
        %v1546 = vmul.f32 %v1525, %v1544
        %v1547 = vmul.f32 %v1533, %v1545
        %v1548 = vpack.c.bf16 %v1547, %v1546
        %s1549 = scalar_lea.vmem [#allocation3], 8
        %1550 = vst [vmem:[%s1549] sm:$0xff] %v1548
        %s1551 = scalar_lea.vmem [#allocation2], 64
        %v1552 = vld [vmem:[%s1551] sm:$0xff]
        %v1553 = vld [vmem:[%s1551 + $0x8] sm:$0xff]
        %v1554 = vld [vmem:[%s1551 + $0x10] sm:$0xff]
        %v1555 = vld [vmem:[%s1551 + $0x18] sm:$0xff]
        %v1556 = vunpack.c.l.bf16 %v1552
        %v1557 = vunpack.c.l.bf16 %v1553
        %v1558 = vunpack.c.l.bf16 %v1554
        %v1559 = vunpack.c.l.bf16 %v1555
        %v1560 = vunpack.c.h.bf16 %v1552
        %v1561 = vunpack.c.h.bf16 %v1553
        %v1562 = vunpack.c.h.bf16 %v1554
        %v1563 = vunpack.c.h.bf16 %v1555
        %1564 = vmatprep.subr.bf16.mxu0 %v1158
        %1565 = vmatpush1.bf16.msra.mxu0 %v1157
        %1566 = vmatprep.subr.bf16.mxu0 %v1162
        %1567 = vmatpush1.bf16.msra.mxu0 %v1161
        %1568 = vmatprep.subr.bf16.mxu0 %v1166
        %1569 = vmatpush1.bf16.msra.mxu0 %v1165
        %1570 = vmatprep.subr.bf16.mxu0 %v1170
        %1571 = vmatpush1.bf16.msra.mxu0 %v1169
        %1572 = vmatprep.subr.bf16.mxu0 %v1174
        %1573 = vmatpush1.bf16.msra.mxu0 %v1173
        %1574 = vmatprep.subr.bf16.mxu0 %v1178
        %1575 = vmatpush1.bf16.msra.mxu0 %v1177
        %1576 = vmatprep.subr.bf16.mxu0 %v1182
        %1577 = vmatpush1.bf16.msra.mxu0 %v1181
        %1578 = vmatprep.subr.bf16.mxu0 %v1186
        %1579 = vmatpush1.bf16.msra.mxu0 %v1185
        %1580 = vmatprep.subr.bf16.mxu0 0
        %1581 = vmatpush1.bf16.msra.mxu0 0
        %1582 = vmatprep.subr.bf16.mxu0 0
        %1583 = vmatpush1.bf16.msra.mxu0 0
        %1584 = vmatprep.subr.bf16.mxu0 0
        %1585 = vmatpush1.bf16.msra.mxu0 0
        %1586 = vmatprep.subr.bf16.mxu0 0
        %1587 = vmatpush1.bf16.msra.mxu0 0
        %1588 = vmatprep.subr.bf16.mxu0 0
        %1589 = vmatpush1.bf16.msra.mxu0 0
        %1590 = vmatprep.subr.bf16.mxu0 0
        %1591 = vmatpush1.bf16.msra.mxu0 0
        %1592 = vmatprep.subr.bf16.mxu0 0
        %1593 = vmatpush1.bf16.msra.mxu0 0
        %1594 = vmatprep.subr.bf16.mxu0 0
        %1595 = vmatpush1.bf16.msra.mxu0 0
        %1596 = vmatprep.mubr.bf16.mxu0 0
        %1597 = vmatmul.mubr.bf16.gmra.mrb[0].mxu0 %v1548
        %v1598 = vpop.f32.mrb[0].mxu0
        %v1599 = vadd.f32 0.0, %v1598
        %v1600 = vpop.f32.mrb[0].mxu0
        %v1601 = vadd.f32 0.0, %v1600
        %v1602 = vpop.f32.mrb[0].mxu0
        %v1603 = vadd.f32 0.0, %v1602
        %v1604 = vpop.f32.mrb[0].mxu0
        %v1605 = vadd.f32 0.0, %v1604
        %1606 = vdwg.mxu0
        %1607 = vmatprep.subr.bf16.mxu0 %v1160
        %1608 = vmatpush1.bf16.msra.mxu0 %v1159
        %1609 = vmatprep.subr.bf16.mxu0 %v1164
        %1610 = vmatpush1.bf16.msra.mxu0 %v1163
        %1611 = vmatprep.subr.bf16.mxu0 %v1168
        %1612 = vmatpush1.bf16.msra.mxu0 %v1167
        %1613 = vmatprep.subr.bf16.mxu0 %v1172
        %1614 = vmatpush1.bf16.msra.mxu0 %v1171
        %1615 = vmatprep.subr.bf16.mxu0 %v1176
        %1616 = vmatpush1.bf16.msra.mxu0 %v1175
        %1617 = vmatprep.subr.bf16.mxu0 %v1180
        %1618 = vmatpush1.bf16.msra.mxu0 %v1179
        %1619 = vmatprep.subr.bf16.mxu0 %v1184
        %1620 = vmatpush1.bf16.msra.mxu0 %v1183
        %1621 = vmatprep.subr.bf16.mxu0 %v1188
        %1622 = vmatpush1.bf16.msra.mxu0 %v1187
        %1623 = vmatprep.subr.bf16.mxu0 0
        %1624 = vmatpush1.bf16.msra.mxu0 0
        %1625 = vmatprep.subr.bf16.mxu0 0
        %1626 = vmatpush1.bf16.msra.mxu0 0
        %1627 = vmatprep.subr.bf16.mxu0 0
        %1628 = vmatpush1.bf16.msra.mxu0 0
        %1629 = vmatprep.subr.bf16.mxu0 0
        %1630 = vmatpush1.bf16.msra.mxu0 0
        %1631 = vmatprep.subr.bf16.mxu0 0
        %1632 = vmatpush1.bf16.msra.mxu0 0
        %1633 = vmatprep.subr.bf16.mxu0 0
        %1634 = vmatpush1.bf16.msra.mxu0 0
        %1635 = vmatprep.subr.bf16.mxu0 0
        %1636 = vmatpush1.bf16.msra.mxu0 0
        %1637 = vmatprep.subr.bf16.mxu0 0
        %1638 = vmatpush1.bf16.msra.mxu0 0
        %1639 = vmatprep.mubr.bf16.mxu0 0
        %1640 = vmatmul.mubr.bf16.gmra.mrb[0].mxu0 %v1548
        %v1641 = vpop.f32.mrb[0].mxu0
        %v1642 = vadd.f32 0.0, %v1641
        %v1643 = vpop.f32.mrb[0].mxu0
        %v1644 = vadd.f32 0.0, %v1643
        %v1645 = vpop.f32.mrb[0].mxu0
        %v1646 = vadd.f32 0.0, %v1645
        %v1647 = vpop.f32.mrb[0].mxu0
        %v1648 = vadd.f32 0.0, %v1647
        %1649 = vdwg.mxu0
        %v1650 = vadd.f32 %v1556, %v1599
        %v1651 = vadd.f32 %v1557, %v1601
        %v1652 = vadd.f32 %v1558, %v1642
        %v1653 = vadd.f32 %v1559, %v1644
        %v1654 = vadd.f32 %v1560, %v1603
        %v1655 = vadd.f32 %v1561, %v1605
        %v1656 = vadd.f32 %v1562, %v1646
        %v1657 = vadd.f32 %v1563, %v1648
        %v1658 = vxor.u32 %v1650, 2147483648
        %v1659 = vxor.u32 %v1651, 2147483648
        %v1660 = vxor.u32 %v1652, 2147483648
        %v1661 = vxor.u32 %v1653, 2147483648
        %v1662 = vxor.u32 %v1654, 2147483648
        %v1663 = vxor.u32 %v1655, 2147483648
        %v1664 = vxor.u32 %v1656, 2147483648
        %v1665 = vxor.u32 %v1657, 2147483648
        %v1666 = vmul.f32 %v1658, 1.442695
        %v1667 = vpow.pop %v1666
        %v1668 = vmul.f32 %v1659, 1.442695
        %v1669 = vpow.pop %v1668
        %v1670 = vmul.f32 %v1660, 1.442695
        %v1671 = vpow.pop %v1670
        %v1672 = vmul.f32 %v1661, 1.442695
        %v1673 = vpow.pop %v1672
        %v1674 = vmul.f32 %v1662, 1.442695
        %v1675 = vpow.pop %v1674
        %v1676 = vmul.f32 %v1663, 1.442695
        %v1677 = vpow.pop %v1676
        %v1678 = vmul.f32 %v1664, 1.442695
        %v1679 = vpow.pop %v1678
        %v1680 = vmul.f32 %v1665, 1.442695
        %v1681 = vpow.pop %v1680
        %v1682 = vadd.f32 %v1667, 1.0
        %v1683 = vadd.f32 %v1669, 1.0
        %v1684 = vadd.f32 %v1671, 1.0
        %v1685 = vadd.f32 %v1673, 1.0
        %v1686 = vadd.f32 %v1675, 1.0
        %v1687 = vadd.f32 %v1677, 1.0
        %v1688 = vadd.f32 %v1679, 1.0
        %v1689 = vadd.f32 %v1681, 1.0
        %v1690 = vrcp.pop %v1682
        %v1691 = vmul.f32 1.0, %v1690
        %v1692 = vrcp.pop %v1683
        %v1693 = vmul.f32 1.0, %v1692
        %v1694 = vrcp.pop %v1684
        %v1695 = vmul.f32 1.0, %v1694
        %v1696 = vrcp.pop %v1685
        %v1697 = vmul.f32 1.0, %v1696
        %v1698 = vrcp.pop %v1686
        %v1699 = vmul.f32 1.0, %v1698
        %v1700 = vrcp.pop %v1687
        %v1701 = vmul.f32 1.0, %v1700
        %v1702 = vrcp.pop %v1688
        %v1703 = vmul.f32 1.0, %v1702
        %v1704 = vrcp.pop %v1689
        %v1705 = vmul.f32 1.0, %v1704
        %v1706 = vmul.f32 %v1695, 2.0
        %v1707 = vmul.f32 %v1703, 2.0
        %v1708 = vsub.f32 %v1706, 1.0
        %v1709 = vsub.f32 %v1707, 1.0
        %v1710 = vmul.f32 %v1693, %v1542
        %v1711 = vmul.f32 %v1701, %v1543
        %v1712 = vmul.f32 %v1691, %v1708
        %v1713 = vmul.f32 %v1699, %v1709
        %v1714 = vadd.f32 %v1710, %v1712
        %v1715 = vadd.f32 %v1711, %v1713
        %v1716 = vtanh.pop %v1714
        %v1717 = vtanh.pop %v1715
        %v1718 = vmul.f32 %v1697, %v1716
        %v1719 = vmul.f32 %v1705, %v1717
        %v1720 = vpack.c.bf16 %v1719, %v1718
        %s1721 = scalar_lea.vmem [#allocation3], 16
        %1722 = vst [vmem:[%s1721] sm:$0xff] %v1720
        %s1723 = scalar_lea.vmem [#allocation2], 96
        %v1724 = vld [vmem:[%s1723] sm:$0xff]
        %v1725 = vld [vmem:[%s1723 + $0x8] sm:$0xff]
        %v1726 = vld [vmem:[%s1723 + $0x10] sm:$0xff]
        %v1727 = vld [vmem:[%s1723 + $0x18] sm:$0xff]
        %v1728 = vunpack.c.l.bf16 %v1724
        %v1729 = vunpack.c.l.bf16 %v1725
        %v1730 = vunpack.c.l.bf16 %v1726
        %v1731 = vunpack.c.l.bf16 %v1727
        %v1732 = vunpack.c.h.bf16 %v1724
        %v1733 = vunpack.c.h.bf16 %v1725
        %v1734 = vunpack.c.h.bf16 %v1726
        %v1735 = vunpack.c.h.bf16 %v1727
        %1736 = vmatprep.subr.bf16.mxu0 %v1158
        %1737 = vmatpush1.bf16.msra.mxu0 %v1157
        %1738 = vmatprep.subr.bf16.mxu0 %v1162
        %1739 = vmatpush1.bf16.msra.mxu0 %v1161
        %1740 = vmatprep.subr.bf16.mxu0 %v1166
        %1741 = vmatpush1.bf16.msra.mxu0 %v1165
        %1742 = vmatprep.subr.bf16.mxu0 %v1170
        %1743 = vmatpush1.bf16.msra.mxu0 %v1169
        %1744 = vmatprep.subr.bf16.mxu0 %v1174
        %1745 = vmatpush1.bf16.msra.mxu0 %v1173
        %1746 = vmatprep.subr.bf16.mxu0 %v1178
        %1747 = vmatpush1.bf16.msra.mxu0 %v1177
        %1748 = vmatprep.subr.bf16.mxu0 %v1182
        %1749 = vmatpush1.bf16.msra.mxu0 %v1181
        %1750 = vmatprep.subr.bf16.mxu0 %v1186
        %1751 = vmatpush1.bf16.msra.mxu0 %v1185
        %1752 = vmatprep.subr.bf16.mxu0 0
        %1753 = vmatpush1.bf16.msra.mxu0 0
        %1754 = vmatprep.subr.bf16.mxu0 0
        %1755 = vmatpush1.bf16.msra.mxu0 0
        %1756 = vmatprep.subr.bf16.mxu0 0
        %1757 = vmatpush1.bf16.msra.mxu0 0
        %1758 = vmatprep.subr.bf16.mxu0 0
        %1759 = vmatpush1.bf16.msra.mxu0 0
        %1760 = vmatprep.subr.bf16.mxu0 0
        %1761 = vmatpush1.bf16.msra.mxu0 0
        %1762 = vmatprep.subr.bf16.mxu0 0
        %1763 = vmatpush1.bf16.msra.mxu0 0
        %1764 = vmatprep.subr.bf16.mxu0 0
        %1765 = vmatpush1.bf16.msra.mxu0 0
        %1766 = vmatprep.subr.bf16.mxu0 0
        %1767 = vmatpush1.bf16.msra.mxu0 0
        %1768 = vmatprep.mubr.bf16.mxu0 0
        %1769 = vmatmul.mubr.bf16.gmra.mrb[0].mxu0 %v1720
        %v1770 = vpop.f32.mrb[0].mxu0
        %v1771 = vadd.f32 0.0, %v1770
        %v1772 = vpop.f32.mrb[0].mxu0
        %v1773 = vadd.f32 0.0, %v1772
        %v1774 = vpop.f32.mrb[0].mxu0
        %v1775 = vadd.f32 0.0, %v1774
        %v1776 = vpop.f32.mrb[0].mxu0
        %v1777 = vadd.f32 0.0, %v1776
        %1778 = vdwg.mxu0
        %1779 = vmatprep.subr.bf16.mxu0 %v1160
        %1780 = vmatpush1.bf16.msra.mxu0 %v1159
        %1781 = vmatprep.subr.bf16.mxu0 %v1164
        %1782 = vmatpush1.bf16.msra.mxu0 %v1163
        %1783 = vmatprep.subr.bf16.mxu0 %v1168
        %1784 = vmatpush1.bf16.msra.mxu0 %v1167
        %1785 = vmatprep.subr.bf16.mxu0 %v1172
        %1786 = vmatpush1.bf16.msra.mxu0 %v1171
        %1787 = vmatprep.subr.bf16.mxu0 %v1176
        %1788 = vmatpush1.bf16.msra.mxu0 %v1175
        %1789 = vmatprep.subr.bf16.mxu0 %v1180
        %1790 = vmatpush1.bf16.msra.mxu0 %v1179
        %1791 = vmatprep.subr.bf16.mxu0 %v1184
        %1792 = vmatpush1.bf16.msra.mxu0 %v1183
        %1793 = vmatprep.subr.bf16.mxu0 %v1188
        %1794 = vmatpush1.bf16.msra.mxu0 %v1187
        %1795 = vmatprep.subr.bf16.mxu0 0
        %1796 = vmatpush1.bf16.msra.mxu0 0
        %1797 = vmatprep.subr.bf16.mxu0 0
        %1798 = vmatpush1.bf16.msra.mxu0 0
        %1799 = vmatprep.subr.bf16.mxu0 0
        %1800 = vmatpush1.bf16.msra.mxu0 0
        %1801 = vmatprep.subr.bf16.mxu0 0
        %1802 = vmatpush1.bf16.msra.mxu0 0
        %1803 = vmatprep.subr.bf16.mxu0 0
        %1804 = vmatpush1.bf16.msra.mxu0 0
        %1805 = vmatprep.subr.bf16.mxu0 0
        %1806 = vmatpush1.bf16.msra.mxu0 0
        %1807 = vmatprep.subr.bf16.mxu0 0
        %1808 = vmatpush1.bf16.msra.mxu0 0
        %1809 = vmatprep.subr.bf16.mxu0 0
        %1810 = vmatpush1.bf16.msra.mxu0 0
        %1811 = vmatprep.mubr.bf16.mxu0 0
        %1812 = vmatmul.mubr.bf16.gmra.mrb[0].mxu0 %v1720
        %v1813 = vpop.f32.mrb[0].mxu0
        %v1814 = vadd.f32 0.0, %v1813
        %v1815 = vpop.f32.mrb[0].mxu0
        %v1816 = vadd.f32 0.0, %v1815
        %v1817 = vpop.f32.mrb[0].mxu0
        %v1818 = vadd.f32 0.0, %v1817
        %v1819 = vpop.f32.mrb[0].mxu0
        %v1820 = vadd.f32 0.0, %v1819
        %1821 = vdwg.mxu0
        %v1822 = vadd.f32 %v1728, %v1771
        %v1823 = vadd.f32 %v1729, %v1773
        %v1824 = vadd.f32 %v1730, %v1814
        %v1825 = vadd.f32 %v1731, %v1816
        %v1826 = vadd.f32 %v1732, %v1775
        %v1827 = vadd.f32 %v1733, %v1777
        %v1828 = vadd.f32 %v1734, %v1818
        %v1829 = vadd.f32 %v1735, %v1820
        %v1830 = vxor.u32 %v1822, 2147483648
        %v1831 = vxor.u32 %v1823, 2147483648
        %v1832 = vxor.u32 %v1824, 2147483648
        %v1833 = vxor.u32 %v1825, 2147483648
        %v1834 = vxor.u32 %v1826, 2147483648
        %v1835 = vxor.u32 %v1827, 2147483648
        %v1836 = vxor.u32 %v1828, 2147483648
        %v1837 = vxor.u32 %v1829, 2147483648
        %v1838 = vmul.f32 %v1830, 1.442695
        %v1839 = vpow.pop %v1838
        %v1840 = vmul.f32 %v1831, 1.442695
        %v1841 = vpow.pop %v1840
        %v1842 = vmul.f32 %v1832, 1.442695
        %v1843 = vpow.pop %v1842
        %v1844 = vmul.f32 %v1833, 1.442695
        %v1845 = vpow.pop %v1844
        %v1846 = vmul.f32 %v1834, 1.442695
        %v1847 = vpow.pop %v1846
        %v1848 = vmul.f32 %v1835, 1.442695
        %v1849 = vpow.pop %v1848
        %v1850 = vmul.f32 %v1836, 1.442695
        %v1851 = vpow.pop %v1850
        %v1852 = vmul.f32 %v1837, 1.442695
        %v1853 = vpow.pop %v1852
        %v1854 = vadd.f32 %v1839, 1.0
        %v1855 = vadd.f32 %v1841, 1.0
        %v1856 = vadd.f32 %v1843, 1.0
        %v1857 = vadd.f32 %v1845, 1.0
        %v1858 = vadd.f32 %v1847, 1.0
        %v1859 = vadd.f32 %v1849, 1.0
        %v1860 = vadd.f32 %v1851, 1.0
        %v1861 = vadd.f32 %v1853, 1.0
        %v1862 = vrcp.pop %v1854
        %v1863 = vmul.f32 1.0, %v1862
        %v1864 = vrcp.pop %v1855
        %v1865 = vmul.f32 1.0, %v1864
        %v1866 = vrcp.pop %v1856
        %v1867 = vmul.f32 1.0, %v1866
        %v1868 = vrcp.pop %v1857
        %v1869 = vmul.f32 1.0, %v1868
        %v1870 = vrcp.pop %v1858
        %v1871 = vmul.f32 1.0, %v1870
        %v1872 = vrcp.pop %v1859
        %v1873 = vmul.f32 1.0, %v1872
        %v1874 = vrcp.pop %v1860
        %v1875 = vmul.f32 1.0, %v1874
        %v1876 = vrcp.pop %v1861
        %v1877 = vmul.f32 1.0, %v1876
        %v1878 = vmul.f32 %v1867, 2.0
        %v1879 = vmul.f32 %v1875, 2.0
        %v1880 = vsub.f32 %v1878, 1.0
        %v1881 = vsub.f32 %v1879, 1.0
        %v1882 = vmul.f32 %v1865, %v1714
        %v1883 = vmul.f32 %v1873, %v1715
        %v1884 = vmul.f32 %v1863, %v1880
        %v1885 = vmul.f32 %v1871, %v1881
        %v1886 = vadd.f32 %v1882, %v1884
        %v1887 = vadd.f32 %v1883, %v1885
        %v1888 = vtanh.pop %v1886
        %v1889 = vtanh.pop %v1887
        %v1890 = vmul.f32 %v1869, %v1888
        %v1891 = vmul.f32 %v1877, %v1889
        %v1892 = vpack.c.bf16 %v1891, %v1890
        %s1893 = scalar_lea.vmem [#allocation3], 24
        %1894 = vst [vmem:[%s1893] sm:$0xff] %v1892
        %s1895 = scalar_lea.vmem [#allocation2], 128
        %v1896 = vld [vmem:[%s1895] sm:$0xff]
        %v1897 = vld [vmem:[%s1895 + $0x8] sm:$0xff]
        %v1898 = vld [vmem:[%s1895 + $0x10] sm:$0xff]
        %v1899 = vld [vmem:[%s1895 + $0x18] sm:$0xff]
        %v1900 = vunpack.c.l.bf16 %v1896
        %v1901 = vunpack.c.l.bf16 %v1897
        %v1902 = vunpack.c.l.bf16 %v1898
        %v1903 = vunpack.c.l.bf16 %v1899
        %v1904 = vunpack.c.h.bf16 %v1896
        %v1905 = vunpack.c.h.bf16 %v1897
        %v1906 = vunpack.c.h.bf16 %v1898
        %v1907 = vunpack.c.h.bf16 %v1899
        %1908 = vmatprep.subr.bf16.mxu0 %v1158
        %1909 = vmatpush1.bf16.msra.mxu0 %v1157
        %1910 = vmatprep.subr.bf16.mxu0 %v1162
        %1911 = vmatpush1.bf16.msra.mxu0 %v1161
        %1912 = vmatprep.subr.bf16.mxu0 %v1166
        %1913 = vmatpush1.bf16.msra.mxu0 %v1165
        %1914 = vmatprep.subr.bf16.mxu0 %v1170
        %1915 = vmatpush1.bf16.msra.mxu0 %v1169
        %1916 = vmatprep.subr.bf16.mxu0 %v1174
        %1917 = vmatpush1.bf16.msra.mxu0 %v1173
        %1918 = vmatprep.subr.bf16.mxu0 %v1178
        %1919 = vmatpush1.bf16.msra.mxu0 %v1177
        %1920 = vmatprep.subr.bf16.mxu0 %v1182
        %1921 = vmatpush1.bf16.msra.mxu0 %v1181
        %1922 = vmatprep.subr.bf16.mxu0 %v1186
        %1923 = vmatpush1.bf16.msra.mxu0 %v1185
        %1924 = vmatprep.subr.bf16.mxu0 0
        %1925 = vmatpush1.bf16.msra.mxu0 0
        %1926 = vmatprep.subr.bf16.mxu0 0
        %1927 = vmatpush1.bf16.msra.mxu0 0
        %1928 = vmatprep.subr.bf16.mxu0 0
        %1929 = vmatpush1.bf16.msra.mxu0 0
        %1930 = vmatprep.subr.bf16.mxu0 0
        %1931 = vmatpush1.bf16.msra.mxu0 0
        %1932 = vmatprep.subr.bf16.mxu0 0
        %1933 = vmatpush1.bf16.msra.mxu0 0
        %1934 = vmatprep.subr.bf16.mxu0 0
        %1935 = vmatpush1.bf16.msra.mxu0 0
        %1936 = vmatprep.subr.bf16.mxu0 0
        %1937 = vmatpush1.bf16.msra.mxu0 0
        %1938 = vmatprep.subr.bf16.mxu0 0
        %1939 = vmatpush1.bf16.msra.mxu0 0
        %1940 = vmatprep.mubr.bf16.mxu0 0
        %1941 = vmatmul.mubr.bf16.gmra.mrb[0].mxu0 %v1892
        %v1942 = vpop.f32.mrb[0].mxu0
        %v1943 = vadd.f32 0.0, %v1942
        %v1944 = vpop.f32.mrb[0].mxu0
        %v1945 = vadd.f32 0.0, %v1944
        %v1946 = vpop.f32.mrb[0].mxu0
        %v1947 = vadd.f32 0.0, %v1946
        %v1948 = vpop.f32.mrb[0].mxu0
        %v1949 = vadd.f32 0.0, %v1948
        %1950 = vdwg.mxu0
        %1951 = vmatprep.subr.bf16.mxu0 %v1160
        %1952 = vmatpush1.bf16.msra.mxu0 %v1159
        %1953 = vmatprep.subr.bf16.mxu0 %v1164
        %1954 = vmatpush1.bf16.msra.mxu0 %v1163
        %1955 = vmatprep.subr.bf16.mxu0 %v1168
        %1956 = vmatpush1.bf16.msra.mxu0 %v1167
        %1957 = vmatprep.subr.bf16.mxu0 %v1172
        %1958 = vmatpush1.bf16.msra.mxu0 %v1171
        %1959 = vmatprep.subr.bf16.mxu0 %v1176
        %1960 = vmatpush1.bf16.msra.mxu0 %v1175
        %1961 = vmatprep.subr.bf16.mxu0 %v1180
        %1962 = vmatpush1.bf16.msra.mxu0 %v1179
        %1963 = vmatprep.subr.bf16.mxu0 %v1184
        %1964 = vmatpush1.bf16.msra.mxu0 %v1183
        %1965 = vmatprep.subr.bf16.mxu0 %v1188
        %1966 = vmatpush1.bf16.msra.mxu0 %v1187
        %1967 = vmatprep.subr.bf16.mxu0 0
        %1968 = vmatpush1.bf16.msra.mxu0 0
        %1969 = vmatprep.subr.bf16.mxu0 0
        %1970 = vmatpush1.bf16.msra.mxu0 0
        %1971 = vmatprep.subr.bf16.mxu0 0
        %1972 = vmatpush1.bf16.msra.mxu0 0
        %1973 = vmatprep.subr.bf16.mxu0 0
        %1974 = vmatpush1.bf16.msra.mxu0 0
        %1975 = vmatprep.subr.bf16.mxu0 0
        %1976 = vmatpush1.bf16.msra.mxu0 0
        %1977 = vmatprep.subr.bf16.mxu0 0
        %1978 = vmatpush1.bf16.msra.mxu0 0
        %1979 = vmatprep.subr.bf16.mxu0 0
        %1980 = vmatpush1.bf16.msra.mxu0 0
        %1981 = vmatprep.subr.bf16.mxu0 0
        %1982 = vmatpush1.bf16.msra.mxu0 0
        %1983 = vmatprep.mubr.bf16.mxu0 0
        %1984 = vmatmul.mubr.bf16.gmra.mrb[0].mxu0 %v1892
        %v1985 = vpop.f32.mrb[0].mxu0
        %v1986 = vadd.f32 0.0, %v1985
        %v1987 = vpop.f32.mrb[0].mxu0
        %v1988 = vadd.f32 0.0, %v1987
        %v1989 = vpop.f32.mrb[0].mxu0
        %v1990 = vadd.f32 0.0, %v1989
        %v1991 = vpop.f32.mrb[0].mxu0
        %v1992 = vadd.f32 0.0, %v1991
        %1993 = vdwg.mxu0
        %v1994 = vadd.f32 %v1900, %v1943
        %v1995 = vadd.f32 %v1901, %v1945
        %v1996 = vadd.f32 %v1902, %v1986
        %v1997 = vadd.f32 %v1903, %v1988
        %v1998 = vadd.f32 %v1904, %v1947
        %v1999 = vadd.f32 %v1905, %v1949
        %v2000 = vadd.f32 %v1906, %v1990
        %v2001 = vadd.f32 %v1907, %v1992
        %v2002 = vxor.u32 %v1994, 2147483648
        %v2003 = vxor.u32 %v1995, 2147483648
        %v2004 = vxor.u32 %v1996, 2147483648
        %v2005 = vxor.u32 %v1997, 2147483648
        %v2006 = vxor.u32 %v1998, 2147483648
        %v2007 = vxor.u32 %v1999, 2147483648
        %v2008 = vxor.u32 %v2000, 2147483648
        %v2009 = vxor.u32 %v2001, 2147483648
        %v2010 = vmul.f32 %v2002, 1.442695
        %v2011 = vpow.pop %v2010
        %v2012 = vmul.f32 %v2003, 1.442695
        %v2013 = vpow.pop %v2012
        %v2014 = vmul.f32 %v2004, 1.442695
        %v2015 = vpow.pop %v2014
        %v2016 = vmul.f32 %v2005, 1.442695
        %v2017 = vpow.pop %v2016
        %v2018 = vmul.f32 %v2006, 1.442695
        %v2019 = vpow.pop %v2018
        %v2020 = vmul.f32 %v2007, 1.442695
        %v2021 = vpow.pop %v2020
        %v2022 = vmul.f32 %v2008, 1.442695
        %v2023 = vpow.pop %v2022
        %v2024 = vmul.f32 %v2009, 1.442695
        %v2025 = vpow.pop %v2024
        %v2026 = vadd.f32 %v2011, 1.0
        %v2027 = vadd.f32 %v2013, 1.0
        %v2028 = vadd.f32 %v2015, 1.0
        %v2029 = vadd.f32 %v2017, 1.0
        %v2030 = vadd.f32 %v2019, 1.0
        %v2031 = vadd.f32 %v2021, 1.0
        %v2032 = vadd.f32 %v2023, 1.0
        %v2033 = vadd.f32 %v2025, 1.0
        %v2034 = vrcp.pop %v2026
        %v2035 = vmul.f32 1.0, %v2034
        %v2036 = vrcp.pop %v2027
        %v2037 = vmul.f32 1.0, %v2036
        %v2038 = vrcp.pop %v2028
        %v2039 = vmul.f32 1.0, %v2038
        %v2040 = vrcp.pop %v2029
        %v2041 = vmul.f32 1.0, %v2040
        %v2042 = vrcp.pop %v2030
        %v2043 = vmul.f32 1.0, %v2042
        %v2044 = vrcp.pop %v2031
        %v2045 = vmul.f32 1.0, %v2044
        %v2046 = vrcp.pop %v2032
        %v2047 = vmul.f32 1.0, %v2046
        %v2048 = vrcp.pop %v2033
        %v2049 = vmul.f32 1.0, %v2048
        %v2050 = vmul.f32 %v2039, 2.0
        %v2051 = vmul.f32 %v2047, 2.0
        %v2052 = vsub.f32 %v2050, 1.0
        %v2053 = vsub.f32 %v2051, 1.0
        %v2054 = vmul.f32 %v2037, %v1886
        %v2055 = vmul.f32 %v2045, %v1887
        %v2056 = vmul.f32 %v2035, %v2052
        %v2057 = vmul.f32 %v2043, %v2053
        %v2058 = vadd.f32 %v2054, %v2056
        %v2059 = vadd.f32 %v2055, %v2057
        %v2060 = vtanh.pop %v2058
        %v2061 = vtanh.pop %v2059
        %v2062 = vmul.f32 %v2041, %v2060
        %v2063 = vmul.f32 %v2049, %v2061
        %v2064 = vpack.c.bf16 %v2063, %v2062
        %s2065 = scalar_lea.vmem [#allocation3], 32
        %2066 = vst [vmem:[%s2065] sm:$0xff] %v2064
        %s2067 = scalar_lea.vmem [#allocation2], 160
        %v2068 = vld [vmem:[%s2067] sm:$0xff]
        %v2069 = vld [vmem:[%s2067 + $0x8] sm:$0xff]
        %v2070 = vld [vmem:[%s2067 + $0x10] sm:$0xff]
        %v2071 = vld [vmem:[%s2067 + $0x18] sm:$0xff]
        %v2072 = vunpack.c.l.bf16 %v2068
        %v2073 = vunpack.c.l.bf16 %v2069
        %v2074 = vunpack.c.l.bf16 %v2070
        %v2075 = vunpack.c.l.bf16 %v2071
        %v2076 = vunpack.c.h.bf16 %v2068
        %v2077 = vunpack.c.h.bf16 %v2069
        %v2078 = vunpack.c.h.bf16 %v2070
        %v2079 = vunpack.c.h.bf16 %v2071
        %2080 = vmatprep.subr.bf16.mxu0 %v1158
        %2081 = vmatpush1.bf16.msra.mxu0 %v1157
        %2082 = vmatprep.subr.bf16.mxu0 %v1162
        %2083 = vmatpush1.bf16.msra.mxu0 %v1161
        %2084 = vmatprep.subr.bf16.mxu0 %v1166
        %2085 = vmatpush1.bf16.msra.mxu0 %v1165
        %2086 = vmatprep.subr.bf16.mxu0 %v1170
        %2087 = vmatpush1.bf16.msra.mxu0 %v1169
        %2088 = vmatprep.subr.bf16.mxu0 %v1174
        %2089 = vmatpush1.bf16.msra.mxu0 %v1173
        %2090 = vmatprep.subr.bf16.mxu0 %v1178
        %2091 = vmatpush1.bf16.msra.mxu0 %v1177
        %2092 = vmatprep.subr.bf16.mxu0 %v1182
        %2093 = vmatpush1.bf16.msra.mxu0 %v1181
        %2094 = vmatprep.subr.bf16.mxu0 %v1186
        %2095 = vmatpush1.bf16.msra.mxu0 %v1185
        %2096 = vmatprep.subr.bf16.mxu0 0
        %2097 = vmatpush1.bf16.msra.mxu0 0
        %2098 = vmatprep.subr.bf16.mxu0 0
        %2099 = vmatpush1.bf16.msra.mxu0 0
        %2100 = vmatprep.subr.bf16.mxu0 0
        %2101 = vmatpush1.bf16.msra.mxu0 0
        %2102 = vmatprep.subr.bf16.mxu0 0
        %2103 = vmatpush1.bf16.msra.mxu0 0
        %2104 = vmatprep.subr.bf16.mxu0 0
        %2105 = vmatpush1.bf16.msra.mxu0 0
        %2106 = vmatprep.subr.bf16.mxu0 0
        %2107 = vmatpush1.bf16.msra.mxu0 0
        %2108 = vmatprep.subr.bf16.mxu0 0
        %2109 = vmatpush1.bf16.msra.mxu0 0
        %2110 = vmatprep.subr.bf16.mxu0 0
        %2111 = vmatpush1.bf16.msra.mxu0 0
        %2112 = vmatprep.mubr.bf16.mxu0 0
        %2113 = vmatmul.mubr.bf16.gmra.mrb[0].mxu0 %v2064
        %v2114 = vpop.f32.mrb[0].mxu0
        %v2115 = vadd.f32 0.0, %v2114
        %v2116 = vpop.f32.mrb[0].mxu0
        %v2117 = vadd.f32 0.0, %v2116
        %v2118 = vpop.f32.mrb[0].mxu0
        %v2119 = vadd.f32 0.0, %v2118
        %v2120 = vpop.f32.mrb[0].mxu0
        %v2121 = vadd.f32 0.0, %v2120
        %2122 = vdwg.mxu0
        %2123 = vmatprep.subr.bf16.mxu0 %v1160
        %2124 = vmatpush1.bf16.msra.mxu0 %v1159
        %2125 = vmatprep.subr.bf16.mxu0 %v1164
        %2126 = vmatpush1.bf16.msra.mxu0 %v1163
        %2127 = vmatprep.subr.bf16.mxu0 %v1168
        %2128 = vmatpush1.bf16.msra.mxu0 %v1167
        %2129 = vmatprep.subr.bf16.mxu0 %v1172
        %2130 = vmatpush1.bf16.msra.mxu0 %v1171
        %2131 = vmatprep.subr.bf16.mxu0 %v1176
        %2132 = vmatpush1.bf16.msra.mxu0 %v1175
        %2133 = vmatprep.subr.bf16.mxu0 %v1180
        %2134 = vmatpush1.bf16.msra.mxu0 %v1179
        %2135 = vmatprep.subr.bf16.mxu0 %v1184
        %2136 = vmatpush1.bf16.msra.mxu0 %v1183
        %2137 = vmatprep.subr.bf16.mxu0 %v1188
        %2138 = vmatpush1.bf16.msra.mxu0 %v1187
        %2139 = vmatprep.subr.bf16.mxu0 0
        %2140 = vmatpush1.bf16.msra.mxu0 0
        %2141 = vmatprep.subr.bf16.mxu0 0
        %2142 = vmatpush1.bf16.msra.mxu0 0
        %2143 = vmatprep.subr.bf16.mxu0 0
        %2144 = vmatpush1.bf16.msra.mxu0 0
        %2145 = vmatprep.subr.bf16.mxu0 0
        %2146 = vmatpush1.bf16.msra.mxu0 0
        %2147 = vmatprep.subr.bf16.mxu0 0
        %2148 = vmatpush1.bf16.msra.mxu0 0
        %2149 = vmatprep.subr.bf16.mxu0 0
        %2150 = vmatpush1.bf16.msra.mxu0 0
        %2151 = vmatprep.subr.bf16.mxu0 0
        %2152 = vmatpush1.bf16.msra.mxu0 0
        %2153 = vmatprep.subr.bf16.mxu0 0
        %2154 = vmatpush1.bf16.msra.mxu0 0
        %2155 = vmatprep.mubr.bf16.mxu0 0
        %2156 = vmatmul.mubr.bf16.gmra.mrb[0].mxu0 %v2064
        %v2157 = vpop.f32.mrb[0].mxu0
        %v2158 = vadd.f32 0.0, %v2157
        %v2159 = vpop.f32.mrb[0].mxu0
        %v2160 = vadd.f32 0.0, %v2159
        %v2161 = vpop.f32.mrb[0].mxu0
        %v2162 = vadd.f32 0.0, %v2161
        %v2163 = vpop.f32.mrb[0].mxu0
        %v2164 = vadd.f32 0.0, %v2163
        %2165 = vdwg.mxu0
        %v2166 = vadd.f32 %v2072, %v2115
        %v2167 = vadd.f32 %v2073, %v2117
        %v2168 = vadd.f32 %v2074, %v2158
        %v2169 = vadd.f32 %v2075, %v2160
        %v2170 = vadd.f32 %v2076, %v2119
        %v2171 = vadd.f32 %v2077, %v2121
        %v2172 = vadd.f32 %v2078, %v2162
        %v2173 = vadd.f32 %v2079, %v2164
        %v2174 = vxor.u32 %v2166, 2147483648
        %v2175 = vxor.u32 %v2167, 2147483648
        %v2176 = vxor.u32 %v2168, 2147483648
        %v2177 = vxor.u32 %v2169, 2147483648
        %v2178 = vxor.u32 %v2170, 2147483648
        %v2179 = vxor.u32 %v2171, 2147483648
        %v2180 = vxor.u32 %v2172, 2147483648
        %v2181 = vxor.u32 %v2173, 2147483648
        %v2182 = vmul.f32 %v2174, 1.442695
        %v2183 = vpow.pop %v2182
        %v2184 = vmul.f32 %v2175, 1.442695
        %v2185 = vpow.pop %v2184
        %v2186 = vmul.f32 %v2176, 1.442695
        %v2187 = vpow.pop %v2186
        %v2188 = vmul.f32 %v2177, 1.442695
        %v2189 = vpow.pop %v2188
        %v2190 = vmul.f32 %v2178, 1.442695
        %v2191 = vpow.pop %v2190
        %v2192 = vmul.f32 %v2179, 1.442695
        %v2193 = vpow.pop %v2192
        %v2194 = vmul.f32 %v2180, 1.442695
        %v2195 = vpow.pop %v2194
        %v2196 = vmul.f32 %v2181, 1.442695
        %v2197 = vpow.pop %v2196
        %v2198 = vadd.f32 %v2183, 1.0
        %v2199 = vadd.f32 %v2185, 1.0
        %v2200 = vadd.f32 %v2187, 1.0
        %v2201 = vadd.f32 %v2189, 1.0
        %v2202 = vadd.f32 %v2191, 1.0
        %v2203 = vadd.f32 %v2193, 1.0
        %v2204 = vadd.f32 %v2195, 1.0
        %v2205 = vadd.f32 %v2197, 1.0
        %v2206 = vrcp.pop %v2198
        %v2207 = vmul.f32 1.0, %v2206
        %v2208 = vrcp.pop %v2199
        %v2209 = vmul.f32 1.0, %v2208
        %v2210 = vrcp.pop %v2200
        %v2211 = vmul.f32 1.0, %v2210
        %v2212 = vrcp.pop %v2201
        %v2213 = vmul.f32 1.0, %v2212
        %v2214 = vrcp.pop %v2202
        %v2215 = vmul.f32 1.0, %v2214
        %v2216 = vrcp.pop %v2203
        %v2217 = vmul.f32 1.0, %v2216
        %v2218 = vrcp.pop %v2204
        %v2219 = vmul.f32 1.0, %v2218
        %v2220 = vrcp.pop %v2205
        %v2221 = vmul.f32 1.0, %v2220
        %v2222 = vmul.f32 %v2211, 2.0
        %v2223 = vmul.f32 %v2219, 2.0
        %v2224 = vsub.f32 %v2222, 1.0
        %v2225 = vsub.f32 %v2223, 1.0
        %v2226 = vmul.f32 %v2209, %v2058
        %v2227 = vmul.f32 %v2217, %v2059
        %v2228 = vmul.f32 %v2207, %v2224
        %v2229 = vmul.f32 %v2215, %v2225
        %v2230 = vadd.f32 %v2226, %v2228
        %v2231 = vadd.f32 %v2227, %v2229
        %v2232 = vtanh.pop %v2230
        %v2233 = vtanh.pop %v2231
        %v2234 = vmul.f32 %v2213, %v2232
        %v2235 = vmul.f32 %v2221, %v2233
        %v2236 = vpack.c.bf16 %v2235, %v2234
        %s2237 = scalar_lea.vmem [#allocation3], 40
        %2238 = vst [vmem:[%s2237] sm:$0xff] %v2236
        %s2239 = scalar_lea.vmem [#allocation2], 192
        %v2240 = vld [vmem:[%s2239] sm:$0xff]
        %v2241 = vld [vmem:[%s2239 + $0x8] sm:$0xff]
        %v2242 = vld [vmem:[%s2239 + $0x10] sm:$0xff]
        %v2243 = vld [vmem:[%s2239 + $0x18] sm:$0xff]
        %v2244 = vunpack.c.l.bf16 %v2240
        %v2245 = vunpack.c.l.bf16 %v2241
        %v2246 = vunpack.c.l.bf16 %v2242
        %v2247 = vunpack.c.l.bf16 %v2243
        %v2248 = vunpack.c.h.bf16 %v2240
        %v2249 = vunpack.c.h.bf16 %v2241
        %v2250 = vunpack.c.h.bf16 %v2242
        %v2251 = vunpack.c.h.bf16 %v2243
        %2252 = vmatprep.subr.bf16.mxu0 %v1158
        %2253 = vmatpush1.bf16.msra.mxu0 %v1157
        %2254 = vmatprep.subr.bf16.mxu0 %v1162
        %2255 = vmatpush1.bf16.msra.mxu0 %v1161
        %2256 = vmatprep.subr.bf16.mxu0 %v1166
        %2257 = vmatpush1.bf16.msra.mxu0 %v1165
        %2258 = vmatprep.subr.bf16.mxu0 %v1170
        %2259 = vmatpush1.bf16.msra.mxu0 %v1169
        %2260 = vmatprep.subr.bf16.mxu0 %v1174
        %2261 = vmatpush1.bf16.msra.mxu0 %v1173
        %2262 = vmatprep.subr.bf16.mxu0 %v1178
        %2263 = vmatpush1.bf16.msra.mxu0 %v1177
        %2264 = vmatprep.subr.bf16.mxu0 %v1182
        %2265 = vmatpush1.bf16.msra.mxu0 %v1181
        %2266 = vmatprep.subr.bf16.mxu0 %v1186
        %2267 = vmatpush1.bf16.msra.mxu0 %v1185
        %2268 = vmatprep.subr.bf16.mxu0 0
        %2269 = vmatpush1.bf16.msra.mxu0 0
        %2270 = vmatprep.subr.bf16.mxu0 0
        %2271 = vmatpush1.bf16.msra.mxu0 0
        %2272 = vmatprep.subr.bf16.mxu0 0
        %2273 = vmatpush1.bf16.msra.mxu0 0
        %2274 = vmatprep.subr.bf16.mxu0 0
        %2275 = vmatpush1.bf16.msra.mxu0 0
        %2276 = vmatprep.subr.bf16.mxu0 0
        %2277 = vmatpush1.bf16.msra.mxu0 0
        %2278 = vmatprep.subr.bf16.mxu0 0
        %2279 = vmatpush1.bf16.msra.mxu0 0
        %2280 = vmatprep.subr.bf16.mxu0 0
        %2281 = vmatpush1.bf16.msra.mxu0 0
        %2282 = vmatprep.subr.bf16.mxu0 0
        %2283 = vmatpush1.bf16.msra.mxu0 0
        %2284 = vmatprep.mubr.bf16.mxu0 0
        %2285 = vmatmul.mubr.bf16.gmra.mrb[0].mxu0 %v2236
        %v2286 = vpop.f32.mrb[0].mxu0
        %v2287 = vadd.f32 0.0, %v2286
        %v2288 = vpop.f32.mrb[0].mxu0
        %v2289 = vadd.f32 0.0, %v2288
        %v2290 = vpop.f32.mrb[0].mxu0
        %v2291 = vadd.f32 0.0, %v2290
        %v2292 = vpop.f32.mrb[0].mxu0
        %v2293 = vadd.f32 0.0, %v2292
        %2294 = vdwg.mxu0
        %2295 = vmatprep.subr.bf16.mxu0 %v1160
        %2296 = vmatpush1.bf16.msra.mxu0 %v1159
        %2297 = vmatprep.subr.bf16.mxu0 %v1164
        %2298 = vmatpush1.bf16.msra.mxu0 %v1163
        %2299 = vmatprep.subr.bf16.mxu0 %v1168
        %2300 = vmatpush1.bf16.msra.mxu0 %v1167
        %2301 = vmatprep.subr.bf16.mxu0 %v1172
        %2302 = vmatpush1.bf16.msra.mxu0 %v1171
        %2303 = vmatprep.subr.bf16.mxu0 %v1176
        %2304 = vmatpush1.bf16.msra.mxu0 %v1175
        %2305 = vmatprep.subr.bf16.mxu0 %v1180
        %2306 = vmatpush1.bf16.msra.mxu0 %v1179
        %2307 = vmatprep.subr.bf16.mxu0 %v1184
        %2308 = vmatpush1.bf16.msra.mxu0 %v1183
        %2309 = vmatprep.subr.bf16.mxu0 %v1188
        %2310 = vmatpush1.bf16.msra.mxu0 %v1187
        %2311 = vmatprep.subr.bf16.mxu0 0
        %2312 = vmatpush1.bf16.msra.mxu0 0
        %2313 = vmatprep.subr.bf16.mxu0 0
        %2314 = vmatpush1.bf16.msra.mxu0 0
        %2315 = vmatprep.subr.bf16.mxu0 0
        %2316 = vmatpush1.bf16.msra.mxu0 0
        %2317 = vmatprep.subr.bf16.mxu0 0
        %2318 = vmatpush1.bf16.msra.mxu0 0
        %2319 = vmatprep.subr.bf16.mxu0 0
        %2320 = vmatpush1.bf16.msra.mxu0 0
        %2321 = vmatprep.subr.bf16.mxu0 0
        %2322 = vmatpush1.bf16.msra.mxu0 0
        %2323 = vmatprep.subr.bf16.mxu0 0
        %2324 = vmatpush1.bf16.msra.mxu0 0
        %2325 = vmatprep.subr.bf16.mxu0 0
        %2326 = vmatpush1.bf16.msra.mxu0 0
        %2327 = vmatprep.mubr.bf16.mxu0 0
        %2328 = vmatmul.mubr.bf16.gmra.mrb[0].mxu0 %v2236
        %v2329 = vpop.f32.mrb[0].mxu0
        %v2330 = vadd.f32 0.0, %v2329
        %v2331 = vpop.f32.mrb[0].mxu0
        %v2332 = vadd.f32 0.0, %v2331
        %v2333 = vpop.f32.mrb[0].mxu0
        %v2334 = vadd.f32 0.0, %v2333
        %v2335 = vpop.f32.mrb[0].mxu0
        %v2336 = vadd.f32 0.0, %v2335
        %2337 = vdwg.mxu0
        %v2338 = vadd.f32 %v2244, %v2287
        %v2339 = vadd.f32 %v2245, %v2289
        %v2340 = vadd.f32 %v2246, %v2330
        %v2341 = vadd.f32 %v2247, %v2332
        %v2342 = vadd.f32 %v2248, %v2291
        %v2343 = vadd.f32 %v2249, %v2293
        %v2344 = vadd.f32 %v2250, %v2334
        %v2345 = vadd.f32 %v2251, %v2336
        %v2346 = vxor.u32 %v2338, 2147483648
        %v2347 = vxor.u32 %v2339, 2147483648
        %v2348 = vxor.u32 %v2340, 2147483648
        %v2349 = vxor.u32 %v2341, 2147483648
        %v2350 = vxor.u32 %v2342, 2147483648
        %v2351 = vxor.u32 %v2343, 2147483648
        %v2352 = vxor.u32 %v2344, 2147483648
        %v2353 = vxor.u32 %v2345, 2147483648
        %v2354 = vmul.f32 %v2346, 1.442695
        %v2355 = vpow.pop %v2354
        %v2356 = vmul.f32 %v2347, 1.442695
        %v2357 = vpow.pop %v2356
        %v2358 = vmul.f32 %v2348, 1.442695
        %v2359 = vpow.pop %v2358
        %v2360 = vmul.f32 %v2349, 1.442695
        %v2361 = vpow.pop %v2360
        %v2362 = vmul.f32 %v2350, 1.442695
        %v2363 = vpow.pop %v2362
        %v2364 = vmul.f32 %v2351, 1.442695
        %v2365 = vpow.pop %v2364
        %v2366 = vmul.f32 %v2352, 1.442695
        %v2367 = vpow.pop %v2366
        %v2368 = vmul.f32 %v2353, 1.442695
        %v2369 = vpow.pop %v2368
        %v2370 = vadd.f32 %v2355, 1.0
        %v2371 = vadd.f32 %v2357, 1.0
        %v2372 = vadd.f32 %v2359, 1.0
        %v2373 = vadd.f32 %v2361, 1.0
        %v2374 = vadd.f32 %v2363, 1.0
        %v2375 = vadd.f32 %v2365, 1.0
        %v2376 = vadd.f32 %v2367, 1.0
        %v2377 = vadd.f32 %v2369, 1.0
        %v2378 = vrcp.pop %v2370
        %v2379 = vmul.f32 1.0, %v2378
        %v2380 = vrcp.pop %v2371
        %v2381 = vmul.f32 1.0, %v2380
        %v2382 = vrcp.pop %v2372
        %v2383 = vmul.f32 1.0, %v2382
        %v2384 = vrcp.pop %v2373
        %v2385 = vmul.f32 1.0, %v2384
        %v2386 = vrcp.pop %v2374
        %v2387 = vmul.f32 1.0, %v2386
        %v2388 = vrcp.pop %v2375
        %v2389 = vmul.f32 1.0, %v2388
        %v2390 = vrcp.pop %v2376
        %v2391 = vmul.f32 1.0, %v2390
        %v2392 = vrcp.pop %v2377
        %v2393 = vmul.f32 1.0, %v2392
        %v2394 = vmul.f32 %v2383, 2.0
        %v2395 = vmul.f32 %v2391, 2.0
        %v2396 = vsub.f32 %v2394, 1.0
        %v2397 = vsub.f32 %v2395, 1.0
        %v2398 = vmul.f32 %v2381, %v2230
        %v2399 = vmul.f32 %v2389, %v2231
        %v2400 = vmul.f32 %v2379, %v2396
        %v2401 = vmul.f32 %v2387, %v2397
        %v2402 = vadd.f32 %v2398, %v2400
        %v2403 = vadd.f32 %v2399, %v2401
        %v2404 = vtanh.pop %v2402
        %v2405 = vtanh.pop %v2403
        %v2406 = vmul.f32 %v2385, %v2404
        %v2407 = vmul.f32 %v2393, %v2405
        %v2408 = vpack.c.bf16 %v2407, %v2406
        %s2409 = scalar_lea.vmem [#allocation3], 48
        %2410 = vst [vmem:[%s2409] sm:$0xff] %v2408
        %s2411 = scalar_lea.vmem [#allocation2], 224
        %v2412 = vld [vmem:[%s2411] sm:$0xff]
        %v2413 = vld [vmem:[%s2411 + $0x8] sm:$0xff]
        %v2414 = vld [vmem:[%s2411 + $0x10] sm:$0xff]
        %v2415 = vld [vmem:[%s2411 + $0x18] sm:$0xff]
        %v2416 = vunpack.c.l.bf16 %v2412
        %v2417 = vunpack.c.l.bf16 %v2413
        %v2418 = vunpack.c.l.bf16 %v2414
        %v2419 = vunpack.c.l.bf16 %v2415
        %v2420 = vunpack.c.h.bf16 %v2412
        %v2421 = vunpack.c.h.bf16 %v2413
        %v2422 = vunpack.c.h.bf16 %v2414
        %v2423 = vunpack.c.h.bf16 %v2415
        %2424 = vmatprep.subr.bf16.mxu0 %v1158
        %2425 = vmatpush1.bf16.msra.mxu0 %v1157
        %2426 = vmatprep.subr.bf16.mxu0 %v1162
        %2427 = vmatpush1.bf16.msra.mxu0 %v1161
        %2428 = vmatprep.subr.bf16.mxu0 %v1166
        %2429 = vmatpush1.bf16.msra.mxu0 %v1165
        %2430 = vmatprep.subr.bf16.mxu0 %v1170
        %2431 = vmatpush1.bf16.msra.mxu0 %v1169
        %2432 = vmatprep.subr.bf16.mxu0 %v1174
        %2433 = vmatpush1.bf16.msra.mxu0 %v1173
        %2434 = vmatprep.subr.bf16.mxu0 %v1178
        %2435 = vmatpush1.bf16.msra.mxu0 %v1177
        %2436 = vmatprep.subr.bf16.mxu0 %v1182
        %2437 = vmatpush1.bf16.msra.mxu0 %v1181
        %2438 = vmatprep.subr.bf16.mxu0 %v1186
        %2439 = vmatpush1.bf16.msra.mxu0 %v1185
        %2440 = vmatprep.subr.bf16.mxu0 0
        %2441 = vmatpush1.bf16.msra.mxu0 0
        %2442 = vmatprep.subr.bf16.mxu0 0
        %2443 = vmatpush1.bf16.msra.mxu0 0
        %2444 = vmatprep.subr.bf16.mxu0 0
        %2445 = vmatpush1.bf16.msra.mxu0 0
        %2446 = vmatprep.subr.bf16.mxu0 0
        %2447 = vmatpush1.bf16.msra.mxu0 0
        %2448 = vmatprep.subr.bf16.mxu0 0
        %2449 = vmatpush1.bf16.msra.mxu0 0
        %2450 = vmatprep.subr.bf16.mxu0 0
        %2451 = vmatpush1.bf16.msra.mxu0 0
        %2452 = vmatprep.subr.bf16.mxu0 0
        %2453 = vmatpush1.bf16.msra.mxu0 0
        %2454 = vmatprep.subr.bf16.mxu0 0
        %2455 = vmatpush1.bf16.msra.mxu0 0
        %2456 = vmatprep.mubr.bf16.mxu0 0
        %2457 = vmatmul.mubr.bf16.gmra.mrb[0].mxu0 %v2408
        %v2458 = vpop.f32.mrb[0].mxu0
        %v2459 = vadd.f32 0.0, %v2458
        %v2460 = vpop.f32.mrb[0].mxu0
        %v2461 = vadd.f32 0.0, %v2460
        %v2462 = vpop.f32.mrb[0].mxu0
        %v2463 = vadd.f32 0.0, %v2462
        %v2464 = vpop.f32.mrb[0].mxu0
        %v2465 = vadd.f32 0.0, %v2464
        %2466 = vdwg.mxu0
        %2467 = vmatprep.subr.bf16.mxu0 %v1160
        %2468 = vmatpush1.bf16.msra.mxu0 %v1159
        %2469 = vmatprep.subr.bf16.mxu0 %v1164
        %2470 = vmatpush1.bf16.msra.mxu0 %v1163
        %2471 = vmatprep.subr.bf16.mxu0 %v1168
        %2472 = vmatpush1.bf16.msra.mxu0 %v1167
        %2473 = vmatprep.subr.bf16.mxu0 %v1172
        %2474 = vmatpush1.bf16.msra.mxu0 %v1171
        %2475 = vmatprep.subr.bf16.mxu0 %v1176
        %2476 = vmatpush1.bf16.msra.mxu0 %v1175
        %2477 = vmatprep.subr.bf16.mxu0 %v1180
        %2478 = vmatpush1.bf16.msra.mxu0 %v1179
        %2479 = vmatprep.subr.bf16.mxu0 %v1184
        %2480 = vmatpush1.bf16.msra.mxu0 %v1183
        %2481 = vmatprep.subr.bf16.mxu0 %v1188
        %2482 = vmatpush1.bf16.msra.mxu0 %v1187
        %2483 = vmatprep.subr.bf16.mxu0 0
        %2484 = vmatpush1.bf16.msra.mxu0 0
        %2485 = vmatprep.subr.bf16.mxu0 0
        %2486 = vmatpush1.bf16.msra.mxu0 0
        %2487 = vmatprep.subr.bf16.mxu0 0
        %2488 = vmatpush1.bf16.msra.mxu0 0
        %2489 = vmatprep.subr.bf16.mxu0 0
        %2490 = vmatpush1.bf16.msra.mxu0 0
        %2491 = vmatprep.subr.bf16.mxu0 0
        %2492 = vmatpush1.bf16.msra.mxu0 0
        %2493 = vmatprep.subr.bf16.mxu0 0
        %2494 = vmatpush1.bf16.msra.mxu0 0
        %2495 = vmatprep.subr.bf16.mxu0 0
        %2496 = vmatpush1.bf16.msra.mxu0 0
        %2497 = vmatprep.subr.bf16.mxu0 0
        %2498 = vmatpush1.bf16.msra.mxu0 0
        %2499 = vmatprep.mubr.bf16.mxu0 0
        %2500 = vmatmul.mubr.bf16.gmra.mrb[0].mxu0 %v2408
        %v2501 = vpop.f32.mrb[0].mxu0
        %v2502 = vadd.f32 0.0, %v2501
        %v2503 = vpop.f32.mrb[0].mxu0
        %v2504 = vadd.f32 0.0, %v2503
        %v2505 = vpop.f32.mrb[0].mxu0
        %v2506 = vadd.f32 0.0, %v2505
        %v2507 = vpop.f32.mrb[0].mxu0
        %v2508 = vadd.f32 0.0, %v2507
        %2509 = vdwg.mxu0
        %v2510 = vadd.f32 %v2416, %v2459
        %v2511 = vadd.f32 %v2417, %v2461
        %v2512 = vadd.f32 %v2418, %v2502
        %v2513 = vadd.f32 %v2419, %v2504
        %v2514 = vadd.f32 %v2420, %v2463
        %v2515 = vadd.f32 %v2421, %v2465
        %v2516 = vadd.f32 %v2422, %v2506
        %v2517 = vadd.f32 %v2423, %v2508
        %v2518 = vxor.u32 %v2510, 2147483648
        %v2519 = vxor.u32 %v2511, 2147483648
        %v2520 = vxor.u32 %v2512, 2147483648
        %v2521 = vxor.u32 %v2513, 2147483648
        %v2522 = vxor.u32 %v2514, 2147483648
        %v2523 = vxor.u32 %v2515, 2147483648
        %v2524 = vxor.u32 %v2516, 2147483648
        %v2525 = vxor.u32 %v2517, 2147483648
        %v2526 = vmul.f32 %v2518, 1.442695
        %v2527 = vpow.pop %v2526
        %v2528 = vmul.f32 %v2519, 1.442695
        %v2529 = vpow.pop %v2528
        %v2530 = vmul.f32 %v2520, 1.442695
        %v2531 = vpow.pop %v2530
        %v2532 = vmul.f32 %v2521, 1.442695
        %v2533 = vpow.pop %v2532
        %v2534 = vmul.f32 %v2522, 1.442695
        %v2535 = vpow.pop %v2534
        %v2536 = vmul.f32 %v2523, 1.442695
        %v2537 = vpow.pop %v2536
        %v2538 = vmul.f32 %v2524, 1.442695
        %v2539 = vpow.pop %v2538
        %v2540 = vmul.f32 %v2525, 1.442695
        %v2541 = vpow.pop %v2540
        %v2542 = vadd.f32 %v2527, 1.0
        %v2543 = vadd.f32 %v2529, 1.0
        %v2544 = vadd.f32 %v2531, 1.0
        %v2545 = vadd.f32 %v2533, 1.0
        %v2546 = vadd.f32 %v2535, 1.0
        %v2547 = vadd.f32 %v2537, 1.0
        %v2548 = vadd.f32 %v2539, 1.0
        %v2549 = vadd.f32 %v2541, 1.0
        %v2550 = vrcp.pop %v2542
        %v2551 = vmul.f32 1.0, %v2550
        %v2552 = vrcp.pop %v2543
        %v2553 = vmul.f32 1.0, %v2552
        %v2554 = vrcp.pop %v2544
        %v2555 = vmul.f32 1.0, %v2554
        %v2556 = vrcp.pop %v2545
        %v2557 = vmul.f32 1.0, %v2556
        %v2558 = vrcp.pop %v2546
        %v2559 = vmul.f32 1.0, %v2558
        %v2560 = vrcp.pop %v2547
        %v2561 = vmul.f32 1.0, %v2560
        %v2562 = vrcp.pop %v2548
        %v2563 = vmul.f32 1.0, %v2562
        %v2564 = vrcp.pop %v2549
        %v2565 = vmul.f32 1.0, %v2564
        %v2566 = vmul.f32 %v2555, 2.0
        %v2567 = vmul.f32 %v2563, 2.0
        %v2568 = vsub.f32 %v2566, 1.0
        %v2569 = vsub.f32 %v2567, 1.0
        %v2570 = vmul.f32 %v2553, %v2402
        %v2571 = vmul.f32 %v2561, %v2403
        %v2572 = vmul.f32 %v2551, %v2568
        %v2573 = vmul.f32 %v2559, %v2569
        %v2574 = vadd.f32 %v2570, %v2572
        %v2575 = vadd.f32 %v2571, %v2573
        %v2576 = vtanh.pop %v2574
        %v2577 = vtanh.pop %v2575
        %v2578 = vmul.f32 %v2557, %v2576
        %v2579 = vmul.f32 %v2565, %v2577
        %v2580 = vpack.c.bf16 %v2579, %v2578
        %s2581 = scalar_lea.vmem [#allocation3], 56
        %2582 = vst [vmem:[%s2581] sm:$0xff] %v2580
        %v2583 = vld [vmem:[%s4] sm:$0xff]
        %v2584 = vld [vmem:[%s4 + $0x8] sm:$0xff]
        %v2585 = vld [vmem:[%s4 + $0x10] sm:$0xff]
        %v2586 = vld [vmem:[%s4 + $0x18] sm:$0xff]
        %v2587 = vld [vmem:[%s4 + $0x20] sm:$0xff]
        %v2588 = vld [vmem:[%s4 + $0x28] sm:$0xff]
        %v2589 = vld [vmem:[%s4 + $0x30] sm:$0xff]
        %v2590 = vld [vmem:[%s4 + $0x38] sm:$0xff]
        %v2591 = vld [vmem:[%s4 + $0x40] sm:$0xff]
        %v2592 = vld [vmem:[%s4 + $0x48] sm:$0xff]
        %v2593 = vld [vmem:[%s4 + $0x50] sm:$0xff]
        %v2594 = vld [vmem:[%s4 + $0x58] sm:$0xff]
        %v2595 = vld [vmem:[%s4 + $0x60] sm:$0xff]
        %v2596 = vld [vmem:[%s4 + $0x68] sm:$0xff]
        %v2597 = vld [vmem:[%s4 + $0x70] sm:$0xff]
        %v2598 = vld [vmem:[%s4 + $0x78] sm:$0xff]
        %v2599 = vld [vmem:[%s4 + $0x80] sm:$0xff]
        %v2600 = vld [vmem:[%s4 + $0x88] sm:$0xff]
        %v2601 = vld [vmem:[%s4 + $0x90] sm:$0xff]
        %v2602 = vld [vmem:[%s4 + $0x98] sm:$0xff]
        %v2603 = vld [vmem:[%s4 + $0xa0] sm:$0xff]
        %v2604 = vld [vmem:[%s4 + $0xa8] sm:$0xff]
        %v2605 = vld [vmem:[%s4 + $0xb0] sm:$0xff]
        %v2606 = vld [vmem:[%s4 + $0xb8] sm:$0xff]
        %v2607 = vld [vmem:[%s4 + $0xc0] sm:$0xff]
        %v2608 = vld [vmem:[%s4 + $0xc8] sm:$0xff]
        %v2609 = vld [vmem:[%s4 + $0xd0] sm:$0xff]
        %v2610 = vld [vmem:[%s4 + $0xd8] sm:$0xff]
        %v2611 = vld [vmem:[%s4 + $0xe0] sm:$0xff]
        %v2612 = vld [vmem:[%s4 + $0xe8] sm:$0xff]
        %v2613 = vld [vmem:[%s4 + $0xf0] sm:$0xff]
        %v2614 = vld [vmem:[%s4 + $0xf8] sm:$0xff]
        %v2615 = vld [vmem:[%s5] sm:$0xff]
        %v2616 = vld [vmem:[%s5 + $0x8] sm:$0xff]
        %v2617 = vld [vmem:[%s5 + $0x10] sm:$0xff]
        %v2618 = vld [vmem:[%s5 + $0x18] sm:$0xff]
        %v2619 = vld [vmem:[%s5 + $0x20] sm:$0xff]
        %v2620 = vld [vmem:[%s5 + $0x28] sm:$0xff]
        %v2621 = vld [vmem:[%s5 + $0x30] sm:$0xff]
        %v2622 = vld [vmem:[%s5 + $0x38] sm:$0xff]
        %v2623 = vld [vmem:[%s5 + $0x40] sm:$0xff]
        %v2624 = vld [vmem:[%s5 + $0x48] sm:$0xff]
        %v2625 = vld [vmem:[%s5 + $0x50] sm:$0xff]
        %v2626 = vld [vmem:[%s5 + $0x58] sm:$0xff]
        %v2627 = vld [vmem:[%s5 + $0x60] sm:$0xff]
        %v2628 = vld [vmem:[%s5 + $0x68] sm:$0xff]
        %v2629 = vld [vmem:[%s5 + $0x70] sm:$0xff]
        %v2630 = vld [vmem:[%s5 + $0x78] sm:$0xff]
        %v2631 = vld [vmem:[%s5 + $0x80] sm:$0xff]
        %v2632 = vld [vmem:[%s5 + $0x88] sm:$0xff]
        %v2633 = vld [vmem:[%s5 + $0x90] sm:$0xff]
        %v2634 = vld [vmem:[%s5 + $0x98] sm:$0xff]
        %v2635 = vld [vmem:[%s5 + $0xa0] sm:$0xff]
        %v2636 = vld [vmem:[%s5 + $0xa8] sm:$0xff]
        %v2637 = vld [vmem:[%s5 + $0xb0] sm:$0xff]
        %v2638 = vld [vmem:[%s5 + $0xb8] sm:$0xff]
        %v2639 = vld [vmem:[%s5 + $0xc0] sm:$0xff]
        %v2640 = vld [vmem:[%s5 + $0xc8] sm:$0xff]
        %v2641 = vld [vmem:[%s5 + $0xd0] sm:$0xff]
        %v2642 = vld [vmem:[%s5 + $0xd8] sm:$0xff]
        %v2643 = vld [vmem:[%s5 + $0xe0] sm:$0xff]
        %v2644 = vld [vmem:[%s5 + $0xe8] sm:$0xff]
        %v2645 = vld [vmem:[%s5 + $0xf0] sm:$0xff]
        %v2646 = vld [vmem:[%s5 + $0xf8] sm:$0xff]
        %v2647 = vld [vmem:[%s6] sm:$0xf]
        %v2648 = vld [vmem:[#allocation3] sm:$0xff]
        %v2649 = vld [vmem:[#allocation3 + $0x8] sm:$0xff]
        %v2650 = vld [vmem:[#allocation3 + $0x10] sm:$0xff]
        %v2651 = vld [vmem:[#allocation3 + $0x18] sm:$0xff]
        %v2652 = vld [vmem:[#allocation3 + $0x20] sm:$0xff]
        %v2653 = vld [vmem:[#allocation3 + $0x28] sm:$0xff]
        %v2654 = vld [vmem:[#allocation3 + $0x30] sm:$0xff]
        %v2655 = vld [vmem:[#allocation3 + $0x38] sm:$0xff]
        %v2657 = vlaneseq
        %v2658 = vshrl.u32 %v2657, 7
        %v2659 = vsub.s32 0, %v2658
        %v2660 = vrot.slane %v2647, %v2659
        %v2661 = vlaneseq
        %v2662 = vshrl.u32 %v2661, 7
        %v2663 = vsub.s32 1, %v2662
        %v2664 = vrot.slane %v2647, %v2663
        %v2665 = vlaneseq
        %v2666 = vshrl.u32 %v2665, 7
        %v2667 = vsub.s32 2, %v2666
        %v2668 = vrot.slane %v2647, %v2667
        %v2669 = vlaneseq
        %v2670 = vshrl.u32 %v2669, 7
        %v2671 = vsub.s32 3, %v2670
        %v2672 = vrot.slane %v2647, %v2671
        %v2709 = vunpack.c.l.b16 %v2583
        %v2710 = vunpack.c.h.b16 %v2583
        %v2711 = vunpack.c.l.b16 %v2584
        %v2712 = vunpack.c.h.b16 %v2584
        %v2713 = vunpack.c.l.b16 %v2585
        %v2714 = vunpack.c.h.b16 %v2585
        %v2715 = vunpack.c.l.b16 %v2586
        %v2716 = vunpack.c.h.b16 %v2586
        %v2717 = vunpack.c.l.b16 %v2587
        %v2718 = vunpack.c.h.b16 %v2587
        %v2719 = vunpack.c.l.b16 %v2588
        %v2720 = vunpack.c.h.b16 %v2588
        %v2721 = vunpack.c.l.b16 %v2589
        %v2722 = vunpack.c.h.b16 %v2589
        %v2723 = vunpack.c.l.b16 %v2590
        %v2724 = vunpack.c.h.b16 %v2590
        %v2725 = vunpack.c.l.b16 %v2591
        %v2726 = vunpack.c.h.b16 %v2591
        %v2727 = vunpack.c.l.b16 %v2592
        %v2728 = vunpack.c.h.b16 %v2592
        %v2729 = vunpack.c.l.b16 %v2593
        %v2730 = vunpack.c.h.b16 %v2593
        %v2731 = vunpack.c.l.b16 %v2594
        %v2732 = vunpack.c.h.b16 %v2594
        %v2733 = vunpack.c.l.b16 %v2595
        %v2734 = vunpack.c.h.b16 %v2595
        %v2735 = vunpack.c.l.b16 %v2596
        %v2736 = vunpack.c.h.b16 %v2596
        %v2737 = vunpack.c.l.b16 %v2597
        %v2738 = vunpack.c.h.b16 %v2597
        %v2739 = vunpack.c.l.b16 %v2598
        %v2740 = vunpack.c.h.b16 %v2598
        %v2741 = vunpack.c.l.b16 %v2599
        %v2742 = vunpack.c.h.b16 %v2599
        %v2743 = vunpack.c.l.b16 %v2600
        %v2744 = vunpack.c.h.b16 %v2600
        %v2745 = vunpack.c.l.b16 %v2601
        %v2746 = vunpack.c.h.b16 %v2601
        %v2747 = vunpack.c.l.b16 %v2602
        %v2748 = vunpack.c.h.b16 %v2602
        %v2749 = vunpack.c.l.b16 %v2603
        %v2750 = vunpack.c.h.b16 %v2603
        %v2751 = vunpack.c.l.b16 %v2604
        %v2752 = vunpack.c.h.b16 %v2604
        %v2753 = vunpack.c.l.b16 %v2605
        %v2754 = vunpack.c.h.b16 %v2605
        %v2755 = vunpack.c.l.b16 %v2606
        %v2756 = vunpack.c.h.b16 %v2606
        %v2757 = vunpack.c.l.b16 %v2607
        %v2758 = vunpack.c.h.b16 %v2607
        %v2759 = vunpack.c.l.b16 %v2608
        %v2760 = vunpack.c.h.b16 %v2608
        %v2761 = vunpack.c.l.b16 %v2609
        %v2762 = vunpack.c.h.b16 %v2609
        %v2763 = vunpack.c.l.b16 %v2610
        %v2764 = vunpack.c.h.b16 %v2610
        %v2765 = vunpack.c.l.b16 %v2611
        %v2766 = vunpack.c.h.b16 %v2611
        %v2767 = vunpack.c.l.b16 %v2612
        %v2768 = vunpack.c.h.b16 %v2612
        %v2769 = vunpack.c.l.b16 %v2613
        %v2770 = vunpack.c.h.b16 %v2613
        %v2771 = vunpack.c.l.b16 %v2614
        %v2772 = vunpack.c.h.b16 %v2614
        %v2773 = vpack.c.b16 %v2713, %v2709
        %v2774 = vpack.c.b16 %v2714, %v2710
        %v2775 = vpack.c.b16 %v2715, %v2711
        %v2776 = vpack.c.b16 %v2716, %v2712
        %v2777 = vpack.c.b16 %v2721, %v2717
        %v2778 = vpack.c.b16 %v2722, %v2718
        %v2779 = vpack.c.b16 %v2723, %v2719
        %v2780 = vpack.c.b16 %v2724, %v2720
        %v2781 = vpack.c.b16 %v2729, %v2725
        %v2782 = vpack.c.b16 %v2730, %v2726
        %v2783 = vpack.c.b16 %v2731, %v2727
        %v2784 = vpack.c.b16 %v2732, %v2728
        %v2785 = vpack.c.b16 %v2737, %v2733
        %v2786 = vpack.c.b16 %v2738, %v2734
        %v2787 = vpack.c.b16 %v2739, %v2735
        %v2788 = vpack.c.b16 %v2740, %v2736
        %v2789 = vpack.c.b16 %v2745, %v2741
        %v2790 = vpack.c.b16 %v2746, %v2742
        %v2791 = vpack.c.b16 %v2747, %v2743
        %v2792 = vpack.c.b16 %v2748, %v2744
        %v2793 = vpack.c.b16 %v2753, %v2749
        %v2794 = vpack.c.b16 %v2754, %v2750
        %v2795 = vpack.c.b16 %v2755, %v2751
        %v2796 = vpack.c.b16 %v2756, %v2752
        %v2797 = vpack.c.b16 %v2761, %v2757
        %v2798 = vpack.c.b16 %v2762, %v2758
        %v2799 = vpack.c.b16 %v2763, %v2759
        %v2800 = vpack.c.b16 %v2764, %v2760
        %v2801 = vpack.c.b16 %v2769, %v2765
        %v2802 = vpack.c.b16 %v2770, %v2766
        %v2803 = vpack.c.b16 %v2771, %v2767
        %v2804 = vpack.c.b16 %v2772, %v2768
        %2837 = vmatprep.subr.bf16.mxu0 %v2774
        %2838 = vmatpush1.bf16.msra.mxu0 %v2773
        %2839 = vmatprep.subr.bf16.mxu0 %v2778
        %2840 = vmatpush1.bf16.msra.mxu0 %v2777
        %2841 = vmatprep.subr.bf16.mxu0 %v2782
        %2842 = vmatpush1.bf16.msra.mxu0 %v2781
        %2843 = vmatprep.subr.bf16.mxu0 %v2786
        %2844 = vmatpush1.bf16.msra.mxu0 %v2785
        %2845 = vmatprep.subr.bf16.mxu0 %v2790
        %2846 = vmatpush1.bf16.msra.mxu0 %v2789
        %2847 = vmatprep.subr.bf16.mxu0 %v2794
        %2848 = vmatpush1.bf16.msra.mxu0 %v2793
        %2849 = vmatprep.subr.bf16.mxu0 %v2798
        %2850 = vmatpush1.bf16.msra.mxu0 %v2797
        %2851 = vmatprep.subr.bf16.mxu0 %v2802
        %2852 = vmatpush1.bf16.msra.mxu0 %v2801
        %2853 = vmatprep.subr.bf16.mxu0 0
        %2854 = vmatpush1.bf16.msra.mxu0 0
        %2855 = vmatprep.subr.bf16.mxu0 0
        %2856 = vmatpush1.bf16.msra.mxu0 0
        %2857 = vmatprep.subr.bf16.mxu0 0
        %2858 = vmatpush1.bf16.msra.mxu0 0
        %2859 = vmatprep.subr.bf16.mxu0 0
        %2860 = vmatpush1.bf16.msra.mxu0 0
        %2861 = vmatprep.subr.bf16.mxu0 0
        %2862 = vmatpush1.bf16.msra.mxu0 0
        %2863 = vmatprep.subr.bf16.mxu0 0
        %2864 = vmatpush1.bf16.msra.mxu0 0
        %2865 = vmatprep.subr.bf16.mxu0 0
        %2866 = vmatpush1.bf16.msra.mxu0 0
        %2867 = vmatprep.subr.bf16.mxu0 0
        %2868 = vmatpush1.bf16.msra.mxu0 0
        %2869 = vmatprep.mubr.bf16.mxu0 0
        %2870 = vmatmul.mubr.bf16.gmra.mrb[0].mxu0 %v2648
        %v2871 = vpop.f32.mrb[0].mxu0
        %v2872 = vadd.f32 %v2660, %v2871
        %v2873 = vpop.f32.mrb[0].mxu0
        %v2874 = vadd.f32 %v2664, %v2873
        %v2875 = vpop.f32.mrb[0].mxu0
        %v2876 = vadd.f32 %v2660, %v2875
        %v2877 = vpop.f32.mrb[0].mxu0
        %v2878 = vadd.f32 %v2664, %v2877
        %2879 = vmatprep.mubr.bf16.mxu0 0
        %2880 = vmatmul.mubr.bf16.gmra.mrb[0].mxu0 %v2649
        %v2881 = vpop.f32.mrb[0].mxu0
        %v2882 = vadd.f32 %v2660, %v2881
        %v2883 = vpop.f32.mrb[0].mxu0
        %v2884 = vadd.f32 %v2664, %v2883
        %v2885 = vpop.f32.mrb[0].mxu0
        %v2886 = vadd.f32 %v2660, %v2885
        %v2887 = vpop.f32.mrb[0].mxu0
        %v2888 = vadd.f32 %v2664, %v2887
        %2889 = vmatprep.mubr.bf16.mxu0 0
        %2890 = vmatmul.mubr.bf16.gmra.mrb[0].mxu0 %v2650
        %v2891 = vpop.f32.mrb[0].mxu0
        %v2892 = vadd.f32 %v2660, %v2891
        %v2893 = vpop.f32.mrb[0].mxu0
        %v2894 = vadd.f32 %v2664, %v2893
        %v2895 = vpop.f32.mrb[0].mxu0
        %v2896 = vadd.f32 %v2660, %v2895
        %v2897 = vpop.f32.mrb[0].mxu0
        %v2898 = vadd.f32 %v2664, %v2897
        %2899 = vmatprep.mubr.bf16.mxu0 0
        %2900 = vmatmul.mubr.bf16.gmra.mrb[0].mxu0 %v2651
        %v2901 = vpop.f32.mrb[0].mxu0
        %v2902 = vadd.f32 %v2660, %v2901
        %v2903 = vpop.f32.mrb[0].mxu0
        %v2904 = vadd.f32 %v2664, %v2903
        %v2905 = vpop.f32.mrb[0].mxu0
        %v2906 = vadd.f32 %v2660, %v2905
        %v2907 = vpop.f32.mrb[0].mxu0
        %v2908 = vadd.f32 %v2664, %v2907
        %2909 = vmatprep.mubr.bf16.mxu0 0
        %2910 = vmatmul.mubr.bf16.gmra.mrb[0].mxu0 %v2652
        %v2911 = vpop.f32.mrb[0].mxu0
        %v2912 = vadd.f32 %v2660, %v2911
        %v2913 = vpop.f32.mrb[0].mxu0
        %v2914 = vadd.f32 %v2664, %v2913
        %v2915 = vpop.f32.mrb[0].mxu0
        %v2916 = vadd.f32 %v2660, %v2915
        %v2917 = vpop.f32.mrb[0].mxu0
        %v2918 = vadd.f32 %v2664, %v2917
        %2919 = vmatprep.mubr.bf16.mxu0 0
        %2920 = vmatmul.mubr.bf16.gmra.mrb[0].mxu0 %v2653
        %v2921 = vpop.f32.mrb[0].mxu0
        %v2922 = vadd.f32 %v2660, %v2921
        %v2923 = vpop.f32.mrb[0].mxu0
        %v2924 = vadd.f32 %v2664, %v2923
        %v2925 = vpop.f32.mrb[0].mxu0
        %v2926 = vadd.f32 %v2660, %v2925
        %v2927 = vpop.f32.mrb[0].mxu0
        %v2928 = vadd.f32 %v2664, %v2927
        %2929 = vmatprep.mubr.bf16.mxu0 0
        %2930 = vmatmul.mubr.bf16.gmra.mrb[0].mxu0 %v2654
        %v2931 = vpop.f32.mrb[0].mxu0
        %v2932 = vadd.f32 %v2660, %v2931
        %v2933 = vpop.f32.mrb[0].mxu0
        %v2934 = vadd.f32 %v2664, %v2933
        %v2935 = vpop.f32.mrb[0].mxu0
        %v2936 = vadd.f32 %v2660, %v2935
        %v2937 = vpop.f32.mrb[0].mxu0
        %v2938 = vadd.f32 %v2664, %v2937
        %2939 = vmatprep.mubr.bf16.mxu0 0
        %2940 = vmatmul.mubr.bf16.gmra.mrb[0].mxu0 %v2655
        %v2941 = vpop.f32.mrb[0].mxu0
        %v2942 = vadd.f32 %v2660, %v2941
        %v2943 = vpop.f32.mrb[0].mxu0
        %v2944 = vadd.f32 %v2664, %v2943
        %v2945 = vpop.f32.mrb[0].mxu0
        %v2946 = vadd.f32 %v2660, %v2945
        %v2947 = vpop.f32.mrb[0].mxu0
        %v2948 = vadd.f32 %v2664, %v2947
        %2949 = vdwg.mxu0
        %2950 = vmatprep.subr.bf16.mxu0 %v2776
        %2951 = vmatpush1.bf16.msra.mxu0 %v2775
        %2952 = vmatprep.subr.bf16.mxu0 %v2780
        %2953 = vmatpush1.bf16.msra.mxu0 %v2779
        %2954 = vmatprep.subr.bf16.mxu0 %v2784
        %2955 = vmatpush1.bf16.msra.mxu0 %v2783
        %2956 = vmatprep.subr.bf16.mxu0 %v2788
        %2957 = vmatpush1.bf16.msra.mxu0 %v2787
        %2958 = vmatprep.subr.bf16.mxu0 %v2792
        %2959 = vmatpush1.bf16.msra.mxu0 %v2791
        %2960 = vmatprep.subr.bf16.mxu0 %v2796
        %2961 = vmatpush1.bf16.msra.mxu0 %v2795
        %2962 = vmatprep.subr.bf16.mxu0 %v2800
        %2963 = vmatpush1.bf16.msra.mxu0 %v2799
        %2964 = vmatprep.subr.bf16.mxu0 %v2804
        %2965 = vmatpush1.bf16.msra.mxu0 %v2803
        %2966 = vmatprep.subr.bf16.mxu0 0
        %2967 = vmatpush1.bf16.msra.mxu0 0
        %2968 = vmatprep.subr.bf16.mxu0 0
        %2969 = vmatpush1.bf16.msra.mxu0 0
        %2970 = vmatprep.subr.bf16.mxu0 0
        %2971 = vmatpush1.bf16.msra.mxu0 0
        %2972 = vmatprep.subr.bf16.mxu0 0
        %2973 = vmatpush1.bf16.msra.mxu0 0
        %2974 = vmatprep.subr.bf16.mxu0 0
        %2975 = vmatpush1.bf16.msra.mxu0 0
        %2976 = vmatprep.subr.bf16.mxu0 0
        %2977 = vmatpush1.bf16.msra.mxu0 0
        %2978 = vmatprep.subr.bf16.mxu0 0
        %2979 = vmatpush1.bf16.msra.mxu0 0
        %2980 = vmatprep.subr.bf16.mxu0 0
        %2981 = vmatpush1.bf16.msra.mxu0 0
        %2982 = vmatprep.mubr.bf16.mxu0 0
        %2983 = vmatmul.mubr.bf16.gmra.mrb[0].mxu0 %v2648
        %v2984 = vpop.f32.mrb[0].mxu0
        %v2985 = vadd.f32 %v2668, %v2984
        %v2986 = vpop.f32.mrb[0].mxu0
        %v2987 = vadd.f32 %v2672, %v2986
        %v2988 = vpop.f32.mrb[0].mxu0
        %v2989 = vadd.f32 %v2668, %v2988
        %v2990 = vpop.f32.mrb[0].mxu0
        %v2991 = vadd.f32 %v2672, %v2990
        %2992 = vmatprep.mubr.bf16.mxu0 0
        %2993 = vmatmul.mubr.bf16.gmra.mrb[0].mxu0 %v2649
        %v2994 = vpop.f32.mrb[0].mxu0
        %v2995 = vadd.f32 %v2668, %v2994
        %v2996 = vpop.f32.mrb[0].mxu0
        %v2997 = vadd.f32 %v2672, %v2996
        %v2998 = vpop.f32.mrb[0].mxu0
        %v2999 = vadd.f32 %v2668, %v2998
        %v3000 = vpop.f32.mrb[0].mxu0
        %v3001 = vadd.f32 %v2672, %v3000
        %3002 = vmatprep.mubr.bf16.mxu0 0
        %3003 = vmatmul.mubr.bf16.gmra.mrb[0].mxu0 %v2650
        %v3004 = vpop.f32.mrb[0].mxu0
        %v3005 = vadd.f32 %v2668, %v3004
        %v3006 = vpop.f32.mrb[0].mxu0
        %v3007 = vadd.f32 %v2672, %v3006
        %v3008 = vpop.f32.mrb[0].mxu0
        %v3009 = vadd.f32 %v2668, %v3008
        %v3010 = vpop.f32.mrb[0].mxu0
        %v3011 = vadd.f32 %v2672, %v3010
        %3012 = vmatprep.mubr.bf16.mxu0 0
        %3013 = vmatmul.mubr.bf16.gmra.mrb[0].mxu0 %v2651
        %v3014 = vpop.f32.mrb[0].mxu0
        %v3015 = vadd.f32 %v2668, %v3014
        %v3016 = vpop.f32.mrb[0].mxu0
        %v3017 = vadd.f32 %v2672, %v3016
        %v3018 = vpop.f32.mrb[0].mxu0
        %v3019 = vadd.f32 %v2668, %v3018
        %v3020 = vpop.f32.mrb[0].mxu0
        %v3021 = vadd.f32 %v2672, %v3020
        %3022 = vmatprep.mubr.bf16.mxu0 0
        %3023 = vmatmul.mubr.bf16.gmra.mrb[0].mxu0 %v2652
        %v3024 = vpop.f32.mrb[0].mxu0
        %v3025 = vadd.f32 %v2668, %v3024
        %v3026 = vpop.f32.mrb[0].mxu0
        %v3027 = vadd.f32 %v2672, %v3026
        %v3028 = vpop.f32.mrb[0].mxu0
        %v3029 = vadd.f32 %v2668, %v3028
        %v3030 = vpop.f32.mrb[0].mxu0
        %v3031 = vadd.f32 %v2672, %v3030
        %3032 = vmatprep.mubr.bf16.mxu0 0
        %3033 = vmatmul.mubr.bf16.gmra.mrb[0].mxu0 %v2653
        %v3034 = vpop.f32.mrb[0].mxu0
        %v3035 = vadd.f32 %v2668, %v3034
        %v3036 = vpop.f32.mrb[0].mxu0
        %v3037 = vadd.f32 %v2672, %v3036
        %v3038 = vpop.f32.mrb[0].mxu0
        %v3039 = vadd.f32 %v2668, %v3038
        %v3040 = vpop.f32.mrb[0].mxu0
        %v3041 = vadd.f32 %v2672, %v3040
        %3042 = vmatprep.mubr.bf16.mxu0 0
        %3043 = vmatmul.mubr.bf16.gmra.mrb[0].mxu0 %v2654
        %v3044 = vpop.f32.mrb[0].mxu0
        %v3045 = vadd.f32 %v2668, %v3044
        %v3046 = vpop.f32.mrb[0].mxu0
        %v3047 = vadd.f32 %v2672, %v3046
        %v3048 = vpop.f32.mrb[0].mxu0
        %v3049 = vadd.f32 %v2668, %v3048
        %v3050 = vpop.f32.mrb[0].mxu0
        %v3051 = vadd.f32 %v2672, %v3050
        %3052 = vmatprep.mubr.bf16.mxu0 0
        %3053 = vmatmul.mubr.bf16.gmra.mrb[0].mxu0 %v2655
        %v3054 = vpop.f32.mrb[0].mxu0
        %v3055 = vadd.f32 %v2668, %v3054
        %v3056 = vpop.f32.mrb[0].mxu0
        %v3057 = vadd.f32 %v2672, %v3056
        %v3058 = vpop.f32.mrb[0].mxu0
        %v3059 = vadd.f32 %v2668, %v3058
        %v3060 = vpop.f32.mrb[0].mxu0
        %v3061 = vadd.f32 %v2672, %v3060
        %3062 = vdwg.mxu0
        %v3063 = vpack.c.bf16 %v2876, %v2872
        %v3064 = vpack.c.bf16 %v2878, %v2874
        %v3065 = vpack.c.bf16 %v2989, %v2985
        %v3066 = vpack.c.bf16 %v2991, %v2987
        %v3067 = vpack.c.bf16 %v2886, %v2882
        %v3068 = vpack.c.bf16 %v2888, %v2884
        %v3069 = vpack.c.bf16 %v2999, %v2995
        %v3070 = vpack.c.bf16 %v3001, %v2997
        %v3071 = vpack.c.bf16 %v2896, %v2892
        %v3072 = vpack.c.bf16 %v2898, %v2894
        %v3073 = vpack.c.bf16 %v3009, %v3005
        %v3074 = vpack.c.bf16 %v3011, %v3007
        %v3075 = vpack.c.bf16 %v2906, %v2902
        %v3076 = vpack.c.bf16 %v2908, %v2904
        %v3077 = vpack.c.bf16 %v3019, %v3015
        %v3078 = vpack.c.bf16 %v3021, %v3017
        %v3079 = vpack.c.bf16 %v2916, %v2912
        %v3080 = vpack.c.bf16 %v2918, %v2914
        %v3081 = vpack.c.bf16 %v3029, %v3025
        %v3082 = vpack.c.bf16 %v3031, %v3027
        %v3083 = vpack.c.bf16 %v2926, %v2922
        %v3084 = vpack.c.bf16 %v2928, %v2924
        %v3085 = vpack.c.bf16 %v3039, %v3035
        %v3086 = vpack.c.bf16 %v3041, %v3037
        %v3087 = vpack.c.bf16 %v2936, %v2932
        %v3088 = vpack.c.bf16 %v2938, %v2934
        %v3089 = vpack.c.bf16 %v3049, %v3045
        %v3090 = vpack.c.bf16 %v3051, %v3047
        %v3091 = vpack.c.bf16 %v2946, %v2942
        %v3092 = vpack.c.bf16 %v2948, %v2944
        %v3093 = vpack.c.bf16 %v3059, %v3055
        %v3094 = vpack.c.bf16 %v3061, %v3057
        %3095 = vst [vmem:[#allocation2] sm:$0xff] %v3063
        %3096 = vst [vmem:[#allocation2 + $0x8] sm:$0xff] %v3064
        %3097 = vst [vmem:[#allocation2 + $0x10] sm:$0xff] %v3065
        %3098 = vst [vmem:[#allocation2 + $0x18] sm:$0xff] %v3066
        %3099 = vst [vmem:[#allocation2 + $0x20] sm:$0xff] %v3067
        %3100 = vst [vmem:[#allocation2 + $0x28] sm:$0xff] %v3068
        %3101 = vst [vmem:[#allocation2 + $0x30] sm:$0xff] %v3069
        %3102 = vst [vmem:[#allocation2 + $0x38] sm:$0xff] %v3070
        %3103 = vst [vmem:[#allocation2 + $0x40] sm:$0xff] %v3071
        %3104 = vst [vmem:[#allocation2 + $0x48] sm:$0xff] %v3072
        %3105 = vst [vmem:[#allocation2 + $0x50] sm:$0xff] %v3073
        %3106 = vst [vmem:[#allocation2 + $0x58] sm:$0xff] %v3074
        %3107 = vst [vmem:[#allocation2 + $0x60] sm:$0xff] %v3075
        %3108 = vst [vmem:[#allocation2 + $0x68] sm:$0xff] %v3076
        %3109 = vst [vmem:[#allocation2 + $0x70] sm:$0xff] %v3077
        %3110 = vst [vmem:[#allocation2 + $0x78] sm:$0xff] %v3078
        %3111 = vst [vmem:[#allocation2 + $0x80] sm:$0xff] %v3079
        %3112 = vst [vmem:[#allocation2 + $0x88] sm:$0xff] %v3080
        %3113 = vst [vmem:[#allocation2 + $0x90] sm:$0xff] %v3081
        %3114 = vst [vmem:[#allocation2 + $0x98] sm:$0xff] %v3082
        %3115 = vst [vmem:[#allocation2 + $0xa0] sm:$0xff] %v3083
        %3116 = vst [vmem:[#allocation2 + $0xa8] sm:$0xff] %v3084
        %3117 = vst [vmem:[#allocation2 + $0xb0] sm:$0xff] %v3085
        %3118 = vst [vmem:[#allocation2 + $0xb8] sm:$0xff] %v3086
        %3119 = vst [vmem:[#allocation2 + $0xc0] sm:$0xff] %v3087
        %3120 = vst [vmem:[#allocation2 + $0xc8] sm:$0xff] %v3088
        %3121 = vst [vmem:[#allocation2 + $0xd0] sm:$0xff] %v3089
        %3122 = vst [vmem:[#allocation2 + $0xd8] sm:$0xff] %v3090
        %3123 = vst [vmem:[#allocation2 + $0xe0] sm:$0xff] %v3091
        %3124 = vst [vmem:[#allocation2 + $0xe8] sm:$0xff] %v3092
        %3125 = vst [vmem:[#allocation2 + $0xf0] sm:$0xff] %v3093
        %3126 = vst [vmem:[#allocation2 + $0xf8] sm:$0xff] %v3094
        %v3127 = vld [vmem:[#allocation2] sm:$0xff]
        %v3128 = vld [vmem:[#allocation2 + $0x8] sm:$0xff]
        %v3129 = vld [vmem:[#allocation2 + $0x10] sm:$0xff]
        %v3130 = vld [vmem:[#allocation2 + $0x18] sm:$0xff]
        %v3131 = vunpack.c.l.bf16 %v3127
        %v3132 = vunpack.c.l.bf16 %v3128
        %v3133 = vunpack.c.l.bf16 %v3129
        %v3134 = vunpack.c.l.bf16 %v3130
        %v3135 = vunpack.c.h.bf16 %v3127
        %v3136 = vunpack.c.h.bf16 %v3128
        %v3137 = vunpack.c.h.bf16 %v3129
        %v3138 = vunpack.c.h.bf16 %v3130
        %v3171 = vunpack.c.l.b16 %v2615
        %v3172 = vunpack.c.h.b16 %v2615
        %v3173 = vunpack.c.l.b16 %v2616
        %v3174 = vunpack.c.h.b16 %v2616
        %v3175 = vunpack.c.l.b16 %v2617
        %v3176 = vunpack.c.h.b16 %v2617
        %v3177 = vunpack.c.l.b16 %v2618
        %v3178 = vunpack.c.h.b16 %v2618
        %v3179 = vunpack.c.l.b16 %v2619
        %v3180 = vunpack.c.h.b16 %v2619
        %v3181 = vunpack.c.l.b16 %v2620
        %v3182 = vunpack.c.h.b16 %v2620
        %v3183 = vunpack.c.l.b16 %v2621
        %v3184 = vunpack.c.h.b16 %v2621
        %v3185 = vunpack.c.l.b16 %v2622
        %v3186 = vunpack.c.h.b16 %v2622
        %v3187 = vunpack.c.l.b16 %v2623
        %v3188 = vunpack.c.h.b16 %v2623
        %v3189 = vunpack.c.l.b16 %v2624
        %v3190 = vunpack.c.h.b16 %v2624
        %v3191 = vunpack.c.l.b16 %v2625
        %v3192 = vunpack.c.h.b16 %v2625
        %v3193 = vunpack.c.l.b16 %v2626
        %v3194 = vunpack.c.h.b16 %v2626
        %v3195 = vunpack.c.l.b16 %v2627
        %v3196 = vunpack.c.h.b16 %v2627
        %v3197 = vunpack.c.l.b16 %v2628
        %v3198 = vunpack.c.h.b16 %v2628
        %v3199 = vunpack.c.l.b16 %v2629
        %v3200 = vunpack.c.h.b16 %v2629
        %v3201 = vunpack.c.l.b16 %v2630
        %v3202 = vunpack.c.h.b16 %v2630
        %v3203 = vunpack.c.l.b16 %v2631
        %v3204 = vunpack.c.h.b16 %v2631
        %v3205 = vunpack.c.l.b16 %v2632
        %v3206 = vunpack.c.h.b16 %v2632
        %v3207 = vunpack.c.l.b16 %v2633
        %v3208 = vunpack.c.h.b16 %v2633
        %v3209 = vunpack.c.l.b16 %v2634
        %v3210 = vunpack.c.h.b16 %v2634
        %v3211 = vunpack.c.l.b16 %v2635
        %v3212 = vunpack.c.h.b16 %v2635
        %v3213 = vunpack.c.l.b16 %v2636
        %v3214 = vunpack.c.h.b16 %v2636
        %v3215 = vunpack.c.l.b16 %v2637
        %v3216 = vunpack.c.h.b16 %v2637
        %v3217 = vunpack.c.l.b16 %v2638
        %v3218 = vunpack.c.h.b16 %v2638
        %v3219 = vunpack.c.l.b16 %v2639
        %v3220 = vunpack.c.h.b16 %v2639
        %v3221 = vunpack.c.l.b16 %v2640
        %v3222 = vunpack.c.h.b16 %v2640
        %v3223 = vunpack.c.l.b16 %v2641
        %v3224 = vunpack.c.h.b16 %v2641
        %v3225 = vunpack.c.l.b16 %v2642
        %v3226 = vunpack.c.h.b16 %v2642
        %v3227 = vunpack.c.l.b16 %v2643
        %v3228 = vunpack.c.h.b16 %v2643
        %v3229 = vunpack.c.l.b16 %v2644
        %v3230 = vunpack.c.h.b16 %v2644
        %v3231 = vunpack.c.l.b16 %v2645
        %v3232 = vunpack.c.h.b16 %v2645
        %v3233 = vunpack.c.l.b16 %v2646
        %v3234 = vunpack.c.h.b16 %v2646
        %v3235 = vpack.c.b16 %v3175, %v3171
        %v3236 = vpack.c.b16 %v3176, %v3172
        %v3237 = vpack.c.b16 %v3177, %v3173
        %v3238 = vpack.c.b16 %v3178, %v3174
        %v3239 = vpack.c.b16 %v3183, %v3179
        %v3240 = vpack.c.b16 %v3184, %v3180
        %v3241 = vpack.c.b16 %v3185, %v3181
        %v3242 = vpack.c.b16 %v3186, %v3182
        %v3243 = vpack.c.b16 %v3191, %v3187
        %v3244 = vpack.c.b16 %v3192, %v3188
        %v3245 = vpack.c.b16 %v3193, %v3189
        %v3246 = vpack.c.b16 %v3194, %v3190
        %v3247 = vpack.c.b16 %v3199, %v3195
        %v3248 = vpack.c.b16 %v3200, %v3196
        %v3249 = vpack.c.b16 %v3201, %v3197
        %v3250 = vpack.c.b16 %v3202, %v3198
        %v3251 = vpack.c.b16 %v3207, %v3203
        %v3252 = vpack.c.b16 %v3208, %v3204
        %v3253 = vpack.c.b16 %v3209, %v3205
        %v3254 = vpack.c.b16 %v3210, %v3206
        %v3255 = vpack.c.b16 %v3215, %v3211
        %v3256 = vpack.c.b16 %v3216, %v3212
        %v3257 = vpack.c.b16 %v3217, %v3213
        %v3258 = vpack.c.b16 %v3218, %v3214
        %v3259 = vpack.c.b16 %v3223, %v3219
        %v3260 = vpack.c.b16 %v3224, %v3220
        %v3261 = vpack.c.b16 %v3225, %v3221
        %v3262 = vpack.c.b16 %v3226, %v3222
        %v3263 = vpack.c.b16 %v3231, %v3227
        %v3264 = vpack.c.b16 %v3232, %v3228
        %v3265 = vpack.c.b16 %v3233, %v3229
        %v3266 = vpack.c.b16 %v3234, %v3230
        %3299 = vmatprep.subr.bf16.mxu0 %v3236
        %3300 = vmatpush1.bf16.msra.mxu0 %v3235
        %3301 = vmatprep.subr.bf16.mxu0 %v3240
        %3302 = vmatpush1.bf16.msra.mxu0 %v3239
        %3303 = vmatprep.subr.bf16.mxu0 %v3244
        %3304 = vmatpush1.bf16.msra.mxu0 %v3243
        %3305 = vmatprep.subr.bf16.mxu0 %v3248
        %3306 = vmatpush1.bf16.msra.mxu0 %v3247
        %3307 = vmatprep.subr.bf16.mxu0 %v3252
        %3308 = vmatpush1.bf16.msra.mxu0 %v3251
        %3309 = vmatprep.subr.bf16.mxu0 %v3256
        %3310 = vmatpush1.bf16.msra.mxu0 %v3255
        %3311 = vmatprep.subr.bf16.mxu0 %v3260
        %3312 = vmatpush1.bf16.msra.mxu0 %v3259
        %3313 = vmatprep.subr.bf16.mxu0 %v3264
        %3314 = vmatpush1.bf16.msra.mxu0 %v3263
        %3315 = vmatprep.subr.bf16.mxu0 0
        %3316 = vmatpush1.bf16.msra.mxu0 0
        %3317 = vmatprep.subr.bf16.mxu0 0
        %3318 = vmatpush1.bf16.msra.mxu0 0
        %3319 = vmatprep.subr.bf16.mxu0 0
        %3320 = vmatpush1.bf16.msra.mxu0 0
        %3321 = vmatprep.subr.bf16.mxu0 0
        %3322 = vmatpush1.bf16.msra.mxu0 0
        %3323 = vmatprep.subr.bf16.mxu0 0
        %3324 = vmatpush1.bf16.msra.mxu0 0
        %3325 = vmatprep.subr.bf16.mxu0 0
        %3326 = vmatpush1.bf16.msra.mxu0 0
        %3327 = vmatprep.subr.bf16.mxu0 0
        %3328 = vmatpush1.bf16.msra.mxu0 0
        %3329 = vmatprep.subr.bf16.mxu0 0
        %3330 = vmatpush1.bf16.msra.mxu0 0
        %3331 = vmatprep.mubr.bf16.mxu0 0
        %3332 = vmatmul.mubr.bf16.gmra.mrb[0].mxu0 0
        %v3333 = vpop.f32.mrb[0].mxu0
        %v3334 = vadd.f32 0.0, %v3333
        %v3335 = vpop.f32.mrb[0].mxu0
        %v3336 = vadd.f32 0.0, %v3335
        %v3337 = vpop.f32.mrb[0].mxu0
        %v3338 = vadd.f32 0.0, %v3337
        %v3339 = vpop.f32.mrb[0].mxu0
        %v3340 = vadd.f32 0.0, %v3339
        %3341 = vdwg.mxu0
        %3342 = vmatprep.subr.bf16.mxu0 %v3238
        %3343 = vmatpush1.bf16.msra.mxu0 %v3237
        %3344 = vmatprep.subr.bf16.mxu0 %v3242
        %3345 = vmatpush1.bf16.msra.mxu0 %v3241
        %3346 = vmatprep.subr.bf16.mxu0 %v3246
        %3347 = vmatpush1.bf16.msra.mxu0 %v3245
        %3348 = vmatprep.subr.bf16.mxu0 %v3250
        %3349 = vmatpush1.bf16.msra.mxu0 %v3249
        %3350 = vmatprep.subr.bf16.mxu0 %v3254
        %3351 = vmatpush1.bf16.msra.mxu0 %v3253
        %3352 = vmatprep.subr.bf16.mxu0 %v3258
        %3353 = vmatpush1.bf16.msra.mxu0 %v3257
        %3354 = vmatprep.subr.bf16.mxu0 %v3262
        %3355 = vmatpush1.bf16.msra.mxu0 %v3261
        %3356 = vmatprep.subr.bf16.mxu0 %v3266
        %3357 = vmatpush1.bf16.msra.mxu0 %v3265
        %3358 = vmatprep.subr.bf16.mxu0 0
        %3359 = vmatpush1.bf16.msra.mxu0 0
        %3360 = vmatprep.subr.bf16.mxu0 0
        %3361 = vmatpush1.bf16.msra.mxu0 0
        %3362 = vmatprep.subr.bf16.mxu0 0
        %3363 = vmatpush1.bf16.msra.mxu0 0
        %3364 = vmatprep.subr.bf16.mxu0 0
        %3365 = vmatpush1.bf16.msra.mxu0 0
        %3366 = vmatprep.subr.bf16.mxu0 0
        %3367 = vmatpush1.bf16.msra.mxu0 0
        %3368 = vmatprep.subr.bf16.mxu0 0
        %3369 = vmatpush1.bf16.msra.mxu0 0
        %3370 = vmatprep.subr.bf16.mxu0 0
        %3371 = vmatpush1.bf16.msra.mxu0 0
        %3372 = vmatprep.subr.bf16.mxu0 0
        %3373 = vmatpush1.bf16.msra.mxu0 0
        %3374 = vmatprep.mubr.bf16.mxu0 0
        %3375 = vmatmul.mubr.bf16.gmra.mrb[0].mxu0 0
        %v3376 = vpop.f32.mrb[0].mxu0
        %v3377 = vadd.f32 0.0, %v3376
        %v3378 = vpop.f32.mrb[0].mxu0
        %v3379 = vadd.f32 0.0, %v3378
        %v3380 = vpop.f32.mrb[0].mxu0
        %v3381 = vadd.f32 0.0, %v3380
        %v3382 = vpop.f32.mrb[0].mxu0
        %v3383 = vadd.f32 0.0, %v3382
        %3384 = vdwg.mxu0
        %v3385 = vadd.f32 %v3131, %v3334
        %v3386 = vadd.f32 %v3132, %v3336
        %v3387 = vadd.f32 %v3133, %v3377
        %v3388 = vadd.f32 %v3134, %v3379
        %v3389 = vadd.f32 %v3135, %v3338
        %v3390 = vadd.f32 %v3136, %v3340
        %v3391 = vadd.f32 %v3137, %v3381
        %v3392 = vadd.f32 %v3138, %v3383
        %v3393 = vxor.u32 %v3385, 2147483648
        %v3394 = vxor.u32 %v3386, 2147483648
        %v3395 = vxor.u32 %v3387, 2147483648
        %v3396 = vxor.u32 %v3388, 2147483648
        %v3397 = vxor.u32 %v3389, 2147483648
        %v3398 = vxor.u32 %v3390, 2147483648
        %v3399 = vxor.u32 %v3391, 2147483648
        %v3400 = vxor.u32 %v3392, 2147483648
        %v3401 = vmul.f32 %v3393, 1.442695
        %v3402 = vpow.pop %v3401
        %v3403 = vmul.f32 %v3394, 1.442695
        %v3404 = vpow.pop %v3403
        %v3405 = vmul.f32 %v3395, 1.442695
        %v3406 = vpow.pop %v3405
        %v3407 = vmul.f32 %v3396, 1.442695
        %v3408 = vpow.pop %v3407
        %v3409 = vmul.f32 %v3397, 1.442695
        %v3410 = vpow.pop %v3409
        %v3411 = vmul.f32 %v3398, 1.442695
        %v3412 = vpow.pop %v3411
        %v3413 = vmul.f32 %v3399, 1.442695
        %v3414 = vpow.pop %v3413
        %v3415 = vmul.f32 %v3400, 1.442695
        %v3416 = vpow.pop %v3415
        %v3417 = vadd.f32 %v3402, 1.0
        %v3418 = vadd.f32 %v3404, 1.0
        %v3419 = vadd.f32 %v3406, 1.0
        %v3420 = vadd.f32 %v3408, 1.0
        %v3421 = vadd.f32 %v3410, 1.0
        %v3422 = vadd.f32 %v3412, 1.0
        %v3423 = vadd.f32 %v3414, 1.0
        %v3424 = vadd.f32 %v3416, 1.0
        %v3425 = vrcp.pop %v3417
        %v3426 = vmul.f32 1.0, %v3425
        %v3427 = vrcp.pop %v3418
        %v3428 = vmul.f32 1.0, %v3427
        %v3429 = vrcp.pop %v3419
        %v3430 = vmul.f32 1.0, %v3429
        %v3431 = vrcp.pop %v3420
        %v3432 = vmul.f32 1.0, %v3431
        %v3433 = vrcp.pop %v3421
        %v3434 = vmul.f32 1.0, %v3433
        %v3435 = vrcp.pop %v3422
        %v3436 = vmul.f32 1.0, %v3435
        %v3437 = vrcp.pop %v3423
        %v3438 = vmul.f32 1.0, %v3437
        %v3439 = vrcp.pop %v3424
        %v3440 = vmul.f32 1.0, %v3439
        %v3441 = vmul.f32 %v3430, 2.0
        %v3442 = vmul.f32 %v3438, 2.0
        %v3443 = vsub.f32 %v3441, 1.0
        %v3444 = vsub.f32 %v3442, 1.0
        %v3445 = vmul.f32 %v3428, 0.0
        %v3446 = vmul.f32 %v3436, 0.0
        %v3447 = vmul.f32 %v3426, %v3443
        %v3448 = vmul.f32 %v3434, %v3444
        %v3449 = vadd.f32 %v3445, %v3447
        %v3450 = vadd.f32 %v3446, %v3448
        %v3451 = vtanh.pop %v3449
        %v3452 = vtanh.pop %v3450
        %v3453 = vmul.f32 %v3432, %v3451
        %v3454 = vmul.f32 %v3440, %v3452
        %v3455 = vld [vmem:[%s1379] sm:$0xff]
        %v3456 = vld [vmem:[%s1379 + $0x8] sm:$0xff]
        %v3457 = vld [vmem:[%s1379 + $0x10] sm:$0xff]
        %v3458 = vld [vmem:[%s1379 + $0x18] sm:$0xff]
        %v3459 = vunpack.c.l.bf16 %v3455
        %v3460 = vunpack.c.l.bf16 %v3456
        %v3461 = vunpack.c.l.bf16 %v3457
        %v3462 = vunpack.c.l.bf16 %v3458
        %v3463 = vunpack.c.h.bf16 %v3455
        %v3464 = vunpack.c.h.bf16 %v3456
        %v3465 = vunpack.c.h.bf16 %v3457
        %v3466 = vunpack.c.h.bf16 %v3458
        %v3467 = vpack.c.bf16 %v3454, %v3453
        %3468 = vmatprep.subr.bf16.mxu0 %v3236
        %3469 = vmatpush1.bf16.msra.mxu0 %v3235
        %3470 = vmatprep.subr.bf16.mxu0 %v3240
        %3471 = vmatpush1.bf16.msra.mxu0 %v3239
        %3472 = vmatprep.subr.bf16.mxu0 %v3244
        %3473 = vmatpush1.bf16.msra.mxu0 %v3243
        %3474 = vmatprep.subr.bf16.mxu0 %v3248
        %3475 = vmatpush1.bf16.msra.mxu0 %v3247
        %3476 = vmatprep.subr.bf16.mxu0 %v3252
        %3477 = vmatpush1.bf16.msra.mxu0 %v3251
        %3478 = vmatprep.subr.bf16.mxu0 %v3256
        %3479 = vmatpush1.bf16.msra.mxu0 %v3255
        %3480 = vmatprep.subr.bf16.mxu0 %v3260
        %3481 = vmatpush1.bf16.msra.mxu0 %v3259
        %3482 = vmatprep.subr.bf16.mxu0 %v3264
        %3483 = vmatpush1.bf16.msra.mxu0 %v3263
        %3484 = vmatprep.subr.bf16.mxu0 0
        %3485 = vmatpush1.bf16.msra.mxu0 0
        %3486 = vmatprep.subr.bf16.mxu0 0
        %3487 = vmatpush1.bf16.msra.mxu0 0
        %3488 = vmatprep.subr.bf16.mxu0 0
        %3489 = vmatpush1.bf16.msra.mxu0 0
        %3490 = vmatprep.subr.bf16.mxu0 0
        %3491 = vmatpush1.bf16.msra.mxu0 0
        %3492 = vmatprep.subr.bf16.mxu0 0
        %3493 = vmatpush1.bf16.msra.mxu0 0
        %3494 = vmatprep.subr.bf16.mxu0 0
        %3495 = vmatpush1.bf16.msra.mxu0 0
        %3496 = vmatprep.subr.bf16.mxu0 0
        %3497 = vmatpush1.bf16.msra.mxu0 0
        %3498 = vmatprep.subr.bf16.mxu0 0
        %3499 = vmatpush1.bf16.msra.mxu0 0
        %3500 = vmatprep.mubr.bf16.mxu0 0
        %3501 = vmatmul.mubr.bf16.gmra.mrb[0].mxu0 %v3467
        %v3502 = vpop.f32.mrb[0].mxu0
        %v3503 = vadd.f32 0.0, %v3502
        %v3504 = vpop.f32.mrb[0].mxu0
        %v3505 = vadd.f32 0.0, %v3504
        %v3506 = vpop.f32.mrb[0].mxu0
        %v3507 = vadd.f32 0.0, %v3506
        %v3508 = vpop.f32.mrb[0].mxu0
        %v3509 = vadd.f32 0.0, %v3508
        %3510 = vdwg.mxu0
        %3511 = vmatprep.subr.bf16.mxu0 %v3238
        %3512 = vmatpush1.bf16.msra.mxu0 %v3237
        %3513 = vmatprep.subr.bf16.mxu0 %v3242
        %3514 = vmatpush1.bf16.msra.mxu0 %v3241
        %3515 = vmatprep.subr.bf16.mxu0 %v3246
        %3516 = vmatpush1.bf16.msra.mxu0 %v3245
        %3517 = vmatprep.subr.bf16.mxu0 %v3250
        %3518 = vmatpush1.bf16.msra.mxu0 %v3249
        %3519 = vmatprep.subr.bf16.mxu0 %v3254
        %3520 = vmatpush1.bf16.msra.mxu0 %v3253
        %3521 = vmatprep.subr.bf16.mxu0 %v3258
        %3522 = vmatpush1.bf16.msra.mxu0 %v3257
        %3523 = vmatprep.subr.bf16.mxu0 %v3262
        %3524 = vmatpush1.bf16.msra.mxu0 %v3261
        %3525 = vmatprep.subr.bf16.mxu0 %v3266
        %3526 = vmatpush1.bf16.msra.mxu0 %v3265
        %3527 = vmatprep.subr.bf16.mxu0 0
        %3528 = vmatpush1.bf16.msra.mxu0 0
        %3529 = vmatprep.subr.bf16.mxu0 0
        %3530 = vmatpush1.bf16.msra.mxu0 0
        %3531 = vmatprep.subr.bf16.mxu0 0
        %3532 = vmatpush1.bf16.msra.mxu0 0
        %3533 = vmatprep.subr.bf16.mxu0 0
        %3534 = vmatpush1.bf16.msra.mxu0 0
        %3535 = vmatprep.subr.bf16.mxu0 0
        %3536 = vmatpush1.bf16.msra.mxu0 0
        %3537 = vmatprep.subr.bf16.mxu0 0
        %3538 = vmatpush1.bf16.msra.mxu0 0
        %3539 = vmatprep.subr.bf16.mxu0 0
        %3540 = vmatpush1.bf16.msra.mxu0 0
        %3541 = vmatprep.subr.bf16.mxu0 0
        %3542 = vmatpush1.bf16.msra.mxu0 0
        %3543 = vmatprep.mubr.bf16.mxu0 0
        %3544 = vmatmul.mubr.bf16.gmra.mrb[0].mxu0 %v3467
        %v3545 = vpop.f32.mrb[0].mxu0
        %v3546 = vadd.f32 0.0, %v3545
        %v3547 = vpop.f32.mrb[0].mxu0
        %v3548 = vadd.f32 0.0, %v3547
        %v3549 = vpop.f32.mrb[0].mxu0
        %v3550 = vadd.f32 0.0, %v3549
        %v3551 = vpop.f32.mrb[0].mxu0
        %v3552 = vadd.f32 0.0, %v3551
        %3553 = vdwg.mxu0
        %v3554 = vadd.f32 %v3459, %v3503
        %v3555 = vadd.f32 %v3460, %v3505
        %v3556 = vadd.f32 %v3461, %v3546
        %v3557 = vadd.f32 %v3462, %v3548
        %v3558 = vadd.f32 %v3463, %v3507
        %v3559 = vadd.f32 %v3464, %v3509
        %v3560 = vadd.f32 %v3465, %v3550
        %v3561 = vadd.f32 %v3466, %v3552
        %v3562 = vxor.u32 %v3554, 2147483648
        %v3563 = vxor.u32 %v3555, 2147483648
        %v3564 = vxor.u32 %v3556, 2147483648
        %v3565 = vxor.u32 %v3557, 2147483648
        %v3566 = vxor.u32 %v3558, 2147483648
        %v3567 = vxor.u32 %v3559, 2147483648
        %v3568 = vxor.u32 %v3560, 2147483648
        %v3569 = vxor.u32 %v3561, 2147483648
        %v3570 = vmul.f32 %v3562, 1.442695
        %v3571 = vpow.pop %v3570
        %v3572 = vmul.f32 %v3563, 1.442695
        %v3573 = vpow.pop %v3572
        %v3574 = vmul.f32 %v3564, 1.442695
        %v3575 = vpow.pop %v3574
        %v3576 = vmul.f32 %v3565, 1.442695
        %v3577 = vpow.pop %v3576
        %v3578 = vmul.f32 %v3566, 1.442695
        %v3579 = vpow.pop %v3578
        %v3580 = vmul.f32 %v3567, 1.442695
        %v3581 = vpow.pop %v3580
        %v3582 = vmul.f32 %v3568, 1.442695
        %v3583 = vpow.pop %v3582
        %v3584 = vmul.f32 %v3569, 1.442695
        %v3585 = vpow.pop %v3584
        %v3586 = vadd.f32 %v3571, 1.0
        %v3587 = vadd.f32 %v3573, 1.0
        %v3588 = vadd.f32 %v3575, 1.0
        %v3589 = vadd.f32 %v3577, 1.0
        %v3590 = vadd.f32 %v3579, 1.0
        %v3591 = vadd.f32 %v3581, 1.0
        %v3592 = vadd.f32 %v3583, 1.0
        %v3593 = vadd.f32 %v3585, 1.0
        %v3594 = vrcp.pop %v3586
        %v3595 = vmul.f32 1.0, %v3594
        %v3596 = vrcp.pop %v3587
        %v3597 = vmul.f32 1.0, %v3596
        %v3598 = vrcp.pop %v3588
        %v3599 = vmul.f32 1.0, %v3598
        %v3600 = vrcp.pop %v3589
        %v3601 = vmul.f32 1.0, %v3600
        %v3602 = vrcp.pop %v3590
        %v3603 = vmul.f32 1.0, %v3602
        %v3604 = vrcp.pop %v3591
        %v3605 = vmul.f32 1.0, %v3604
        %v3606 = vrcp.pop %v3592
        %v3607 = vmul.f32 1.0, %v3606
        %v3608 = vrcp.pop %v3593
        %v3609 = vmul.f32 1.0, %v3608
        %v3610 = vmul.f32 %v3599, 2.0
        %v3611 = vmul.f32 %v3607, 2.0
        %v3612 = vsub.f32 %v3610, 1.0
        %v3613 = vsub.f32 %v3611, 1.0
        %v3614 = vmul.f32 %v3597, %v3449
        %v3615 = vmul.f32 %v3605, %v3450
        %v3616 = vmul.f32 %v3595, %v3612
        %v3617 = vmul.f32 %v3603, %v3613
        %v3618 = vadd.f32 %v3614, %v3616
        %v3619 = vadd.f32 %v3615, %v3617
        %v3620 = vtanh.pop %v3618
        %v3621 = vtanh.pop %v3619
        %v3622 = vmul.f32 %v3601, %v3620
        %v3623 = vmul.f32 %v3609, %v3621
        %v3624 = vld [vmem:[%s1551] sm:$0xff]
        %v3625 = vld [vmem:[%s1551 + $0x8] sm:$0xff]
        %v3626 = vld [vmem:[%s1551 + $0x10] sm:$0xff]
        %v3627 = vld [vmem:[%s1551 + $0x18] sm:$0xff]
        %v3628 = vunpack.c.l.bf16 %v3624
        %v3629 = vunpack.c.l.bf16 %v3625
        %v3630 = vunpack.c.l.bf16 %v3626
        %v3631 = vunpack.c.l.bf16 %v3627
        %v3632 = vunpack.c.h.bf16 %v3624
        %v3633 = vunpack.c.h.bf16 %v3625
        %v3634 = vunpack.c.h.bf16 %v3626
        %v3635 = vunpack.c.h.bf16 %v3627
        %v3636 = vpack.c.bf16 %v3623, %v3622
        %3637 = vmatprep.subr.bf16.mxu0 %v3236
        %3638 = vmatpush1.bf16.msra.mxu0 %v3235
        %3639 = vmatprep.subr.bf16.mxu0 %v3240
        %3640 = vmatpush1.bf16.msra.mxu0 %v3239
        %3641 = vmatprep.subr.bf16.mxu0 %v3244
        %3642 = vmatpush1.bf16.msra.mxu0 %v3243
        %3643 = vmatprep.subr.bf16.mxu0 %v3248
        %3644 = vmatpush1.bf16.msra.mxu0 %v3247
        %3645 = vmatprep.subr.bf16.mxu0 %v3252
        %3646 = vmatpush1.bf16.msra.mxu0 %v3251
        %3647 = vmatprep.subr.bf16.mxu0 %v3256
        %3648 = vmatpush1.bf16.msra.mxu0 %v3255
        %3649 = vmatprep.subr.bf16.mxu0 %v3260
        %3650 = vmatpush1.bf16.msra.mxu0 %v3259
        %3651 = vmatprep.subr.bf16.mxu0 %v3264
        %3652 = vmatpush1.bf16.msra.mxu0 %v3263
        %3653 = vmatprep.subr.bf16.mxu0 0
        %3654 = vmatpush1.bf16.msra.mxu0 0
        %3655 = vmatprep.subr.bf16.mxu0 0
        %3656 = vmatpush1.bf16.msra.mxu0 0
        %3657 = vmatprep.subr.bf16.mxu0 0
        %3658 = vmatpush1.bf16.msra.mxu0 0
        %3659 = vmatprep.subr.bf16.mxu0 0
        %3660 = vmatpush1.bf16.msra.mxu0 0
        %3661 = vmatprep.subr.bf16.mxu0 0
        %3662 = vmatpush1.bf16.msra.mxu0 0
        %3663 = vmatprep.subr.bf16.mxu0 0
        %3664 = vmatpush1.bf16.msra.mxu0 0
        %3665 = vmatprep.subr.bf16.mxu0 0
        %3666 = vmatpush1.bf16.msra.mxu0 0
        %3667 = vmatprep.subr.bf16.mxu0 0
        %3668 = vmatpush1.bf16.msra.mxu0 0
        %3669 = vmatprep.mubr.bf16.mxu0 0
        %3670 = vmatmul.mubr.bf16.gmra.mrb[0].mxu0 %v3636
        %v3671 = vpop.f32.mrb[0].mxu0
        %v3672 = vadd.f32 0.0, %v3671
        %v3673 = vpop.f32.mrb[0].mxu0
        %v3674 = vadd.f32 0.0, %v3673
        %v3675 = vpop.f32.mrb[0].mxu0
        %v3676 = vadd.f32 0.0, %v3675
        %v3677 = vpop.f32.mrb[0].mxu0
        %v3678 = vadd.f32 0.0, %v3677
        %3679 = vdwg.mxu0
        %3680 = vmatprep.subr.bf16.mxu0 %v3238
        %3681 = vmatpush1.bf16.msra.mxu0 %v3237
        %3682 = vmatprep.subr.bf16.mxu0 %v3242
        %3683 = vmatpush1.bf16.msra.mxu0 %v3241
        %3684 = vmatprep.subr.bf16.mxu0 %v3246
        %3685 = vmatpush1.bf16.msra.mxu0 %v3245
        %3686 = vmatprep.subr.bf16.mxu0 %v3250
        %3687 = vmatpush1.bf16.msra.mxu0 %v3249
        %3688 = vmatprep.subr.bf16.mxu0 %v3254
        %3689 = vmatpush1.bf16.msra.mxu0 %v3253
        %3690 = vmatprep.subr.bf16.mxu0 %v3258
        %3691 = vmatpush1.bf16.msra.mxu0 %v3257
        %3692 = vmatprep.subr.bf16.mxu0 %v3262
        %3693 = vmatpush1.bf16.msra.mxu0 %v3261
        %3694 = vmatprep.subr.bf16.mxu0 %v3266
        %3695 = vmatpush1.bf16.msra.mxu0 %v3265
        %3696 = vmatprep.subr.bf16.mxu0 0
        %3697 = vmatpush1.bf16.msra.mxu0 0
        %3698 = vmatprep.subr.bf16.mxu0 0
        %3699 = vmatpush1.bf16.msra.mxu0 0
        %3700 = vmatprep.subr.bf16.mxu0 0
        %3701 = vmatpush1.bf16.msra.mxu0 0
        %3702 = vmatprep.subr.bf16.mxu0 0
        %3703 = vmatpush1.bf16.msra.mxu0 0
        %3704 = vmatprep.subr.bf16.mxu0 0
        %3705 = vmatpush1.bf16.msra.mxu0 0
        %3706 = vmatprep.subr.bf16.mxu0 0
        %3707 = vmatpush1.bf16.msra.mxu0 0
        %3708 = vmatprep.subr.bf16.mxu0 0
        %3709 = vmatpush1.bf16.msra.mxu0 0
        %3710 = vmatprep.subr.bf16.mxu0 0
        %3711 = vmatpush1.bf16.msra.mxu0 0
        %3712 = vmatprep.mubr.bf16.mxu0 0
        %3713 = vmatmul.mubr.bf16.gmra.mrb[0].mxu0 %v3636
        %v3714 = vpop.f32.mrb[0].mxu0
        %v3715 = vadd.f32 0.0, %v3714
        %v3716 = vpop.f32.mrb[0].mxu0
        %v3717 = vadd.f32 0.0, %v3716
        %v3718 = vpop.f32.mrb[0].mxu0
        %v3719 = vadd.f32 0.0, %v3718
        %v3720 = vpop.f32.mrb[0].mxu0
        %v3721 = vadd.f32 0.0, %v3720
        %3722 = vdwg.mxu0
        %v3723 = vadd.f32 %v3628, %v3672
        %v3724 = vadd.f32 %v3629, %v3674
        %v3725 = vadd.f32 %v3630, %v3715
        %v3726 = vadd.f32 %v3631, %v3717
        %v3727 = vadd.f32 %v3632, %v3676
        %v3728 = vadd.f32 %v3633, %v3678
        %v3729 = vadd.f32 %v3634, %v3719
        %v3730 = vadd.f32 %v3635, %v3721
        %v3731 = vxor.u32 %v3723, 2147483648
        %v3732 = vxor.u32 %v3724, 2147483648
        %v3733 = vxor.u32 %v3725, 2147483648
        %v3734 = vxor.u32 %v3726, 2147483648
        %v3735 = vxor.u32 %v3727, 2147483648
        %v3736 = vxor.u32 %v3728, 2147483648
        %v3737 = vxor.u32 %v3729, 2147483648
        %v3738 = vxor.u32 %v3730, 2147483648
        %v3739 = vmul.f32 %v3731, 1.442695
        %v3740 = vpow.pop %v3739
        %v3741 = vmul.f32 %v3732, 1.442695
        %v3742 = vpow.pop %v3741
        %v3743 = vmul.f32 %v3733, 1.442695
        %v3744 = vpow.pop %v3743
        %v3745 = vmul.f32 %v3734, 1.442695
        %v3746 = vpow.pop %v3745
        %v3747 = vmul.f32 %v3735, 1.442695
        %v3748 = vpow.pop %v3747
        %v3749 = vmul.f32 %v3736, 1.442695
        %v3750 = vpow.pop %v3749
        %v3751 = vmul.f32 %v3737, 1.442695
        %v3752 = vpow.pop %v3751
        %v3753 = vmul.f32 %v3738, 1.442695
        %v3754 = vpow.pop %v3753
        %v3755 = vadd.f32 %v3740, 1.0
        %v3756 = vadd.f32 %v3742, 1.0
        %v3757 = vadd.f32 %v3744, 1.0
        %v3758 = vadd.f32 %v3746, 1.0
        %v3759 = vadd.f32 %v3748, 1.0
        %v3760 = vadd.f32 %v3750, 1.0
        %v3761 = vadd.f32 %v3752, 1.0
        %v3762 = vadd.f32 %v3754, 1.0
        %v3763 = vrcp.pop %v3755
        %v3764 = vmul.f32 1.0, %v3763
        %v3765 = vrcp.pop %v3756
        %v3766 = vmul.f32 1.0, %v3765
        %v3767 = vrcp.pop %v3757
        %v3768 = vmul.f32 1.0, %v3767
        %v3769 = vrcp.pop %v3758
        %v3770 = vmul.f32 1.0, %v3769
        %v3771 = vrcp.pop %v3759
        %v3772 = vmul.f32 1.0, %v3771
        %v3773 = vrcp.pop %v3760
        %v3774 = vmul.f32 1.0, %v3773
        %v3775 = vrcp.pop %v3761
        %v3776 = vmul.f32 1.0, %v3775
        %v3777 = vrcp.pop %v3762
        %v3778 = vmul.f32 1.0, %v3777
        %v3779 = vmul.f32 %v3768, 2.0
        %v3780 = vmul.f32 %v3776, 2.0
        %v3781 = vsub.f32 %v3779, 1.0
        %v3782 = vsub.f32 %v3780, 1.0
        %v3783 = vmul.f32 %v3766, %v3618
        %v3784 = vmul.f32 %v3774, %v3619
        %v3785 = vmul.f32 %v3764, %v3781
        %v3786 = vmul.f32 %v3772, %v3782
        %v3787 = vadd.f32 %v3783, %v3785
        %v3788 = vadd.f32 %v3784, %v3786
        %v3789 = vtanh.pop %v3787
        %v3790 = vtanh.pop %v3788
        %v3791 = vmul.f32 %v3770, %v3789
        %v3792 = vmul.f32 %v3778, %v3790
        %v3793 = vld [vmem:[%s1723] sm:$0xff]
        %v3794 = vld [vmem:[%s1723 + $0x8] sm:$0xff]
        %v3795 = vld [vmem:[%s1723 + $0x10] sm:$0xff]
        %v3796 = vld [vmem:[%s1723 + $0x18] sm:$0xff]
        %v3797 = vunpack.c.l.bf16 %v3793
        %v3798 = vunpack.c.l.bf16 %v3794
        %v3799 = vunpack.c.l.bf16 %v3795
        %v3800 = vunpack.c.l.bf16 %v3796
        %v3801 = vunpack.c.h.bf16 %v3793
        %v3802 = vunpack.c.h.bf16 %v3794
        %v3803 = vunpack.c.h.bf16 %v3795
        %v3804 = vunpack.c.h.bf16 %v3796
        %v3805 = vpack.c.bf16 %v3792, %v3791
        %3806 = vmatprep.subr.bf16.mxu0 %v3236
        %3807 = vmatpush1.bf16.msra.mxu0 %v3235
        %3808 = vmatprep.subr.bf16.mxu0 %v3240
        %3809 = vmatpush1.bf16.msra.mxu0 %v3239
        %3810 = vmatprep.subr.bf16.mxu0 %v3244
        %3811 = vmatpush1.bf16.msra.mxu0 %v3243
        %3812 = vmatprep.subr.bf16.mxu0 %v3248
        %3813 = vmatpush1.bf16.msra.mxu0 %v3247
        %3814 = vmatprep.subr.bf16.mxu0 %v3252
        %3815 = vmatpush1.bf16.msra.mxu0 %v3251
        %3816 = vmatprep.subr.bf16.mxu0 %v3256
        %3817 = vmatpush1.bf16.msra.mxu0 %v3255
        %3818 = vmatprep.subr.bf16.mxu0 %v3260
        %3819 = vmatpush1.bf16.msra.mxu0 %v3259
        %3820 = vmatprep.subr.bf16.mxu0 %v3264
        %3821 = vmatpush1.bf16.msra.mxu0 %v3263
        %3822 = vmatprep.subr.bf16.mxu0 0
        %3823 = vmatpush1.bf16.msra.mxu0 0
        %3824 = vmatprep.subr.bf16.mxu0 0
        %3825 = vmatpush1.bf16.msra.mxu0 0
        %3826 = vmatprep.subr.bf16.mxu0 0
        %3827 = vmatpush1.bf16.msra.mxu0 0
        %3828 = vmatprep.subr.bf16.mxu0 0
        %3829 = vmatpush1.bf16.msra.mxu0 0
        %3830 = vmatprep.subr.bf16.mxu0 0
        %3831 = vmatpush1.bf16.msra.mxu0 0
        %3832 = vmatprep.subr.bf16.mxu0 0
        %3833 = vmatpush1.bf16.msra.mxu0 0
        %3834 = vmatprep.subr.bf16.mxu0 0
        %3835 = vmatpush1.bf16.msra.mxu0 0
        %3836 = vmatprep.subr.bf16.mxu0 0
        %3837 = vmatpush1.bf16.msra.mxu0 0
        %3838 = vmatprep.mubr.bf16.mxu0 0
        %3839 = vmatmul.mubr.bf16.gmra.mrb[0].mxu0 %v3805
        %v3840 = vpop.f32.mrb[0].mxu0
        %v3841 = vadd.f32 0.0, %v3840
        %v3842 = vpop.f32.mrb[0].mxu0
        %v3843 = vadd.f32 0.0, %v3842
        %v3844 = vpop.f32.mrb[0].mxu0
        %v3845 = vadd.f32 0.0, %v3844
        %v3846 = vpop.f32.mrb[0].mxu0
        %v3847 = vadd.f32 0.0, %v3846
        %3848 = vdwg.mxu0
        %3849 = vmatprep.subr.bf16.mxu0 %v3238
        %3850 = vmatpush1.bf16.msra.mxu0 %v3237
        %3851 = vmatprep.subr.bf16.mxu0 %v3242
        %3852 = vmatpush1.bf16.msra.mxu0 %v3241
        %3853 = vmatprep.subr.bf16.mxu0 %v3246
        %3854 = vmatpush1.bf16.msra.mxu0 %v3245
        %3855 = vmatprep.subr.bf16.mxu0 %v3250
        %3856 = vmatpush1.bf16.msra.mxu0 %v3249
        %3857 = vmatprep.subr.bf16.mxu0 %v3254
        %3858 = vmatpush1.bf16.msra.mxu0 %v3253
        %3859 = vmatprep.subr.bf16.mxu0 %v3258
        %3860 = vmatpush1.bf16.msra.mxu0 %v3257
        %3861 = vmatprep.subr.bf16.mxu0 %v3262
        %3862 = vmatpush1.bf16.msra.mxu0 %v3261
        %3863 = vmatprep.subr.bf16.mxu0 %v3266
        %3864 = vmatpush1.bf16.msra.mxu0 %v3265
        %3865 = vmatprep.subr.bf16.mxu0 0
        %3866 = vmatpush1.bf16.msra.mxu0 0
        %3867 = vmatprep.subr.bf16.mxu0 0
        %3868 = vmatpush1.bf16.msra.mxu0 0
        %3869 = vmatprep.subr.bf16.mxu0 0
        %3870 = vmatpush1.bf16.msra.mxu0 0
        %3871 = vmatprep.subr.bf16.mxu0 0
        %3872 = vmatpush1.bf16.msra.mxu0 0
        %3873 = vmatprep.subr.bf16.mxu0 0
        %3874 = vmatpush1.bf16.msra.mxu0 0
        %3875 = vmatprep.subr.bf16.mxu0 0
        %3876 = vmatpush1.bf16.msra.mxu0 0
        %3877 = vmatprep.subr.bf16.mxu0 0
        %3878 = vmatpush1.bf16.msra.mxu0 0
        %3879 = vmatprep.subr.bf16.mxu0 0
        %3880 = vmatpush1.bf16.msra.mxu0 0
        %3881 = vmatprep.mubr.bf16.mxu0 0
        %3882 = vmatmul.mubr.bf16.gmra.mrb[0].mxu0 %v3805
        %v3883 = vpop.f32.mrb[0].mxu0
        %v3884 = vadd.f32 0.0, %v3883
        %v3885 = vpop.f32.mrb[0].mxu0
        %v3886 = vadd.f32 0.0, %v3885
        %v3887 = vpop.f32.mrb[0].mxu0
        %v3888 = vadd.f32 0.0, %v3887
        %v3889 = vpop.f32.mrb[0].mxu0
        %v3890 = vadd.f32 0.0, %v3889
        %3891 = vdwg.mxu0
        %v3892 = vadd.f32 %v3797, %v3841
        %v3893 = vadd.f32 %v3798, %v3843
        %v3894 = vadd.f32 %v3799, %v3884
        %v3895 = vadd.f32 %v3800, %v3886
        %v3896 = vadd.f32 %v3801, %v3845
        %v3897 = vadd.f32 %v3802, %v3847
        %v3898 = vadd.f32 %v3803, %v3888
        %v3899 = vadd.f32 %v3804, %v3890
        %v3900 = vxor.u32 %v3892, 2147483648
        %v3901 = vxor.u32 %v3893, 2147483648
        %v3902 = vxor.u32 %v3894, 2147483648
        %v3903 = vxor.u32 %v3895, 2147483648
        %v3904 = vxor.u32 %v3896, 2147483648
        %v3905 = vxor.u32 %v3897, 2147483648
        %v3906 = vxor.u32 %v3898, 2147483648
        %v3907 = vxor.u32 %v3899, 2147483648
        %v3908 = vmul.f32 %v3900, 1.442695
        %v3909 = vpow.pop %v3908
        %v3910 = vmul.f32 %v3901, 1.442695
        %v3911 = vpow.pop %v3910
        %v3912 = vmul.f32 %v3902, 1.442695
        %v3913 = vpow.pop %v3912
        %v3914 = vmul.f32 %v3903, 1.442695
        %v3915 = vpow.pop %v3914
        %v3916 = vmul.f32 %v3904, 1.442695
        %v3917 = vpow.pop %v3916
        %v3918 = vmul.f32 %v3905, 1.442695
        %v3919 = vpow.pop %v3918
        %v3920 = vmul.f32 %v3906, 1.442695
        %v3921 = vpow.pop %v3920
        %v3922 = vmul.f32 %v3907, 1.442695
        %v3923 = vpow.pop %v3922
        %v3924 = vadd.f32 %v3909, 1.0
        %v3925 = vadd.f32 %v3911, 1.0
        %v3926 = vadd.f32 %v3913, 1.0
        %v3927 = vadd.f32 %v3915, 1.0
        %v3928 = vadd.f32 %v3917, 1.0
        %v3929 = vadd.f32 %v3919, 1.0
        %v3930 = vadd.f32 %v3921, 1.0
        %v3931 = vadd.f32 %v3923, 1.0
        %v3932 = vrcp.pop %v3924
        %v3933 = vmul.f32 1.0, %v3932
        %v3934 = vrcp.pop %v3925
        %v3935 = vmul.f32 1.0, %v3934
        %v3936 = vrcp.pop %v3926
        %v3937 = vmul.f32 1.0, %v3936
        %v3938 = vrcp.pop %v3927
        %v3939 = vmul.f32 1.0, %v3938
        %v3940 = vrcp.pop %v3928
        %v3941 = vmul.f32 1.0, %v3940
        %v3942 = vrcp.pop %v3929
        %v3943 = vmul.f32 1.0, %v3942
        %v3944 = vrcp.pop %v3930
        %v3945 = vmul.f32 1.0, %v3944
        %v3946 = vrcp.pop %v3931
        %v3947 = vmul.f32 1.0, %v3946
        %v3948 = vmul.f32 %v3937, 2.0
        %v3949 = vmul.f32 %v3945, 2.0
        %v3950 = vsub.f32 %v3948, 1.0
        %v3951 = vsub.f32 %v3949, 1.0
        %v3952 = vmul.f32 %v3935, %v3787
        %v3953 = vmul.f32 %v3943, %v3788
        %v3954 = vmul.f32 %v3933, %v3950
        %v3955 = vmul.f32 %v3941, %v3951
        %v3956 = vadd.f32 %v3952, %v3954
        %v3957 = vadd.f32 %v3953, %v3955
        %v3958 = vtanh.pop %v3956
        %v3959 = vtanh.pop %v3957
        %v3960 = vmul.f32 %v3939, %v3958
        %v3961 = vmul.f32 %v3947, %v3959
        %v3962 = vld [vmem:[%s1895] sm:$0xff]
        %v3963 = vld [vmem:[%s1895 + $0x8] sm:$0xff]
        %v3964 = vld [vmem:[%s1895 + $0x10] sm:$0xff]
        %v3965 = vld [vmem:[%s1895 + $0x18] sm:$0xff]
        %v3966 = vunpack.c.l.bf16 %v3962
        %v3967 = vunpack.c.l.bf16 %v3963
        %v3968 = vunpack.c.l.bf16 %v3964
        %v3969 = vunpack.c.l.bf16 %v3965
        %v3970 = vunpack.c.h.bf16 %v3962
        %v3971 = vunpack.c.h.bf16 %v3963
        %v3972 = vunpack.c.h.bf16 %v3964
        %v3973 = vunpack.c.h.bf16 %v3965
        %v3974 = vpack.c.bf16 %v3961, %v3960
        %3975 = vmatprep.subr.bf16.mxu0 %v3236
        %3976 = vmatpush1.bf16.msra.mxu0 %v3235
        %3977 = vmatprep.subr.bf16.mxu0 %v3240
        %3978 = vmatpush1.bf16.msra.mxu0 %v3239
        %3979 = vmatprep.subr.bf16.mxu0 %v3244
        %3980 = vmatpush1.bf16.msra.mxu0 %v3243
        %3981 = vmatprep.subr.bf16.mxu0 %v3248
        %3982 = vmatpush1.bf16.msra.mxu0 %v3247
        %3983 = vmatprep.subr.bf16.mxu0 %v3252
        %3984 = vmatpush1.bf16.msra.mxu0 %v3251
        %3985 = vmatprep.subr.bf16.mxu0 %v3256
        %3986 = vmatpush1.bf16.msra.mxu0 %v3255
        %3987 = vmatprep.subr.bf16.mxu0 %v3260
        %3988 = vmatpush1.bf16.msra.mxu0 %v3259
        %3989 = vmatprep.subr.bf16.mxu0 %v3264
        %3990 = vmatpush1.bf16.msra.mxu0 %v3263
        %3991 = vmatprep.subr.bf16.mxu0 0
        %3992 = vmatpush1.bf16.msra.mxu0 0
        %3993 = vmatprep.subr.bf16.mxu0 0
        %3994 = vmatpush1.bf16.msra.mxu0 0
        %3995 = vmatprep.subr.bf16.mxu0 0
        %3996 = vmatpush1.bf16.msra.mxu0 0
        %3997 = vmatprep.subr.bf16.mxu0 0
        %3998 = vmatpush1.bf16.msra.mxu0 0
        %3999 = vmatprep.subr.bf16.mxu0 0
        %4000 = vmatpush1.bf16.msra.mxu0 0
        %4001 = vmatprep.subr.bf16.mxu0 0
        %4002 = vmatpush1.bf16.msra.mxu0 0
        %4003 = vmatprep.subr.bf16.mxu0 0
        %4004 = vmatpush1.bf16.msra.mxu0 0
        %4005 = vmatprep.subr.bf16.mxu0 0
        %4006 = vmatpush1.bf16.msra.mxu0 0
        %4007 = vmatprep.mubr.bf16.mxu0 0
        %4008 = vmatmul.mubr.bf16.gmra.mrb[0].mxu0 %v3974
        %v4009 = vpop.f32.mrb[0].mxu0
        %v4010 = vadd.f32 0.0, %v4009
        %v4011 = vpop.f32.mrb[0].mxu0
        %v4012 = vadd.f32 0.0, %v4011
        %v4013 = vpop.f32.mrb[0].mxu0
        %v4014 = vadd.f32 0.0, %v4013
        %v4015 = vpop.f32.mrb[0].mxu0
        %v4016 = vadd.f32 0.0, %v4015
        %4017 = vdwg.mxu0
        %4018 = vmatprep.subr.bf16.mxu0 %v3238
        %4019 = vmatpush1.bf16.msra.mxu0 %v3237
        %4020 = vmatprep.subr.bf16.mxu0 %v3242
        %4021 = vmatpush1.bf16.msra.mxu0 %v3241
        %4022 = vmatprep.subr.bf16.mxu0 %v3246
        %4023 = vmatpush1.bf16.msra.mxu0 %v3245
        %4024 = vmatprep.subr.bf16.mxu0 %v3250
        %4025 = vmatpush1.bf16.msra.mxu0 %v3249
        %4026 = vmatprep.subr.bf16.mxu0 %v3254
        %4027 = vmatpush1.bf16.msra.mxu0 %v3253
        %4028 = vmatprep.subr.bf16.mxu0 %v3258
        %4029 = vmatpush1.bf16.msra.mxu0 %v3257
        %4030 = vmatprep.subr.bf16.mxu0 %v3262
        %4031 = vmatpush1.bf16.msra.mxu0 %v3261
        %4032 = vmatprep.subr.bf16.mxu0 %v3266
        %4033 = vmatpush1.bf16.msra.mxu0 %v3265
        %4034 = vmatprep.subr.bf16.mxu0 0
        %4035 = vmatpush1.bf16.msra.mxu0 0
        %4036 = vmatprep.subr.bf16.mxu0 0
        %4037 = vmatpush1.bf16.msra.mxu0 0
        %4038 = vmatprep.subr.bf16.mxu0 0
        %4039 = vmatpush1.bf16.msra.mxu0 0
        %4040 = vmatprep.subr.bf16.mxu0 0
        %4041 = vmatpush1.bf16.msra.mxu0 0
        %4042 = vmatprep.subr.bf16.mxu0 0
        %4043 = vmatpush1.bf16.msra.mxu0 0
        %4044 = vmatprep.subr.bf16.mxu0 0
        %4045 = vmatpush1.bf16.msra.mxu0 0
        %4046 = vmatprep.subr.bf16.mxu0 0
        %4047 = vmatpush1.bf16.msra.mxu0 0
        %4048 = vmatprep.subr.bf16.mxu0 0
        %4049 = vmatpush1.bf16.msra.mxu0 0
        %4050 = vmatprep.mubr.bf16.mxu0 0
        %4051 = vmatmul.mubr.bf16.gmra.mrb[0].mxu0 %v3974
        %v4052 = vpop.f32.mrb[0].mxu0
        %v4053 = vadd.f32 0.0, %v4052
        %v4054 = vpop.f32.mrb[0].mxu0
        %v4055 = vadd.f32 0.0, %v4054
        %v4056 = vpop.f32.mrb[0].mxu0
        %v4057 = vadd.f32 0.0, %v4056
        %v4058 = vpop.f32.mrb[0].mxu0
        %v4059 = vadd.f32 0.0, %v4058
        %4060 = vdwg.mxu0
        %v4061 = vadd.f32 %v3966, %v4010
        %v4062 = vadd.f32 %v3967, %v4012
        %v4063 = vadd.f32 %v3968, %v4053
        %v4064 = vadd.f32 %v3969, %v4055
        %v4065 = vadd.f32 %v3970, %v4014
        %v4066 = vadd.f32 %v3971, %v4016
        %v4067 = vadd.f32 %v3972, %v4057
        %v4068 = vadd.f32 %v3973, %v4059
        %v4069 = vxor.u32 %v4061, 2147483648
        %v4070 = vxor.u32 %v4062, 2147483648
        %v4071 = vxor.u32 %v4063, 2147483648
        %v4072 = vxor.u32 %v4064, 2147483648
        %v4073 = vxor.u32 %v4065, 2147483648
        %v4074 = vxor.u32 %v4066, 2147483648
        %v4075 = vxor.u32 %v4067, 2147483648
        %v4076 = vxor.u32 %v4068, 2147483648
        %v4077 = vmul.f32 %v4069, 1.442695
        %v4078 = vpow.pop %v4077
        %v4079 = vmul.f32 %v4070, 1.442695
        %v4080 = vpow.pop %v4079
        %v4081 = vmul.f32 %v4071, 1.442695
        %v4082 = vpow.pop %v4081
        %v4083 = vmul.f32 %v4072, 1.442695
        %v4084 = vpow.pop %v4083
        %v4085 = vmul.f32 %v4073, 1.442695
        %v4086 = vpow.pop %v4085
        %v4087 = vmul.f32 %v4074, 1.442695
        %v4088 = vpow.pop %v4087
        %v4089 = vmul.f32 %v4075, 1.442695
        %v4090 = vpow.pop %v4089
        %v4091 = vmul.f32 %v4076, 1.442695
        %v4092 = vpow.pop %v4091
        %v4093 = vadd.f32 %v4078, 1.0
        %v4094 = vadd.f32 %v4080, 1.0
        %v4095 = vadd.f32 %v4082, 1.0
        %v4096 = vadd.f32 %v4084, 1.0
        %v4097 = vadd.f32 %v4086, 1.0
        %v4098 = vadd.f32 %v4088, 1.0
        %v4099 = vadd.f32 %v4090, 1.0
        %v4100 = vadd.f32 %v4092, 1.0
        %v4101 = vrcp.pop %v4093
        %v4102 = vmul.f32 1.0, %v4101
        %v4103 = vrcp.pop %v4094
        %v4104 = vmul.f32 1.0, %v4103
        %v4105 = vrcp.pop %v4095
        %v4106 = vmul.f32 1.0, %v4105
        %v4107 = vrcp.pop %v4096
        %v4108 = vmul.f32 1.0, %v4107
        %v4109 = vrcp.pop %v4097
        %v4110 = vmul.f32 1.0, %v4109
        %v4111 = vrcp.pop %v4098
        %v4112 = vmul.f32 1.0, %v4111
        %v4113 = vrcp.pop %v4099
        %v4114 = vmul.f32 1.0, %v4113
        %v4115 = vrcp.pop %v4100
        %v4116 = vmul.f32 1.0, %v4115
        %v4117 = vmul.f32 %v4106, 2.0
        %v4118 = vmul.f32 %v4114, 2.0
        %v4119 = vsub.f32 %v4117, 1.0
        %v4120 = vsub.f32 %v4118, 1.0
        %v4121 = vmul.f32 %v4104, %v3956
        %v4122 = vmul.f32 %v4112, %v3957
        %v4123 = vmul.f32 %v4102, %v4119
        %v4124 = vmul.f32 %v4110, %v4120
        %v4125 = vadd.f32 %v4121, %v4123
        %v4126 = vadd.f32 %v4122, %v4124
        %v4127 = vtanh.pop %v4125
        %v4128 = vtanh.pop %v4126
        %v4129 = vmul.f32 %v4108, %v4127
        %v4130 = vmul.f32 %v4116, %v4128
        %v4131 = vld [vmem:[%s2067] sm:$0xff]
        %v4132 = vld [vmem:[%s2067 + $0x8] sm:$0xff]
        %v4133 = vld [vmem:[%s2067 + $0x10] sm:$0xff]
        %v4134 = vld [vmem:[%s2067 + $0x18] sm:$0xff]
        %v4135 = vunpack.c.l.bf16 %v4131
        %v4136 = vunpack.c.l.bf16 %v4132
        %v4137 = vunpack.c.l.bf16 %v4133
        %v4138 = vunpack.c.l.bf16 %v4134
        %v4139 = vunpack.c.h.bf16 %v4131
        %v4140 = vunpack.c.h.bf16 %v4132
        %v4141 = vunpack.c.h.bf16 %v4133
        %v4142 = vunpack.c.h.bf16 %v4134
        %v4143 = vpack.c.bf16 %v4130, %v4129
        %4144 = vmatprep.subr.bf16.mxu0 %v3236
        %4145 = vmatpush1.bf16.msra.mxu0 %v3235
        %4146 = vmatprep.subr.bf16.mxu0 %v3240
        %4147 = vmatpush1.bf16.msra.mxu0 %v3239
        %4148 = vmatprep.subr.bf16.mxu0 %v3244
        %4149 = vmatpush1.bf16.msra.mxu0 %v3243
        %4150 = vmatprep.subr.bf16.mxu0 %v3248
        %4151 = vmatpush1.bf16.msra.mxu0 %v3247
        %4152 = vmatprep.subr.bf16.mxu0 %v3252
        %4153 = vmatpush1.bf16.msra.mxu0 %v3251
        %4154 = vmatprep.subr.bf16.mxu0 %v3256
        %4155 = vmatpush1.bf16.msra.mxu0 %v3255
        %4156 = vmatprep.subr.bf16.mxu0 %v3260
        %4157 = vmatpush1.bf16.msra.mxu0 %v3259
        %4158 = vmatprep.subr.bf16.mxu0 %v3264
        %4159 = vmatpush1.bf16.msra.mxu0 %v3263
        %4160 = vmatprep.subr.bf16.mxu0 0
        %4161 = vmatpush1.bf16.msra.mxu0 0
        %4162 = vmatprep.subr.bf16.mxu0 0
        %4163 = vmatpush1.bf16.msra.mxu0 0
        %4164 = vmatprep.subr.bf16.mxu0 0
        %4165 = vmatpush1.bf16.msra.mxu0 0
        %4166 = vmatprep.subr.bf16.mxu0 0
        %4167 = vmatpush1.bf16.msra.mxu0 0
        %4168 = vmatprep.subr.bf16.mxu0 0
        %4169 = vmatpush1.bf16.msra.mxu0 0
        %4170 = vmatprep.subr.bf16.mxu0 0
        %4171 = vmatpush1.bf16.msra.mxu0 0
        %4172 = vmatprep.subr.bf16.mxu0 0
        %4173 = vmatpush1.bf16.msra.mxu0 0
        %4174 = vmatprep.subr.bf16.mxu0 0
        %4175 = vmatpush1.bf16.msra.mxu0 0
        %4176 = vmatprep.mubr.bf16.mxu0 0
        %4177 = vmatmul.mubr.bf16.gmra.mrb[0].mxu0 %v4143
        %v4178 = vpop.f32.mrb[0].mxu0
        %v4179 = vadd.f32 0.0, %v4178
        %v4180 = vpop.f32.mrb[0].mxu0
        %v4181 = vadd.f32 0.0, %v4180
        %v4182 = vpop.f32.mrb[0].mxu0
        %v4183 = vadd.f32 0.0, %v4182
        %v4184 = vpop.f32.mrb[0].mxu0
        %v4185 = vadd.f32 0.0, %v4184
        %4186 = vdwg.mxu0
        %4187 = vmatprep.subr.bf16.mxu0 %v3238
        %4188 = vmatpush1.bf16.msra.mxu0 %v3237
        %4189 = vmatprep.subr.bf16.mxu0 %v3242
        %4190 = vmatpush1.bf16.msra.mxu0 %v3241
        %4191 = vmatprep.subr.bf16.mxu0 %v3246
        %4192 = vmatpush1.bf16.msra.mxu0 %v3245
        %4193 = vmatprep.subr.bf16.mxu0 %v3250
        %4194 = vmatpush1.bf16.msra.mxu0 %v3249
        %4195 = vmatprep.subr.bf16.mxu0 %v3254
        %4196 = vmatpush1.bf16.msra.mxu0 %v3253
        %4197 = vmatprep.subr.bf16.mxu0 %v3258
        %4198 = vmatpush1.bf16.msra.mxu0 %v3257
        %4199 = vmatprep.subr.bf16.mxu0 %v3262
        %4200 = vmatpush1.bf16.msra.mxu0 %v3261
        %4201 = vmatprep.subr.bf16.mxu0 %v3266
        %4202 = vmatpush1.bf16.msra.mxu0 %v3265
        %4203 = vmatprep.subr.bf16.mxu0 0
        %4204 = vmatpush1.bf16.msra.mxu0 0
        %4205 = vmatprep.subr.bf16.mxu0 0
        %4206 = vmatpush1.bf16.msra.mxu0 0
        %4207 = vmatprep.subr.bf16.mxu0 0
        %4208 = vmatpush1.bf16.msra.mxu0 0
        %4209 = vmatprep.subr.bf16.mxu0 0
        %4210 = vmatpush1.bf16.msra.mxu0 0
        %4211 = vmatprep.subr.bf16.mxu0 0
        %4212 = vmatpush1.bf16.msra.mxu0 0
        %4213 = vmatprep.subr.bf16.mxu0 0
        %4214 = vmatpush1.bf16.msra.mxu0 0
        %4215 = vmatprep.subr.bf16.mxu0 0
        %4216 = vmatpush1.bf16.msra.mxu0 0
        %4217 = vmatprep.subr.bf16.mxu0 0
        %4218 = vmatpush1.bf16.msra.mxu0 0
        %4219 = vmatprep.mubr.bf16.mxu0 0
        %4220 = vmatmul.mubr.bf16.gmra.mrb[0].mxu0 %v4143
        %v4221 = vpop.f32.mrb[0].mxu0
        %v4222 = vadd.f32 0.0, %v4221
        %v4223 = vpop.f32.mrb[0].mxu0
        %v4224 = vadd.f32 0.0, %v4223
        %v4225 = vpop.f32.mrb[0].mxu0
        %v4226 = vadd.f32 0.0, %v4225
        %v4227 = vpop.f32.mrb[0].mxu0
        %v4228 = vadd.f32 0.0, %v4227
        %4229 = vdwg.mxu0
        %v4230 = vadd.f32 %v4135, %v4179
        %v4231 = vadd.f32 %v4136, %v4181
        %v4232 = vadd.f32 %v4137, %v4222
        %v4233 = vadd.f32 %v4138, %v4224
        %v4234 = vadd.f32 %v4139, %v4183
        %v4235 = vadd.f32 %v4140, %v4185
        %v4236 = vadd.f32 %v4141, %v4226
        %v4237 = vadd.f32 %v4142, %v4228
        %v4238 = vxor.u32 %v4230, 2147483648
        %v4239 = vxor.u32 %v4231, 2147483648
        %v4240 = vxor.u32 %v4232, 2147483648
        %v4241 = vxor.u32 %v4233, 2147483648
        %v4242 = vxor.u32 %v4234, 2147483648
        %v4243 = vxor.u32 %v4235, 2147483648
        %v4244 = vxor.u32 %v4236, 2147483648
        %v4245 = vxor.u32 %v4237, 2147483648
        %v4246 = vmul.f32 %v4238, 1.442695
        %v4247 = vpow.pop %v4246
        %v4248 = vmul.f32 %v4239, 1.442695
        %v4249 = vpow.pop %v4248
        %v4250 = vmul.f32 %v4240, 1.442695
        %v4251 = vpow.pop %v4250
        %v4252 = vmul.f32 %v4241, 1.442695
        %v4253 = vpow.pop %v4252
        %v4254 = vmul.f32 %v4242, 1.442695
        %v4255 = vpow.pop %v4254
        %v4256 = vmul.f32 %v4243, 1.442695
        %v4257 = vpow.pop %v4256
        %v4258 = vmul.f32 %v4244, 1.442695
        %v4259 = vpow.pop %v4258
        %v4260 = vmul.f32 %v4245, 1.442695
        %v4261 = vpow.pop %v4260
        %v4262 = vadd.f32 %v4247, 1.0
        %v4263 = vadd.f32 %v4249, 1.0
        %v4264 = vadd.f32 %v4251, 1.0
        %v4265 = vadd.f32 %v4253, 1.0
        %v4266 = vadd.f32 %v4255, 1.0
        %v4267 = vadd.f32 %v4257, 1.0
        %v4268 = vadd.f32 %v4259, 1.0
        %v4269 = vadd.f32 %v4261, 1.0
        %v4270 = vrcp.pop %v4262
        %v4271 = vmul.f32 1.0, %v4270
        %v4272 = vrcp.pop %v4263
        %v4273 = vmul.f32 1.0, %v4272
        %v4274 = vrcp.pop %v4264
        %v4275 = vmul.f32 1.0, %v4274
        %v4276 = vrcp.pop %v4265
        %v4277 = vmul.f32 1.0, %v4276
        %v4278 = vrcp.pop %v4266
        %v4279 = vmul.f32 1.0, %v4278
        %v4280 = vrcp.pop %v4267
        %v4281 = vmul.f32 1.0, %v4280
        %v4282 = vrcp.pop %v4268
        %v4283 = vmul.f32 1.0, %v4282
        %v4284 = vrcp.pop %v4269
        %v4285 = vmul.f32 1.0, %v4284
        %v4286 = vmul.f32 %v4275, 2.0
        %v4287 = vmul.f32 %v4283, 2.0
        %v4288 = vsub.f32 %v4286, 1.0
        %v4289 = vsub.f32 %v4287, 1.0
        %v4290 = vmul.f32 %v4273, %v4125
        %v4291 = vmul.f32 %v4281, %v4126
        %v4292 = vmul.f32 %v4271, %v4288
        %v4293 = vmul.f32 %v4279, %v4289
        %v4294 = vadd.f32 %v4290, %v4292
        %v4295 = vadd.f32 %v4291, %v4293
        %v4296 = vtanh.pop %v4294
        %v4297 = vtanh.pop %v4295
        %v4298 = vmul.f32 %v4277, %v4296
        %v4299 = vmul.f32 %v4285, %v4297
        %v4300 = vld [vmem:[%s2239] sm:$0xff]
        %v4301 = vld [vmem:[%s2239 + $0x8] sm:$0xff]
        %v4302 = vld [vmem:[%s2239 + $0x10] sm:$0xff]
        %v4303 = vld [vmem:[%s2239 + $0x18] sm:$0xff]
        %v4304 = vunpack.c.l.bf16 %v4300
        %v4305 = vunpack.c.l.bf16 %v4301
        %v4306 = vunpack.c.l.bf16 %v4302
        %v4307 = vunpack.c.l.bf16 %v4303
        %v4308 = vunpack.c.h.bf16 %v4300
        %v4309 = vunpack.c.h.bf16 %v4301
        %v4310 = vunpack.c.h.bf16 %v4302
        %v4311 = vunpack.c.h.bf16 %v4303
        %v4312 = vpack.c.bf16 %v4299, %v4298
        %4313 = vmatprep.subr.bf16.mxu0 %v3236
        %4314 = vmatpush1.bf16.msra.mxu0 %v3235
        %4315 = vmatprep.subr.bf16.mxu0 %v3240
        %4316 = vmatpush1.bf16.msra.mxu0 %v3239
        %4317 = vmatprep.subr.bf16.mxu0 %v3244
        %4318 = vmatpush1.bf16.msra.mxu0 %v3243
        %4319 = vmatprep.subr.bf16.mxu0 %v3248
        %4320 = vmatpush1.bf16.msra.mxu0 %v3247
        %4321 = vmatprep.subr.bf16.mxu0 %v3252
        %4322 = vmatpush1.bf16.msra.mxu0 %v3251
        %4323 = vmatprep.subr.bf16.mxu0 %v3256
        %4324 = vmatpush1.bf16.msra.mxu0 %v3255
        %4325 = vmatprep.subr.bf16.mxu0 %v3260
        %4326 = vmatpush1.bf16.msra.mxu0 %v3259
        %4327 = vmatprep.subr.bf16.mxu0 %v3264
        %4328 = vmatpush1.bf16.msra.mxu0 %v3263
        %4329 = vmatprep.subr.bf16.mxu0 0
        %4330 = vmatpush1.bf16.msra.mxu0 0
        %4331 = vmatprep.subr.bf16.mxu0 0
        %4332 = vmatpush1.bf16.msra.mxu0 0
        %4333 = vmatprep.subr.bf16.mxu0 0
        %4334 = vmatpush1.bf16.msra.mxu0 0
        %4335 = vmatprep.subr.bf16.mxu0 0
        %4336 = vmatpush1.bf16.msra.mxu0 0
        %4337 = vmatprep.subr.bf16.mxu0 0
        %4338 = vmatpush1.bf16.msra.mxu0 0
        %4339 = vmatprep.subr.bf16.mxu0 0
        %4340 = vmatpush1.bf16.msra.mxu0 0
        %4341 = vmatprep.subr.bf16.mxu0 0
        %4342 = vmatpush1.bf16.msra.mxu0 0
        %4343 = vmatprep.subr.bf16.mxu0 0
        %4344 = vmatpush1.bf16.msra.mxu0 0
        %4345 = vmatprep.mubr.bf16.mxu0 0
        %4346 = vmatmul.mubr.bf16.gmra.mrb[0].mxu0 %v4312
        %v4347 = vpop.f32.mrb[0].mxu0
        %v4348 = vadd.f32 0.0, %v4347
        %v4349 = vpop.f32.mrb[0].mxu0
        %v4350 = vadd.f32 0.0, %v4349
        %v4351 = vpop.f32.mrb[0].mxu0
        %v4352 = vadd.f32 0.0, %v4351
        %v4353 = vpop.f32.mrb[0].mxu0
        %v4354 = vadd.f32 0.0, %v4353
        %4355 = vdwg.mxu0
        %4356 = vmatprep.subr.bf16.mxu0 %v3238
        %4357 = vmatpush1.bf16.msra.mxu0 %v3237
        %4358 = vmatprep.subr.bf16.mxu0 %v3242
        %4359 = vmatpush1.bf16.msra.mxu0 %v3241
        %4360 = vmatprep.subr.bf16.mxu0 %v3246
        %4361 = vmatpush1.bf16.msra.mxu0 %v3245
        %4362 = vmatprep.subr.bf16.mxu0 %v3250
        %4363 = vmatpush1.bf16.msra.mxu0 %v3249
        %4364 = vmatprep.subr.bf16.mxu0 %v3254
        %4365 = vmatpush1.bf16.msra.mxu0 %v3253
        %4366 = vmatprep.subr.bf16.mxu0 %v3258
        %4367 = vmatpush1.bf16.msra.mxu0 %v3257
        %4368 = vmatprep.subr.bf16.mxu0 %v3262
        %4369 = vmatpush1.bf16.msra.mxu0 %v3261
        %4370 = vmatprep.subr.bf16.mxu0 %v3266
        %4371 = vmatpush1.bf16.msra.mxu0 %v3265
        %4372 = vmatprep.subr.bf16.mxu0 0
        %4373 = vmatpush1.bf16.msra.mxu0 0
        %4374 = vmatprep.subr.bf16.mxu0 0
        %4375 = vmatpush1.bf16.msra.mxu0 0
        %4376 = vmatprep.subr.bf16.mxu0 0
        %4377 = vmatpush1.bf16.msra.mxu0 0
        %4378 = vmatprep.subr.bf16.mxu0 0
        %4379 = vmatpush1.bf16.msra.mxu0 0
        %4380 = vmatprep.subr.bf16.mxu0 0
        %4381 = vmatpush1.bf16.msra.mxu0 0
        %4382 = vmatprep.subr.bf16.mxu0 0
        %4383 = vmatpush1.bf16.msra.mxu0 0
        %4384 = vmatprep.subr.bf16.mxu0 0
        %4385 = vmatpush1.bf16.msra.mxu0 0
        %4386 = vmatprep.subr.bf16.mxu0 0
        %4387 = vmatpush1.bf16.msra.mxu0 0
        %4388 = vmatprep.mubr.bf16.mxu0 0
        %4389 = vmatmul.mubr.bf16.gmra.mrb[0].mxu0 %v4312
        %v4390 = vpop.f32.mrb[0].mxu0
        %v4391 = vadd.f32 0.0, %v4390
        %v4392 = vpop.f32.mrb[0].mxu0
        %v4393 = vadd.f32 0.0, %v4392
        %v4394 = vpop.f32.mrb[0].mxu0
        %v4395 = vadd.f32 0.0, %v4394
        %v4396 = vpop.f32.mrb[0].mxu0
        %v4397 = vadd.f32 0.0, %v4396
        %4398 = vdwg.mxu0
        %v4399 = vadd.f32 %v4304, %v4348
        %v4400 = vadd.f32 %v4305, %v4350
        %v4401 = vadd.f32 %v4306, %v4391
        %v4402 = vadd.f32 %v4307, %v4393
        %v4403 = vadd.f32 %v4308, %v4352
        %v4404 = vadd.f32 %v4309, %v4354
        %v4405 = vadd.f32 %v4310, %v4395
        %v4406 = vadd.f32 %v4311, %v4397
        %v4407 = vxor.u32 %v4399, 2147483648
        %v4408 = vxor.u32 %v4400, 2147483648
        %v4409 = vxor.u32 %v4401, 2147483648
        %v4410 = vxor.u32 %v4402, 2147483648
        %v4411 = vxor.u32 %v4403, 2147483648
        %v4412 = vxor.u32 %v4404, 2147483648
        %v4413 = vxor.u32 %v4405, 2147483648
        %v4414 = vxor.u32 %v4406, 2147483648
        %v4415 = vmul.f32 %v4407, 1.442695
        %v4416 = vpow.pop %v4415
        %v4417 = vmul.f32 %v4408, 1.442695
        %v4418 = vpow.pop %v4417
        %v4419 = vmul.f32 %v4409, 1.442695
        %v4420 = vpow.pop %v4419
        %v4421 = vmul.f32 %v4410, 1.442695
        %v4422 = vpow.pop %v4421
        %v4423 = vmul.f32 %v4411, 1.442695
        %v4424 = vpow.pop %v4423
        %v4425 = vmul.f32 %v4412, 1.442695
        %v4426 = vpow.pop %v4425
        %v4427 = vmul.f32 %v4413, 1.442695
        %v4428 = vpow.pop %v4427
        %v4429 = vmul.f32 %v4414, 1.442695
        %v4430 = vpow.pop %v4429
        %v4431 = vadd.f32 %v4416, 1.0
        %v4432 = vadd.f32 %v4418, 1.0
        %v4433 = vadd.f32 %v4420, 1.0
        %v4434 = vadd.f32 %v4422, 1.0
        %v4435 = vadd.f32 %v4424, 1.0
        %v4436 = vadd.f32 %v4426, 1.0
        %v4437 = vadd.f32 %v4428, 1.0
        %v4438 = vadd.f32 %v4430, 1.0
        %v4439 = vrcp.pop %v4431
        %v4440 = vmul.f32 1.0, %v4439
        %v4441 = vrcp.pop %v4432
        %v4442 = vmul.f32 1.0, %v4441
        %v4443 = vrcp.pop %v4433
        %v4444 = vmul.f32 1.0, %v4443
        %v4445 = vrcp.pop %v4434
        %v4446 = vmul.f32 1.0, %v4445
        %v4447 = vrcp.pop %v4435
        %v4448 = vmul.f32 1.0, %v4447
        %v4449 = vrcp.pop %v4436
        %v4450 = vmul.f32 1.0, %v4449
        %v4451 = vrcp.pop %v4437
        %v4452 = vmul.f32 1.0, %v4451
        %v4453 = vrcp.pop %v4438
        %v4454 = vmul.f32 1.0, %v4453
        %v4455 = vmul.f32 %v4444, 2.0
        %v4456 = vmul.f32 %v4452, 2.0
        %v4457 = vsub.f32 %v4455, 1.0
        %v4458 = vsub.f32 %v4456, 1.0
        %v4459 = vmul.f32 %v4442, %v4294
        %v4460 = vmul.f32 %v4450, %v4295
        %v4461 = vmul.f32 %v4440, %v4457
        %v4462 = vmul.f32 %v4448, %v4458
        %v4463 = vadd.f32 %v4459, %v4461
        %v4464 = vadd.f32 %v4460, %v4462
        %v4465 = vtanh.pop %v4463
        %v4466 = vtanh.pop %v4464
        %v4467 = vmul.f32 %v4446, %v4465
        %v4468 = vmul.f32 %v4454, %v4466
        %v4469 = vld [vmem:[%s2411] sm:$0xff]
        %v4470 = vld [vmem:[%s2411 + $0x8] sm:$0xff]
        %v4471 = vld [vmem:[%s2411 + $0x10] sm:$0xff]
        %v4472 = vld [vmem:[%s2411 + $0x18] sm:$0xff]
        %v4473 = vunpack.c.l.bf16 %v4469
        %v4474 = vunpack.c.l.bf16 %v4470
        %v4475 = vunpack.c.l.bf16 %v4471
        %v4476 = vunpack.c.l.bf16 %v4472
        %v4477 = vunpack.c.h.bf16 %v4469
        %v4478 = vunpack.c.h.bf16 %v4470
        %v4479 = vunpack.c.h.bf16 %v4471
        %v4480 = vunpack.c.h.bf16 %v4472
        %v4481 = vpack.c.bf16 %v4468, %v4467
        %4482 = vmatprep.subr.bf16.mxu0 %v3236
        %4483 = vmatpush1.bf16.msra.mxu0 %v3235
        %4484 = vmatprep.subr.bf16.mxu0 %v3240
        %4485 = vmatpush1.bf16.msra.mxu0 %v3239
        %4486 = vmatprep.subr.bf16.mxu0 %v3244
        %4487 = vmatpush1.bf16.msra.mxu0 %v3243
        %4488 = vmatprep.subr.bf16.mxu0 %v3248
        %4489 = vmatpush1.bf16.msra.mxu0 %v3247
        %4490 = vmatprep.subr.bf16.mxu0 %v3252
        %4491 = vmatpush1.bf16.msra.mxu0 %v3251
        %4492 = vmatprep.subr.bf16.mxu0 %v3256
        %4493 = vmatpush1.bf16.msra.mxu0 %v3255
        %4494 = vmatprep.subr.bf16.mxu0 %v3260
        %4495 = vmatpush1.bf16.msra.mxu0 %v3259
        %4496 = vmatprep.subr.bf16.mxu0 %v3264
        %4497 = vmatpush1.bf16.msra.mxu0 %v3263
        %4498 = vmatprep.subr.bf16.mxu0 0
        %4499 = vmatpush1.bf16.msra.mxu0 0
        %4500 = vmatprep.subr.bf16.mxu0 0
        %4501 = vmatpush1.bf16.msra.mxu0 0
        %4502 = vmatprep.subr.bf16.mxu0 0
        %4503 = vmatpush1.bf16.msra.mxu0 0
        %4504 = vmatprep.subr.bf16.mxu0 0
        %4505 = vmatpush1.bf16.msra.mxu0 0
        %4506 = vmatprep.subr.bf16.mxu0 0
        %4507 = vmatpush1.bf16.msra.mxu0 0
        %4508 = vmatprep.subr.bf16.mxu0 0
        %4509 = vmatpush1.bf16.msra.mxu0 0
        %4510 = vmatprep.subr.bf16.mxu0 0
        %4511 = vmatpush1.bf16.msra.mxu0 0
        %4512 = vmatprep.subr.bf16.mxu0 0
        %4513 = vmatpush1.bf16.msra.mxu0 0
        %4514 = vmatprep.mubr.bf16.mxu0 0
        %4515 = vmatmul.mubr.bf16.gmra.mrb[0].mxu0 %v4481
        %v4516 = vpop.f32.mrb[0].mxu0
        %v4517 = vadd.f32 0.0, %v4516
        %v4518 = vpop.f32.mrb[0].mxu0
        %v4519 = vadd.f32 0.0, %v4518
        %v4520 = vpop.f32.mrb[0].mxu0
        %v4521 = vadd.f32 0.0, %v4520
        %v4522 = vpop.f32.mrb[0].mxu0
        %v4523 = vadd.f32 0.0, %v4522
        %4524 = vdwg.mxu0
        %4525 = vmatprep.subr.bf16.mxu0 %v3238
        %4526 = vmatpush1.bf16.msra.mxu0 %v3237
        %4527 = vmatprep.subr.bf16.mxu0 %v3242
        %4528 = vmatpush1.bf16.msra.mxu0 %v3241
        %4529 = vmatprep.subr.bf16.mxu0 %v3246
        %4530 = vmatpush1.bf16.msra.mxu0 %v3245
        %4531 = vmatprep.subr.bf16.mxu0 %v3250
        %4532 = vmatpush1.bf16.msra.mxu0 %v3249
        %4533 = vmatprep.subr.bf16.mxu0 %v3254
        %4534 = vmatpush1.bf16.msra.mxu0 %v3253
        %4535 = vmatprep.subr.bf16.mxu0 %v3258
        %4536 = vmatpush1.bf16.msra.mxu0 %v3257
        %4537 = vmatprep.subr.bf16.mxu0 %v3262
        %4538 = vmatpush1.bf16.msra.mxu0 %v3261
        %4539 = vmatprep.subr.bf16.mxu0 %v3266
        %4540 = vmatpush1.bf16.msra.mxu0 %v3265
        %4541 = vmatprep.subr.bf16.mxu0 0
        %4542 = vmatpush1.bf16.msra.mxu0 0
        %4543 = vmatprep.subr.bf16.mxu0 0
        %4544 = vmatpush1.bf16.msra.mxu0 0
        %4545 = vmatprep.subr.bf16.mxu0 0
        %4546 = vmatpush1.bf16.msra.mxu0 0
        %4547 = vmatprep.subr.bf16.mxu0 0
        %4548 = vmatpush1.bf16.msra.mxu0 0
        %4549 = vmatprep.subr.bf16.mxu0 0
        %4550 = vmatpush1.bf16.msra.mxu0 0
        %4551 = vmatprep.subr.bf16.mxu0 0
        %4552 = vmatpush1.bf16.msra.mxu0 0
        %4553 = vmatprep.subr.bf16.mxu0 0
        %4554 = vmatpush1.bf16.msra.mxu0 0
        %4555 = vmatprep.subr.bf16.mxu0 0
        %4556 = vmatpush1.bf16.msra.mxu0 0
        %4557 = vmatprep.mubr.bf16.mxu0 0
        %4558 = vmatmul.mubr.bf16.gmra.mrb[0].mxu0 %v4481
        %v4559 = vpop.f32.mrb[0].mxu0
        %v4560 = vadd.f32 0.0, %v4559
        %v4561 = vpop.f32.mrb[0].mxu0
        %v4562 = vadd.f32 0.0, %v4561
        %v4563 = vpop.f32.mrb[0].mxu0
        %v4564 = vadd.f32 0.0, %v4563
        %v4565 = vpop.f32.mrb[0].mxu0
        %v4566 = vadd.f32 0.0, %v4565
        %4567 = vdwg.mxu0
        %v4568 = vadd.f32 %v4473, %v4517
        %v4569 = vadd.f32 %v4474, %v4519
        %v4570 = vadd.f32 %v4475, %v4560
        %v4571 = vadd.f32 %v4476, %v4562
        %v4572 = vadd.f32 %v4477, %v4521
        %v4573 = vadd.f32 %v4478, %v4523
        %v4574 = vadd.f32 %v4479, %v4564
        %v4575 = vadd.f32 %v4480, %v4566
        %v4576 = vxor.u32 %v4568, 2147483648
        %v4577 = vxor.u32 %v4569, 2147483648
        %v4578 = vxor.u32 %v4570, 2147483648
        %v4579 = vxor.u32 %v4571, 2147483648
        %v4580 = vxor.u32 %v4572, 2147483648
        %v4581 = vxor.u32 %v4573, 2147483648
        %v4582 = vxor.u32 %v4574, 2147483648
        %v4583 = vxor.u32 %v4575, 2147483648
        %v4584 = vmul.f32 %v4576, 1.442695
        %v4585 = vpow.pop %v4584
        %v4586 = vmul.f32 %v4577, 1.442695
        %v4587 = vpow.pop %v4586
        %v4588 = vmul.f32 %v4578, 1.442695
        %v4589 = vpow.pop %v4588
        %v4590 = vmul.f32 %v4579, 1.442695
        %v4591 = vpow.pop %v4590
        %v4592 = vmul.f32 %v4580, 1.442695
        %v4593 = vpow.pop %v4592
        %v4594 = vmul.f32 %v4581, 1.442695
        %v4595 = vpow.pop %v4594
        %v4596 = vmul.f32 %v4582, 1.442695
        %v4597 = vpow.pop %v4596
        %v4598 = vmul.f32 %v4583, 1.442695
        %v4599 = vpow.pop %v4598
        %v4600 = vadd.f32 %v4585, 1.0
        %v4601 = vadd.f32 %v4587, 1.0
        %v4602 = vadd.f32 %v4589, 1.0
        %v4603 = vadd.f32 %v4591, 1.0
        %v4604 = vadd.f32 %v4593, 1.0
        %v4605 = vadd.f32 %v4595, 1.0
        %v4606 = vadd.f32 %v4597, 1.0
        %v4607 = vadd.f32 %v4599, 1.0
        %v4608 = vrcp.pop %v4600
        %v4609 = vmul.f32 1.0, %v4608
        %v4610 = vrcp.pop %v4601
        %v4611 = vmul.f32 1.0, %v4610
        %v4612 = vrcp.pop %v4602
        %v4613 = vmul.f32 1.0, %v4612
        %v4614 = vrcp.pop %v4603
        %v4615 = vmul.f32 1.0, %v4614
        %v4616 = vrcp.pop %v4604
        %v4617 = vmul.f32 1.0, %v4616
        %v4618 = vrcp.pop %v4605
        %v4619 = vmul.f32 1.0, %v4618
        %v4620 = vrcp.pop %v4606
        %v4621 = vmul.f32 1.0, %v4620
        %v4622 = vrcp.pop %v4607
        %v4623 = vmul.f32 1.0, %v4622
        %v4624 = vmul.f32 %v4613, 2.0
        %v4625 = vmul.f32 %v4621, 2.0
        %v4626 = vsub.f32 %v4624, 1.0
        %v4627 = vsub.f32 %v4625, 1.0
        %v4628 = vmul.f32 %v4611, %v4463
        %v4629 = vmul.f32 %v4619, %v4464
        %v4630 = vmul.f32 %v4609, %v4626
        %v4631 = vmul.f32 %v4617, %v4627
        %v4632 = vadd.f32 %v4628, %v4630
        %v4633 = vadd.f32 %v4629, %v4631
        %v4634 = vtanh.pop %v4632
        %v4635 = vtanh.pop %v4633
        %v4636 = vmul.f32 %v4615, %v4634
        %v4637 = vmul.f32 %v4623, %v4635
        %v4638 = vld [vmem:[%s7] sm:$0xf]
        %v4639 = vld [vmem:[%s7 + $0x4] sm:$0xf]
        %v4640 = vld [vmem:[%s7 + $0x8] sm:$0xf]
        %v4641 = vld [vmem:[%s7 + $0xc] sm:$0xf]
        %v4642 = vld [vmem:[%s7 + $0x10] sm:$0xf]
        %v4643 = vld [vmem:[%s7 + $0x14] sm:$0xf]
        %v4644 = vld [vmem:[%s7 + $0x18] sm:$0xf]
        %v4645 = vld [vmem:[%s7 + $0x1c] sm:$0xf]
        %v4646 = vld [vmem:[%s7 + $0x20] sm:$0xf]
        %v4647 = vld [vmem:[%s7 + $0x24] sm:$0xf]
        %v4648 = vld [vmem:[%s7 + $0x28] sm:$0xf]
        %v4649 = vld [vmem:[%s7 + $0x2c] sm:$0xf]
        %v4650 = vld [vmem:[%s7 + $0x30] sm:$0xf]
        %v4651 = vld [vmem:[%s7 + $0x34] sm:$0xf]
        %v4652 = vld [vmem:[%s7 + $0x38] sm:$0xf]
        %v4653 = vld [vmem:[%s7 + $0x3c] sm:$0xf]
        %v4654 = vld [vmem:[%s8] sm:$0x1]
        %v4655 = vpack.c.bf16 %v4637, %v4636
        %v4657 = vlaneseq
        %v4658 = vshrl.u32 %v4657, 7
        %v4659 = vsub.s32 0, %v4658
        %v4660 = vrot.slane %v4654, %v4659
        %v4678 = vunpack.c.l.b16 %v4638
        %v4679 = vunpack.c.l.b16 %v4639
        %v4680 = vunpack.c.l.b16 %v4640
        %v4681 = vunpack.c.l.b16 %v4641
        %v4682 = vunpack.c.l.b16 %v4642
        %v4683 = vunpack.c.l.b16 %v4643
        %v4684 = vunpack.c.l.b16 %v4644
        %v4685 = vunpack.c.l.b16 %v4645
        %v4686 = vunpack.c.l.b16 %v4646
        %v4687 = vunpack.c.l.b16 %v4647
        %v4688 = vunpack.c.l.b16 %v4648
        %v4689 = vunpack.c.l.b16 %v4649
        %v4690 = vunpack.c.l.b16 %v4650
        %v4691 = vunpack.c.l.b16 %v4651
        %v4692 = vunpack.c.l.b16 %v4652
        %v4693 = vunpack.c.l.b16 %v4653
        %v4694 = vpack.c.b16 %v4679, %v4678
        %v4695 = vpack.c.b16 %v4681, %v4680
        %v4696 = vpack.c.b16 %v4683, %v4682
        %v4697 = vpack.c.b16 %v4685, %v4684
        %v4698 = vpack.c.b16 %v4687, %v4686
        %v4699 = vpack.c.b16 %v4689, %v4688
        %v4700 = vpack.c.b16 %v4691, %v4690
        %v4701 = vpack.c.b16 %v4693, %v4692
        %4710 = vmatprep.subr.bf16.mxu0 0
        %4711 = vmatpush1.bf16.msra.mxu0 %v4694
        %4712 = vmatprep.subr.bf16.mxu0 0
        %4713 = vmatpush1.bf16.msra.mxu0 %v4695
        %4714 = vmatprep.subr.bf16.mxu0 0
        %4715 = vmatpush1.bf16.msra.mxu0 %v4696
        %4716 = vmatprep.subr.bf16.mxu0 0
        %4717 = vmatpush1.bf16.msra.mxu0 %v4697
        %4718 = vmatprep.subr.bf16.mxu0 0
        %4719 = vmatpush1.bf16.msra.mxu0 %v4698
        %4720 = vmatprep.subr.bf16.mxu0 0
        %4721 = vmatpush1.bf16.msra.mxu0 %v4699
        %4722 = vmatprep.subr.bf16.mxu0 0
        %4723 = vmatpush1.bf16.msra.mxu0 %v4700
        %4724 = vmatprep.subr.bf16.mxu0 0
        %4725 = vmatpush1.bf16.msra.mxu0 %v4701
        %4726 = vmatprep.subr.bf16.mxu0 0
        %4727 = vmatpush1.bf16.msra.mxu0 0
        %4728 = vmatprep.subr.bf16.mxu0 0
        %4729 = vmatpush1.bf16.msra.mxu0 0
        %4730 = vmatprep.subr.bf16.mxu0 0
        %4731 = vmatpush1.bf16.msra.mxu0 0
        %4732 = vmatprep.subr.bf16.mxu0 0
        %4733 = vmatpush1.bf16.msra.mxu0 0
        %4734 = vmatprep.subr.bf16.mxu0 0
        %4735 = vmatpush1.bf16.msra.mxu0 0
        %4736 = vmatprep.subr.bf16.mxu0 0
        %4737 = vmatpush1.bf16.msra.mxu0 0
        %4738 = vmatprep.subr.bf16.mxu0 0
        %4739 = vmatpush1.bf16.msra.mxu0 0
        %4740 = vmatprep.subr.bf16.mxu0 0
        %4741 = vmatpush1.bf16.msra.mxu0 0
        %4742 = vmatprep.mubr.bf16.mxu0 0
        %4743 = vmatmul.mubr.bf16.gmra.mrb[0].mxu0 %v4655
        %v4744 = vpop.f32.mrb[0].mxu0
        %v4745 = vadd.f32 %v4660, %v4744
        %v4746 = vpop.f32.mrb[0].mxu0
        %v4747 = vpop.f32.mrb[0].mxu0
        %v4748 = vadd.f32 %v4660, %v4747
        %v4749 = vpop.f32.mrb[0].mxu0
        %4750 = vdwg.mxu0
        %v4751 = vmax.f32 %v4745, 0.0
        %v4752 = vmax.f32 %v4748, 0.0
        %v4753 = vld [vmem:[%s9] sm:$0xf]
        %v4754 = vld [vmem:[%s9 + $0x4] sm:$0xf]
        %v4755 = vld [vmem:[%s9 + $0x8] sm:$0xf]
        %v4756 = vld [vmem:[%s9 + $0xc] sm:$0xf]
        %v4757 = vld [vmem:[%s9 + $0x10] sm:$0xf]
        %v4758 = vld [vmem:[%s9 + $0x14] sm:$0xf]
        %v4759 = vld [vmem:[%s9 + $0x18] sm:$0xf]
        %v4760 = vld [vmem:[%s9 + $0x1c] sm:$0xf]
        %v4761 = vld [vmem:[%s9 + $0x20] sm:$0xf]
        %v4762 = vld [vmem:[%s9 + $0x24] sm:$0xf]
        %v4763 = vld [vmem:[%s9 + $0x28] sm:$0xf]
        %v4764 = vld [vmem:[%s9 + $0x2c] sm:$0xf]
        %v4765 = vld [vmem:[%s9 + $0x30] sm:$0xf]
        %v4766 = vld [vmem:[%s9 + $0x34] sm:$0xf]
        %v4767 = vld [vmem:[%s9 + $0x38] sm:$0xf]
        %v4768 = vld [vmem:[%s9 + $0x3c] sm:$0xf]
        %v4769 = vld [vmem:[%s10] sm:$0x1]
        %v4770 = vpack.c.bf16 %v4752, %v4751
        %v4772 = vlaneseq
        %v4773 = vshrl.u32 %v4772, 7
        %v4774 = vsub.s32 0, %v4773
        %v4775 = vrot.slane %v4769, %v4774
        %v4793 = vunpack.c.l.b16 %v4753
        %v4794 = vunpack.c.l.b16 %v4754
        %v4795 = vunpack.c.l.b16 %v4755
        %v4796 = vunpack.c.l.b16 %v4756
        %v4797 = vunpack.c.l.b16 %v4757
        %v4798 = vunpack.c.l.b16 %v4758
        %v4799 = vunpack.c.l.b16 %v4759
        %v4800 = vunpack.c.l.b16 %v4760
        %v4801 = vunpack.c.l.b16 %v4761
        %v4802 = vunpack.c.l.b16 %v4762
        %v4803 = vunpack.c.l.b16 %v4763
        %v4804 = vunpack.c.l.b16 %v4764
        %v4805 = vunpack.c.l.b16 %v4765
        %v4806 = vunpack.c.l.b16 %v4766
        %v4807 = vunpack.c.l.b16 %v4767
        %v4808 = vunpack.c.l.b16 %v4768
        %v4809 = vpack.c.b16 %v4794, %v4793
        %v4810 = vpack.c.b16 %v4796, %v4795
        %v4811 = vpack.c.b16 %v4798, %v4797
        %v4812 = vpack.c.b16 %v4800, %v4799
        %v4813 = vpack.c.b16 %v4802, %v4801
        %v4814 = vpack.c.b16 %v4804, %v4803
        %v4815 = vpack.c.b16 %v4806, %v4805
        %v4816 = vpack.c.b16 %v4808, %v4807
        %4825 = vmatprep.subr.bf16.mxu0 0
        %4826 = vmatpush1.bf16.msra.mxu0 %v4809
        %4827 = vmatprep.subr.bf16.mxu0 0
        %4828 = vmatpush1.bf16.msra.mxu0 %v4810
        %4829 = vmatprep.subr.bf16.mxu0 0
        %4830 = vmatpush1.bf16.msra.mxu0 %v4811
        %4831 = vmatprep.subr.bf16.mxu0 0
        %4832 = vmatpush1.bf16.msra.mxu0 %v4812
        %4833 = vmatprep.subr.bf16.mxu0 0
        %4834 = vmatpush1.bf16.msra.mxu0 %v4813
        %4835 = vmatprep.subr.bf16.mxu0 0
        %4836 = vmatpush1.bf16.msra.mxu0 %v4814
        %4837 = vmatprep.subr.bf16.mxu0 0
        %4838 = vmatpush1.bf16.msra.mxu0 %v4815
        %4839 = vmatprep.subr.bf16.mxu0 0
        %4840 = vmatpush1.bf16.msra.mxu0 %v4816
        %4841 = vmatprep.subr.bf16.mxu0 0
        %4842 = vmatpush1.bf16.msra.mxu0 0
        %4843 = vmatprep.subr.bf16.mxu0 0
        %4844 = vmatpush1.bf16.msra.mxu0 0
        %4845 = vmatprep.subr.bf16.mxu0 0
        %4846 = vmatpush1.bf16.msra.mxu0 0
        %4847 = vmatprep.subr.bf16.mxu0 0
        %4848 = vmatpush1.bf16.msra.mxu0 0
        %4849 = vmatprep.subr.bf16.mxu0 0
        %4850 = vmatpush1.bf16.msra.mxu0 0
        %4851 = vmatprep.subr.bf16.mxu0 0
        %4852 = vmatpush1.bf16.msra.mxu0 0
        %4853 = vmatprep.subr.bf16.mxu0 0
        %4854 = vmatpush1.bf16.msra.mxu0 0
        %4855 = vmatprep.subr.bf16.mxu0 0
        %4856 = vmatpush1.bf16.msra.mxu0 0
        %4857 = vmatprep.mubr.bf16.mxu0 0
        %4858 = vmatmul.mubr.bf16.gmra.mrb[0].mxu0 %v4770
        %v4859 = vpop.f32.mrb[0].mxu0
        %v4860 = vadd.f32 %v4775, %v4859
        %v4861 = vpop.f32.mrb[0].mxu0
        %v4862 = vpop.f32.mrb[0].mxu0
        %v4863 = vadd.f32 %v4775, %v4862
        %v4864 = vpop.f32.mrb[0].mxu0
        %4865 = vdwg.mxu0
        %v4866 = vmax.f32 %v4860, 0.0
        %v4867 = vmax.f32 %v4863, 0.0
        %v4868 = vld [vmem:[%s11] sm:$0xf]
        %v4869 = vld [vmem:[%s11 + $0x4] sm:$0xf]
        %v4870 = vld [vmem:[%s11 + $0x8] sm:$0xf]
        %v4871 = vld [vmem:[%s11 + $0xc] sm:$0xf]
        %v4872 = vld [vmem:[%s11 + $0x10] sm:$0xf]
        %v4873 = vld [vmem:[%s11 + $0x14] sm:$0xf]
        %v4874 = vld [vmem:[%s11 + $0x18] sm:$0xf]
        %v4875 = vld [vmem:[%s11 + $0x1c] sm:$0xf]
        %v4876 = vld [vmem:[%s11 + $0x20] sm:$0xf]
        %v4877 = vld [vmem:[%s11 + $0x24] sm:$0xf]
        %v4878 = vld [vmem:[%s11 + $0x28] sm:$0xf]
        %v4879 = vld [vmem:[%s11 + $0x2c] sm:$0xf]
        %v4880 = vld [vmem:[%s11 + $0x30] sm:$0xf]
        %v4881 = vld [vmem:[%s11 + $0x34] sm:$0xf]
        %v4882 = vld [vmem:[%s11 + $0x38] sm:$0xf]
        %v4883 = vld [vmem:[%s11 + $0x3c] sm:$0xf]
        %v4884 = vld [vmem:[%s12] sm:$0x1]
        %v4885 = vpack.c.bf16 %v4867, %v4866
        %v4887 = vlaneseq
        %v4888 = vshrl.u32 %v4887, 7
        %v4889 = vsub.s32 0, %v4888
        %v4890 = vrot.slane %v4884, %v4889
        %v4908 = vunpack.c.l.b16 %v4868
        %v4909 = vunpack.c.l.b16 %v4869
        %v4910 = vunpack.c.l.b16 %v4870
        %v4911 = vunpack.c.l.b16 %v4871
        %v4912 = vunpack.c.l.b16 %v4872
        %v4913 = vunpack.c.l.b16 %v4873
        %v4914 = vunpack.c.l.b16 %v4874
        %v4915 = vunpack.c.l.b16 %v4875
        %v4916 = vunpack.c.l.b16 %v4876
        %v4917 = vunpack.c.l.b16 %v4877
        %v4918 = vunpack.c.l.b16 %v4878
        %v4919 = vunpack.c.l.b16 %v4879
        %v4920 = vunpack.c.l.b16 %v4880
        %v4921 = vunpack.c.l.b16 %v4881
        %v4922 = vunpack.c.l.b16 %v4882
        %v4923 = vunpack.c.l.b16 %v4883
        %v4924 = vpack.c.b16 %v4909, %v4908
        %v4925 = vpack.c.b16 %v4911, %v4910
        %v4926 = vpack.c.b16 %v4913, %v4912
        %v4927 = vpack.c.b16 %v4915, %v4914
        %v4928 = vpack.c.b16 %v4917, %v4916
        %v4929 = vpack.c.b16 %v4919, %v4918
        %v4930 = vpack.c.b16 %v4921, %v4920
        %v4931 = vpack.c.b16 %v4923, %v4922
        %4940 = vmatprep.subr.bf16.mxu0 0
        %4941 = vmatpush1.bf16.msra.mxu0 %v4924
        %4942 = vmatprep.subr.bf16.mxu0 0
        %4943 = vmatpush1.bf16.msra.mxu0 %v4925
        %4944 = vmatprep.subr.bf16.mxu0 0
        %4945 = vmatpush1.bf16.msra.mxu0 %v4926
        %4946 = vmatprep.subr.bf16.mxu0 0
        %4947 = vmatpush1.bf16.msra.mxu0 %v4927
        %4948 = vmatprep.subr.bf16.mxu0 0
        %4949 = vmatpush1.bf16.msra.mxu0 %v4928
        %4950 = vmatprep.subr.bf16.mxu0 0
        %4951 = vmatpush1.bf16.msra.mxu0 %v4929
        %4952 = vmatprep.subr.bf16.mxu0 0
        %4953 = vmatpush1.bf16.msra.mxu0 %v4930
        %4954 = vmatprep.subr.bf16.mxu0 0
        %4955 = vmatpush1.bf16.msra.mxu0 %v4931
        %4956 = vmatprep.subr.bf16.mxu0 0
        %4957 = vmatpush1.bf16.msra.mxu0 0
        %4958 = vmatprep.subr.bf16.mxu0 0
        %4959 = vmatpush1.bf16.msra.mxu0 0
        %4960 = vmatprep.subr.bf16.mxu0 0
        %4961 = vmatpush1.bf16.msra.mxu0 0
        %4962 = vmatprep.subr.bf16.mxu0 0
        %4963 = vmatpush1.bf16.msra.mxu0 0
        %4964 = vmatprep.subr.bf16.mxu0 0
        %4965 = vmatpush1.bf16.msra.mxu0 0
        %4966 = vmatprep.subr.bf16.mxu0 0
        %4967 = vmatpush1.bf16.msra.mxu0 0
        %4968 = vmatprep.subr.bf16.mxu0 0
        %4969 = vmatpush1.bf16.msra.mxu0 0
        %4970 = vmatprep.subr.bf16.mxu0 0
        %4971 = vmatpush1.bf16.msra.mxu0 0
        %4972 = vmatprep.mubr.bf16.mxu0 0
        %4973 = vmatmul.mubr.bf16.gmra.mrb[0].mxu0 %v4885
        %v4974 = vpop.f32.mrb[0].mxu0
        %v4975 = vadd.f32 %v4890, %v4974
        %v4976 = vpop.f32.mrb[0].mxu0
        %v4977 = vpop.f32.mrb[0].mxu0
        %v4978 = vadd.f32 %v4890, %v4977
        %v4979 = vpop.f32.mrb[0].mxu0
        %4980 = vdwg.mxu0
        %v4981 = vmax.f32 %v4975, 0.0
        %v4982 = vmax.f32 %v4978, 0.0
        %v4983 = vld [vmem:[%s13] sm:$0xf]
        %v4984 = vld [vmem:[%s13 + $0x4] sm:$0xf]
        %v4985 = vld [vmem:[%s13 + $0x8] sm:$0xf]
        %v4986 = vld [vmem:[%s13 + $0xc] sm:$0xf]
        %v4987 = vld [vmem:[%s13 + $0x10] sm:$0xf]
        %v4988 = vld [vmem:[%s13 + $0x14] sm:$0xf]
        %v4989 = vld [vmem:[%s13 + $0x18] sm:$0xf]
        %v4990 = vld [vmem:[%s13 + $0x1c] sm:$0xf]
        %v4991 = vld [vmem:[%s13 + $0x20] sm:$0xf]
        %v4992 = vld [vmem:[%s13 + $0x24] sm:$0xf]
        %v4993 = vld [vmem:[%s13 + $0x28] sm:$0xf]
        %v4994 = vld [vmem:[%s13 + $0x2c] sm:$0xf]
        %v4995 = vld [vmem:[%s13 + $0x30] sm:$0xf]
        %v4996 = vld [vmem:[%s13 + $0x34] sm:$0xf]
        %v4997 = vld [vmem:[%s13 + $0x38] sm:$0xf]
        %v4998 = vld [vmem:[%s13 + $0x3c] sm:$0xf]
        %v4999 = vld [vmem:[%s14] sm:$0x1]
        %v5000 = vpack.c.bf16 %v4982, %v4981
        %v5002 = vlaneseq
        %v5003 = vshrl.u32 %v5002, 7
        %v5004 = vsub.s32 0, %v5003
        %v5005 = vrot.slane %v4999, %v5004
        %v5023 = vunpack.c.l.b16 %v4983
        %v5024 = vunpack.c.l.b16 %v4984
        %v5025 = vunpack.c.l.b16 %v4985
        %v5026 = vunpack.c.l.b16 %v4986
        %v5027 = vunpack.c.l.b16 %v4987
        %v5028 = vunpack.c.l.b16 %v4988
        %v5029 = vunpack.c.l.b16 %v4989
        %v5030 = vunpack.c.l.b16 %v4990
        %v5031 = vunpack.c.l.b16 %v4991
        %v5032 = vunpack.c.l.b16 %v4992
        %v5033 = vunpack.c.l.b16 %v4993
        %v5034 = vunpack.c.l.b16 %v4994
        %v5035 = vunpack.c.l.b16 %v4995
        %v5036 = vunpack.c.l.b16 %v4996
        %v5037 = vunpack.c.l.b16 %v4997
        %v5038 = vunpack.c.l.b16 %v4998
        %v5039 = vpack.c.b16 %v5024, %v5023
        %v5040 = vpack.c.b16 %v5026, %v5025
        %v5041 = vpack.c.b16 %v5028, %v5027
        %v5042 = vpack.c.b16 %v5030, %v5029
        %v5043 = vpack.c.b16 %v5032, %v5031
        %v5044 = vpack.c.b16 %v5034, %v5033
        %v5045 = vpack.c.b16 %v5036, %v5035
        %v5046 = vpack.c.b16 %v5038, %v5037
        %5055 = vmatprep.subr.bf16.mxu0 0
        %5056 = vmatpush1.bf16.msra.mxu0 %v5039
        %5057 = vmatprep.subr.bf16.mxu0 0
        %5058 = vmatpush1.bf16.msra.mxu0 %v5040
        %5059 = vmatprep.subr.bf16.mxu0 0
        %5060 = vmatpush1.bf16.msra.mxu0 %v5041
        %5061 = vmatprep.subr.bf16.mxu0 0
        %5062 = vmatpush1.bf16.msra.mxu0 %v5042
        %5063 = vmatprep.subr.bf16.mxu0 0
        %5064 = vmatpush1.bf16.msra.mxu0 %v5043
        %5065 = vmatprep.subr.bf16.mxu0 0
        %5066 = vmatpush1.bf16.msra.mxu0 %v5044
        %5067 = vmatprep.subr.bf16.mxu0 0
        %5068 = vmatpush1.bf16.msra.mxu0 %v5045
        %5069 = vmatprep.subr.bf16.mxu0 0
        %5070 = vmatpush1.bf16.msra.mxu0 %v5046
        %5071 = vmatprep.subr.bf16.mxu0 0
        %5072 = vmatpush1.bf16.msra.mxu0 0
        %5073 = vmatprep.subr.bf16.mxu0 0
        %5074 = vmatpush1.bf16.msra.mxu0 0
        %5075 = vmatprep.subr.bf16.mxu0 0
        %5076 = vmatpush1.bf16.msra.mxu0 0
        %5077 = vmatprep.subr.bf16.mxu0 0
        %5078 = vmatpush1.bf16.msra.mxu0 0
        %5079 = vmatprep.subr.bf16.mxu0 0
        %5080 = vmatpush1.bf16.msra.mxu0 0
        %5081 = vmatprep.subr.bf16.mxu0 0
        %5082 = vmatpush1.bf16.msra.mxu0 0
        %5083 = vmatprep.subr.bf16.mxu0 0
        %5084 = vmatpush1.bf16.msra.mxu0 0
        %5085 = vmatprep.subr.bf16.mxu0 0
        %5086 = vmatpush1.bf16.msra.mxu0 0
        %5087 = vmatprep.mubr.bf16.mxu0 0
        %5088 = vmatmul.mubr.bf16.gmra.mrb[0].mxu0 %v5000
        %v5089 = vpop.f32.mrb[0].mxu0
        %v5090 = vadd.f32 %v5005, %v5089
        %v5091 = vpop.f32.mrb[0].mxu0
        %v5092 = vpop.f32.mrb[0].mxu0
        %v5093 = vadd.f32 %v5005, %v5092
        %v5094 = vpop.f32.mrb[0].mxu0
        %5095 = vdwg.mxu0
        %5096 = vst [vmem:[%s597] sm:$0xff] %v5090
        %5097 = vst [vmem:[%s597 + $0x8] sm:$0xff] %v5093
        %s5098 = smul.u32 2, %s26
        %p5099 = scmp.lt.s32.totalorder %s5098, 3
        %s5100 = scalar_select %p5099, %s5098, 3
        %s5101 = smul.addr %s5100, 8
        %s5102 = scalar_lea.vmem %s15, %s5101
        // Predicated region
        $region122: #{lstm_classifier_forward.1} parent=116 // pred_check
          %p5103 = pneg %p364
        $region123: #{lstm_classifier_forward.1} parent=116 // pred_check_branch
          %5105 = sbr.rel (%p5103) target = $region125
        $region124: #{lstm_classifier_forward.1} parent=116 // pred_region
          %s5106 = smul.u32 2, %s26
        $region125: #{lstm_classifier_forward.1} parent=116 // pred_fallthru
          _
      $region117: #{lstm_classifier_forward.1} parent=5 // pred_fallthru
        _
      %p5107 = scmp.le.s32.totalorder 2, %s21
      // Predicated region
      $region126: #{lstm_classifier_forward.1} parent=5 // pred_check
        %p5108 = pneg %p5107
      $region127: #{lstm_classifier_forward.1} parent=5 // pred_check_branch
        %5110 = sbr.rel (%p5108) target = $region129
      $region128: #{lstm_classifier_forward.1} parent=5 // pred_region
        %s5111 = ssub.s32 %s21, 2
        // Predicated region
        $region130: #{lstm_classifier_forward.1} parent=128 // pred_check
          %p5112 = pneg %p370
        $region131: #{lstm_classifier_forward.1} parent=128 // pred_check_branch
          %5114 = sbr.rel (%p5112) target = $region133
        $region132: #{lstm_classifier_forward.1} parent=128 // pred_region
          %s5115 = smul.u32 2, %s27
          %p5116 = scmp.lt.s32.totalorder %s5115, 3
          %s5117 = scalar_select %p5116, %s5115, 3
          %s5118 = smul.addr %s5117, 8
          %s5119 = scalar_lea.vmem %s15, %s5118
        $region133: #{lstm_classifier_forward.1} parent=128 // pred_fallthru
          _
      $region129: #{lstm_classifier_forward.1} parent=5 // pred_fallthru
        _
    $region6: #{lstm_classifier_forward.1} parent=1 // loop_footer
      %s25 = sadd.s32 1, %s21
    $region7: #{lstm_classifier_forward.1} parent=1 // loop_footer_branch
      %20 = sbr.rel target = $region3
    $region8: #{lstm_classifier_forward.1} parent=1 // loop_exit
      _

</llo_original>
